<compile_context>
chip_gen: v6e
topology: v6e:2x2x1
jax: 0.10.0
libtpu: 0.0.40
codegen_flags: <defaults>
</compile_context>

<pallas_src>
import jax
import jax.numpy as jnp
from jax.experimental import pallas as pl
from jax.experimental.pallas import tpu as pltpu

NCLS = 10     # fc classes
NPAD = 128    # lane-padded fc output width


# ------------------------------ fused kernel -------------------------------

def _fused_mnist_kernel(x_ref, w1_ref, b1_ref, w2_ref, b2_ref, wfc_ref, bfc_ref,
                        o_ref):
    # x_ref block: (1, 4, 7, 28) with xh[m, r, w] = image[4*r + m, w]
    xh = x_ref[0]

    # ---- conv1 (5x5, 1->10) + ReLU + 2x2 max-pool --------------------------
    # Conv rows are computed in four groups i = 4*q + 2*e + a (q in [0,6)):
    #   a = row parity inside a pool window (reduced by max below)
    #   e = parity of the pooled row (kept, so conv2 slices are contiguous)
    # Weight columns are ordered (b, pj, c) with conv column j = 2*pj + b, so the
    # column pool is a max of two contiguous 120-lane halves.
    def conv1_rows(a, e):
        acc = None
        for di in range(5):
            s = 2 * e + a + di                        # image row = 4*q + s
            x_sl = xh[s % 4, s // 4:s // 4 + 6, :]    # (6, 28)
            w_sl = w1_ref[32 * di:32 * di + 28, :]    # (28, 240)
            part = jnp.dot(x_sl, w_sl, preferred_element_type=jnp.float32)
            acc = part if acc is None else acc + part
        return acc                                    # (6, 240)

    h1 = []                                           # h1[e][q, pj*10+c] = pool1
    for e in range(2):
        g = jnp.maximum(conv1_rows(0, e), conv1_rows(1, e))   # pool over rows
        g = jnp.maximum(g[:, :120], g[:, 120:])               # pool over cols
        h1.append(jnp.maximum(g + b1_ref[...], 0.0))          # bias + ReLU, (6, 120)

    # ---- conv2 (5x5, 10->20) + ReLU + 2x2 max-pool --------------------------
    def conv2_rows(a2):
        acc = None
        for di in range(5):
            s = a2 + di                                        # pool1 row = 2*pi2 + s
            x_sl = h1[s % 2][s // 2:s // 2 + 4, :]             # (4, 120)
            w_sl = w2_ref[120 * di:120 * (di + 1), :]          # (120, 160)
            part = jnp.dot(x_sl, w_sl, preferred_element_type=jnp.float32)
            acc = part if acc is None else acc + part
        return acc                                             # (4, 160)

    g2 = jnp.maximum(conv2_rows(0), conv2_rows(1))             # pool over rows
    g2 = jnp.maximum(g2[:, :80], g2[:, 80:])                   # pool over cols
    h2 = jnp.maximum(g2 + b2_ref[...], 0.0)                    # (4, 80)

    # ---- fc (320 -> 10, padded to 128 output lanes) -------------------------
    # torch's NCHW flatten is folded into the row order of wfc_ref; row p of
    # (h2 @ W_p) is the contribution of pooled-row p.
    acc = bfc_ref[...]                                         # (1, 128)
    for p in range(4):
        full = jnp.dot(h2, wfc_ref[80 * p:80 * (p + 1), :],
                       preferred_element_type=jnp.float32)     # (4, 128)
        acc = acc + full[p:p + 1, :]
    o_ref[0] = acc


# --------------------- trace-time operand preparation ----------------------

def _prep_operands(x_nchw, params):
    """Tiny one-time XLA work: input row split + banded/permuted weight matrices."""
    w1, b1, w2, b2, wfc, bfc = [p.astype(jnp.float32) for p in params]
    n = x_nchw.shape[0]

    # Input rows split by (row mod 4): xh[n, m, r, w] = x[n, 0, 4*r + m, w]
    xh = jnp.transpose(x_nchw[:, 0].astype(jnp.float32).reshape(n, 7, 4, 28),
                       (0, 2, 1, 3))                                  # (N, 4, 7, 28)

    # conv1 banded weights: W1[32*di + w', b*120 + pj*10 + c]
    #   = w1[c, 0, di, w' - (2*pj + b)] if 0 <= w' - (2*pj + b) < 5 else 0
    wp = jnp.arange(28)
    j1 = 2 * jnp.arange(12)[None, :] + jnp.arange(2)[:, None]          # (2, 12)
    d1 = wp[:, None, None] - j1[None, :, :]                            # (28, 2, 12)
    m1 = ((d1 >= 0) & (d1 < 5)).astype(jnp.float32)
    ga = w1[:, 0, :, :][:, :, jnp.clip(d1, 0, 4)] * m1[None, None]     # (10,5,28,2,12)
    W1 = jnp.transpose(ga, (1, 2, 3, 4, 0)).reshape(5, 28, 240)
    W1 = jnp.pad(W1, ((0, 0), (0, 4), (0, 0))).reshape(160, 240)       # 28 -> 32 rows/tap
    B1 = jnp.tile(b1, 12)[None, :]                                     # (1, 120)

    # conv2 banded weights: W2[120*di + pj*10 + ci, b*80 + pj2*20 + c2]
    #   = w2[c2, ci, di, pj - (2*pj2 + b)] if valid else 0
    pj = jnp.arange(12)
    j2 = 2 * jnp.arange(4)[None, :] + jnp.arange(2)[:, None]           # (2, 4)
    d2 = pj[:, None, None] - j2[None, :, :]                            # (12, 2, 4)
    m2 = ((d2 >= 0) & (d2 < 5)).astype(jnp.float32)
    gb = w2[:, :, :, jnp.clip(d2, 0, 4)] * m2[None, None, None]        # (20,10,5,12,2,4)
    W2 = jnp.transpose(gb, (2, 3, 1, 4, 5, 0)).reshape(600, 160)
    B2 = jnp.tile(b2, 4)[None, :]                                      # (1, 80)

    # fc weights, rows permuted to the kernel's (pi2, pj2, c2) feature order
    # (folds torch's NCHW view(N, -1)); columns padded 10 -> 128 for lane density.
    pi2 = jnp.arange(4)[:, None, None]
    pj2 = jnp.arange(4)[None, :, None]
    c2 = jnp.arange(20)[None, None, :]
    f_torch = c2 * 16 + pi2 * 4 + pj2                                  # (4, 4, 20)
    WF = jnp.transpose(wfc[:, f_torch], (1, 2, 3, 0)).reshape(320, NCLS)
    WF = jnp.zeros((320, NPAD), jnp.float32).at[:, :NCLS].set(WF)
    BF = jnp.zeros((1, NPAD), jnp.float32).at[0, :NCLS].set(bfc)

    return xh, W1, B1, W2, B2, WF, BF


# --------------------------------- wrapper ---------------------------------

def network_mnist_1(x_nchw, params):
    n = x_nchw.shape[0]
    xh, W1, B1, W2, B2, WF, BF = _prep_operands(x_nchw, params)

    out = pl.pallas_call(
        _fused_mnist_kernel,
        out_shape=jax.ShapeDtypeStruct((n, 1, NPAD), jnp.float32),
        grid=(n,),
        in_specs=[
            pl.BlockSpec((1, 4, 7, 28), lambda i: (i, 0, 0, 0)),   # per-image input
            pl.BlockSpec((160, 240), lambda i: (0, 0)),            # resident weights
            pl.BlockSpec((1, 120), lambda i: (0, 0)),
            pl.BlockSpec((600, 160), lambda i: (0, 0)),
            pl.BlockSpec((1, 80), lambda i: (0, 0)),
            pl.BlockSpec((320, NPAD), lambda i: (0, 0)),
            pl.BlockSpec((1, NPAD), lambda i: (0, 0)),
        ],
        out_specs=pl.BlockSpec((1, 1, NPAD), lambda i: (i, 0, 0)),
        compiler_params=pltpu.CompilerParams(
            dimension_semantics=("parallel",),
            vmem_limit_bytes=32 * 1024 * 1024,
        ),
    )(xh, W1, B1, W2, B2, WF, BF)

    return out[:, 0, :NCLS]


# --------------------------- params & reference ----------------------------

def init_params(key):
    ks = jax.random.split(key, 6)

    def uniform(k, shape, fan_in):
        bound = 1.0 / float(fan_in) ** 0.5
        return jax.random.uniform(k, shape, jnp.float32, -bound, bound)

    w1 = uniform(ks[0], (10, 1, 5, 5), 25)
    b1 = uniform(ks[1], (10,), 25)
    w2 = uniform(ks[2], (20, 10, 5, 5), 250)
    b2 = uniform(ks[3], (20,), 250)
    wfc = uniform(ks[4], (10, 320), 320)
    bfc = uniform(ks[5], (10,), 320)
    return (w1, b1, w2, b2, wfc, bfc)


def _reference_forward(x, params):
    w1, b1, w2, b2, wfc, bfc = params
    y = jax.lax.conv(x, w1, (1, 1), "VALID") + b1[None, :, None, None]
    y = jnp.maximum(y, 0.0)
    y = jax.lax.reduce_window(y, -jnp.inf, jax.lax.max,
                              (1, 1, 2, 2), (1, 1, 2, 2), "VALID")
    y = jax.lax.conv(y, w2, (1, 1), "VALID") + b2[None, :, None, None]
    y = jnp.maximum(y, 0.0)
    y = jax.lax.reduce_window(y, -jnp.inf, jax.lax.max,
                              (1, 1, 2, 2), (1, 1, 2, 2), "VALID")
    y = y.reshape(y.shape[0], -1)
    return y @ wfc.T + bfc[None, :]


if __name__ == "__main__":
    # MNIST-shaped input implied by the module (28x28 -> 20*4*4 = 320 features).
    x = jax.random.normal(jax.random.PRNGKey(0), (2, 1, 28, 28), dtype=jnp.float32)
    params = init_params(jax.random.PRNGKey(42))

    fwd = jax.jit(network_mnist_1)
    logits = fwd(x, params)
    jax.block_until_ready(logits)
    assert logits.shape == (2, 10) and logits.dtype == jnp.float32

    ref = _reference_forward(x, params)
    max_err = float(jnp.max(jnp.abs(logits - ref)))
    assert max_err < 1e-1, f"kernel/reference mismatch: max abs err = {max_err}"
    print("KERNEL_OK")
</pallas_src>

<mosaic_0001>
module attributes {stable_mosaic.version = 11 : i64} {
  func.func @_fused_mnist_kernel(%arg0: i32, %arg1: memref<1x4x7x28xf32, #tpu.memory_space<vmem>>, %arg2: memref<160x240xf32, #tpu.memory_space<vmem>>, %arg3: memref<1x120xf32, #tpu.memory_space<vmem>>, %arg4: memref<600x160xf32, #tpu.memory_space<vmem>>, %arg5: memref<1x80xf32, #tpu.memory_space<vmem>>, %arg6: memref<320x128xf32, #tpu.memory_space<vmem>>, %arg7: memref<1x128xf32, #tpu.memory_space<vmem>>, %arg8: memref<1x1x128xf32, #tpu.memory_space<vmem>>) attributes {dimension_semantics = [#tpu.dimension_semantics<parallel>], iteration_bounds = array<i64: 2>, scalar_prefetch = 0 : i64, scratch_operands = 0 : i64, tpu.core_type = #tpu.core_type<tc>, window_params = [{transform_indices = @transform_0, window_bounds = array<i64: 1, 4, 7, 28>}, {pipeline_mode = #tpu.pipeline_mode<synchronous>, transform_indices = @transform_1, window_bounds = array<i64: 160, 240>}, {pipeline_mode = #tpu.pipeline_mode<synchronous>, transform_indices = @transform_2, window_bounds = array<i64: 1, 120>}, {pipeline_mode = #tpu.pipeline_mode<synchronous>, transform_indices = @transform_3, window_bounds = array<i64: 600, 160>}, {pipeline_mode = #tpu.pipeline_mode<synchronous>, transform_indices = @transform_4, window_bounds = array<i64: 1, 80>}, {pipeline_mode = #tpu.pipeline_mode<synchronous>, transform_indices = @transform_5, window_bounds = array<i64: 320, 128>}, {pipeline_mode = #tpu.pipeline_mode<synchronous>, transform_indices = @transform_6, window_bounds = array<i64: 1, 128>}, {transform_indices = @transform_7, window_bounds = array<i64: 1, 1, 128>}]} {
    %c0 = arith.constant 0 : index
    %c0_0 = arith.constant 0 : index
    %c0_1 = arith.constant 0 : index
    %c0_2 = arith.constant 0 : index
    %0 = vector.load %arg1[%c0, %c0_0, %c0_1, %c0_2] : memref<1x4x7x28xf32, #tpu.memory_space<vmem>>, vector<1x4x7x28xf32>
    %1 = vector.shape_cast %0 : vector<1x4x7x28xf32> to vector<4x7x28xf32>
    %2 = vector.extract_strided_slice %1 {offsets = [0, 0, 0], sizes = [1, 6, 28], strides = [1, 1, 1]} : vector<4x7x28xf32> to vector<1x6x28xf32>
    %3 = vector.shape_cast %2 : vector<1x6x28xf32> to vector<6x28xf32>
    %c0_3 = arith.constant 0 : index
    %c0_4 = arith.constant 0 : index
    %4 = vector.load %arg2[%c0_3, %c0_4] : memref<160x240xf32, #tpu.memory_space<vmem>>, vector<28x240xf32>
    %cst = arith.constant dense<0.000000e+00> : vector<6x240xf32>
    %5 = tpu.matmul %3, %4, %cst {dimension_numbers = #tpu.dot_dimension_numbers<[1], [0], [0], [1], [0, 0, 1, 1], [], []>} : vector<6x28xf32>, vector<28x240xf32>, vector<6x240xf32> -> vector<6x240xf32>
    %6 = vector.extract_strided_slice %1 {offsets = [1, 0, 0], sizes = [1, 6, 28], strides = [1, 1, 1]} : vector<4x7x28xf32> to vector<1x6x28xf32>
    %7 = vector.shape_cast %6 : vector<1x6x28xf32> to vector<6x28xf32>
    %c32 = arith.constant 32 : index
    %c0_5 = arith.constant 0 : index
    %8 = vector.load %arg2[%c32, %c0_5] : memref<160x240xf32, #tpu.memory_space<vmem>>, vector<28x240xf32>
    %cst_6 = arith.constant dense<0.000000e+00> : vector<6x240xf32>
    %9 = tpu.matmul %7, %8, %cst_6 {dimension_numbers = #tpu.dot_dimension_numbers<[1], [0], [0], [1], [0, 0, 1, 1], [], []>} : vector<6x28xf32>, vector<28x240xf32>, vector<6x240xf32> -> vector<6x240xf32>
    %10 = arith.addf %5, %9 : vector<6x240xf32>
    %11 = vector.extract_strided_slice %1 {offsets = [2, 0, 0], sizes = [1, 6, 28], strides = [1, 1, 1]} : vector<4x7x28xf32> to vector<1x6x28xf32>
    %12 = vector.shape_cast %11 : vector<1x6x28xf32> to vector<6x28xf32>
    %c64 = arith.constant 64 : index
    %c0_7 = arith.constant 0 : index
    %13 = vector.load %arg2[%c64, %c0_7] : memref<160x240xf32, #tpu.memory_space<vmem>>, vector<28x240xf32>
    %cst_8 = arith.constant dense<0.000000e+00> : vector<6x240xf32>
    %14 = tpu.matmul %12, %13, %cst_8 {dimension_numbers = #tpu.dot_dimension_numbers<[1], [0], [0], [1], [0, 0, 1, 1], [], []>} : vector<6x28xf32>, vector<28x240xf32>, vector<6x240xf32> -> vector<6x240xf32>
    %15 = arith.addf %10, %14 : vector<6x240xf32>
    %16 = vector.extract_strided_slice %1 {offsets = [3, 0, 0], sizes = [1, 6, 28], strides = [1, 1, 1]} : vector<4x7x28xf32> to vector<1x6x28xf32>
    %17 = vector.shape_cast %16 : vector<1x6x28xf32> to vector<6x28xf32>
    %c96 = arith.constant 96 : index
    %c0_9 = arith.constant 0 : index
    %18 = vector.load %arg2[%c96, %c0_9] : memref<160x240xf32, #tpu.memory_space<vmem>>, vector<28x240xf32>
    %cst_10 = arith.constant dense<0.000000e+00> : vector<6x240xf32>
    %19 = tpu.matmul %17, %18, %cst_10 {dimension_numbers = #tpu.dot_dimension_numbers<[1], [0], [0], [1], [0, 0, 1, 1], [], []>} : vector<6x28xf32>, vector<28x240xf32>, vector<6x240xf32> -> vector<6x240xf32>
    %20 = arith.addf %15, %19 : vector<6x240xf32>
    %21 = vector.extract_strided_slice %1 {offsets = [0, 1, 0], sizes = [1, 6, 28], strides = [1, 1, 1]} : vector<4x7x28xf32> to vector<1x6x28xf32>
    %22 = vector.shape_cast %21 : vector<1x6x28xf32> to vector<6x28xf32>
    %c128 = arith.constant 128 : index
    %c0_11 = arith.constant 0 : index
    %23 = vector.load %arg2[%c128, %c0_11] : memref<160x240xf32, #tpu.memory_space<vmem>>, vector<28x240xf32>
    %cst_12 = arith.constant dense<0.000000e+00> : vector<6x240xf32>
    %24 = tpu.matmul %22, %23, %cst_12 {dimension_numbers = #tpu.dot_dimension_numbers<[1], [0], [0], [1], [0, 0, 1, 1], [], []>} : vector<6x28xf32>, vector<28x240xf32>, vector<6x240xf32> -> vector<6x240xf32>
    %25 = arith.addf %20, %24 : vector<6x240xf32>
    %26 = vector.extract_strided_slice %1 {offsets = [1, 0, 0], sizes = [1, 6, 28], strides = [1, 1, 1]} : vector<4x7x28xf32> to vector<1x6x28xf32>
    %27 = vector.shape_cast %26 : vector<1x6x28xf32> to vector<6x28xf32>
    %c0_13 = arith.constant 0 : index
    %c0_14 = arith.constant 0 : index
    %28 = vector.load %arg2[%c0_13, %c0_14] : memref<160x240xf32, #tpu.memory_space<vmem>>, vector<28x240xf32>
    %cst_15 = arith.constant dense<0.000000e+00> : vector<6x240xf32>
    %29 = tpu.matmul %27, %28, %cst_15 {dimension_numbers = #tpu.dot_dimension_numbers<[1], [0], [0], [1], [0, 0, 1, 1], [], []>} : vector<6x28xf32>, vector<28x240xf32>, vector<6x240xf32> -> vector<6x240xf32>
    %30 = vector.extract_strided_slice %1 {offsets = [2, 0, 0], sizes = [1, 6, 28], strides = [1, 1, 1]} : vector<4x7x28xf32> to vector<1x6x28xf32>
    %31 = vector.shape_cast %30 : vector<1x6x28xf32> to vector<6x28xf32>
    %c32_16 = arith.constant 32 : index
    %c0_17 = arith.constant 0 : index
    %32 = vector.load %arg2[%c32_16, %c0_17] : memref<160x240xf32, #tpu.memory_space<vmem>>, vector<28x240xf32>
    %cst_18 = arith.constant dense<0.000000e+00> : vector<6x240xf32>
    %33 = tpu.matmul %31, %32, %cst_18 {dimension_numbers = #tpu.dot_dimension_numbers<[1], [0], [0], [1], [0, 0, 1, 1], [], []>} : vector<6x28xf32>, vector<28x240xf32>, vector<6x240xf32> -> vector<6x240xf32>
    %34 = arith.addf %29, %33 : vector<6x240xf32>
    %35 = vector.extract_strided_slice %1 {offsets = [3, 0, 0], sizes = [1, 6, 28], strides = [1, 1, 1]} : vector<4x7x28xf32> to vector<1x6x28xf32>
    %36 = vector.shape_cast %35 : vector<1x6x28xf32> to vector<6x28xf32>
    %c64_19 = arith.constant 64 : index
    %c0_20 = arith.constant 0 : index
    %37 = vector.load %arg2[%c64_19, %c0_20] : memref<160x240xf32, #tpu.memory_space<vmem>>, vector<28x240xf32>
    %cst_21 = arith.constant dense<0.000000e+00> : vector<6x240xf32>
    %38 = tpu.matmul %36, %37, %cst_21 {dimension_numbers = #tpu.dot_dimension_numbers<[1], [0], [0], [1], [0, 0, 1, 1], [], []>} : vector<6x28xf32>, vector<28x240xf32>, vector<6x240xf32> -> vector<6x240xf32>
    %39 = arith.addf %34, %38 : vector<6x240xf32>
    %40 = vector.extract_strided_slice %1 {offsets = [0, 1, 0], sizes = [1, 6, 28], strides = [1, 1, 1]} : vector<4x7x28xf32> to vector<1x6x28xf32>
    %41 = vector.shape_cast %40 : vector<1x6x28xf32> to vector<6x28xf32>
    %c96_22 = arith.constant 96 : index
    %c0_23 = arith.constant 0 : index
    %42 = vector.load %arg2[%c96_22, %c0_23] : memref<160x240xf32, #tpu.memory_space<vmem>>, vector<28x240xf32>
    %cst_24 = arith.constant dense<0.000000e+00> : vector<6x240xf32>
    %43 = tpu.matmul %41, %42, %cst_24 {dimension_numbers = #tpu.dot_dimension_numbers<[1], [0], [0], [1], [0, 0, 1, 1], [], []>} : vector<6x28xf32>, vector<28x240xf32>, vector<6x240xf32> -> vector<6x240xf32>
    %44 = arith.addf %39, %43 : vector<6x240xf32>
    %45 = vector.extract_strided_slice %1 {offsets = [1, 1, 0], sizes = [1, 6, 28], strides = [1, 1, 1]} : vector<4x7x28xf32> to vector<1x6x28xf32>
    %46 = vector.shape_cast %45 : vector<1x6x28xf32> to vector<6x28xf32>
    %c128_25 = arith.constant 128 : index
    %c0_26 = arith.constant 0 : index
    %47 = vector.load %arg2[%c128_25, %c0_26] : memref<160x240xf32, #tpu.memory_space<vmem>>, vector<28x240xf32>
    %cst_27 = arith.constant dense<0.000000e+00> : vector<6x240xf32>
    %48 = tpu.matmul %46, %47, %cst_27 {dimension_numbers = #tpu.dot_dimension_numbers<[1], [0], [0], [1], [0, 0, 1, 1], [], []>} : vector<6x28xf32>, vector<28x240xf32>, vector<6x240xf32> -> vector<6x240xf32>
    %49 = arith.addf %44, %48 : vector<6x240xf32>
    %50 = arith.maximumf %25, %49 : vector<6x240xf32>
    %51 = vector.extract_strided_slice %50 {offsets = [0, 0], sizes = [6, 120], strides = [1, 1]} : vector<6x240xf32> to vector<6x120xf32>
    %52 = vector.extract_strided_slice %50 {offsets = [0, 120], sizes = [6, 120], strides = [1, 1]} : vector<6x240xf32> to vector<6x120xf32>
    %53 = arith.maximumf %51, %52 : vector<6x120xf32>
    %c0_28 = arith.constant 0 : index
    %c0_29 = arith.constant 0 : index
    %54 = vector.load %arg3[%c0_28, %c0_29] : memref<1x120xf32, #tpu.memory_space<vmem>>, vector<1x120xf32>
    %55 = vector.broadcast %54 : vector<1x120xf32> to vector<6x120xf32>
    %56 = arith.addf %53, %55 : vector<6x120xf32>
    %cst_30 = arith.constant 0.000000e+00 : f32
    %57 = vector.broadcast %cst_30 : f32 to vector<6x120xf32>
    %58 = arith.maximumf %56, %57 : vector<6x120xf32>
    %59 = vector.extract_strided_slice %1 {offsets = [2, 0, 0], sizes = [1, 6, 28], strides = [1, 1, 1]} : vector<4x7x28xf32> to vector<1x6x28xf32>
    %60 = vector.shape_cast %59 : vector<1x6x28xf32> to vector<6x28xf32>
    %c0_31 = arith.constant 0 : index
    %c0_32 = arith.constant 0 : index
    %61 = vector.load %arg2[%c0_31, %c0_32] : memref<160x240xf32, #tpu.memory_space<vmem>>, vector<28x240xf32>
    %cst_33 = arith.constant dense<0.000000e+00> : vector<6x240xf32>
    %62 = tpu.matmul %60, %61, %cst_33 {dimension_numbers = #tpu.dot_dimension_numbers<[1], [0], [0], [1], [0, 0, 1, 1], [], []>} : vector<6x28xf32>, vector<28x240xf32>, vector<6x240xf32> -> vector<6x240xf32>
    %63 = vector.extract_strided_slice %1 {offsets = [3, 0, 0], sizes = [1, 6, 28], strides = [1, 1, 1]} : vector<4x7x28xf32> to vector<1x6x28xf32>
    %64 = vector.shape_cast %63 : vector<1x6x28xf32> to vector<6x28xf32>
    %c32_34 = arith.constant 32 : index
    %c0_35 = arith.constant 0 : index
    %65 = vector.load %arg2[%c32_34, %c0_35] : memref<160x240xf32, #tpu.memory_space<vmem>>, vector<28x240xf32>
    %cst_36 = arith.constant dense<0.000000e+00> : vector<6x240xf32>
    %66 = tpu.matmul %64, %65, %cst_36 {dimension_numbers = #tpu.dot_dimension_numbers<[1], [0], [0], [1], [0, 0, 1, 1], [], []>} : vector<6x28xf32>, vector<28x240xf32>, vector<6x240xf32> -> vector<6x240xf32>
    %67 = arith.addf %62, %66 : vector<6x240xf32>
    %68 = vector.extract_strided_slice %1 {offsets = [0, 1, 0], sizes = [1, 6, 28], strides = [1, 1, 1]} : vector<4x7x28xf32> to vector<1x6x28xf32>
    %69 = vector.shape_cast %68 : vector<1x6x28xf32> to vector<6x28xf32>
    %c64_37 = arith.constant 64 : index
    %c0_38 = arith.constant 0 : index
    %70 = vector.load %arg2[%c64_37, %c0_38] : memref<160x240xf32, #tpu.memory_space<vmem>>, vector<28x240xf32>
    %cst_39 = arith.constant dense<0.000000e+00> : vector<6x240xf32>
    %71 = tpu.matmul %69, %70, %cst_39 {dimension_numbers = #tpu.dot_dimension_numbers<[1], [0], [0], [1], [0, 0, 1, 1], [], []>} : vector<6x28xf32>, vector<28x240xf32>, vector<6x240xf32> -> vector<6x240xf32>
    %72 = arith.addf %67, %71 : vector<6x240xf32>
    %73 = vector.extract_strided_slice %1 {offsets = [1, 1, 0], sizes = [1, 6, 28], strides = [1, 1, 1]} : vector<4x7x28xf32> to vector<1x6x28xf32>
    %74 = vector.shape_cast %73 : vector<1x6x28xf32> to vector<6x28xf32>
    %c96_40 = arith.constant 96 : index
    %c0_41 = arith.constant 0 : index
    %75 = vector.load %arg2[%c96_40, %c0_41] : memref<160x240xf32, #tpu.memory_space<vmem>>, vector<28x240xf32>
    %cst_42 = arith.constant dense<0.000000e+00> : vector<6x240xf32>
    %76 = tpu.matmul %74, %75, %cst_42 {dimension_numbers = #tpu.dot_dimension_numbers<[1], [0], [0], [1], [0, 0, 1, 1], [], []>} : vector<6x28xf32>, vector<28x240xf32>, vector<6x240xf32> -> vector<6x240xf32>
    %77 = arith.addf %72, %76 : vector<6x240xf32>
    %78 = vector.extract_strided_slice %1 {offsets = [2, 1, 0], sizes = [1, 6, 28], strides = [1, 1, 1]} : vector<4x7x28xf32> to vector<1x6x28xf32>
    %79 = vector.shape_cast %78 : vector<1x6x28xf32> to vector<6x28xf32>
    %c128_43 = arith.constant 128 : index
    %c0_44 = arith.constant 0 : index
    %80 = vector.load %arg2[%c128_43, %c0_44] : memref<160x240xf32, #tpu.memory_space<vmem>>, vector<28x240xf32>
    %cst_45 = arith.constant dense<0.000000e+00> : vector<6x240xf32>
    %81 = tpu.matmul %79, %80, %cst_45 {dimension_numbers = #tpu.dot_dimension_numbers<[1], [0], [0], [1], [0, 0, 1, 1], [], []>} : vector<6x28xf32>, vector<28x240xf32>, vector<6x240xf32> -> vector<6x240xf32>
    %82 = arith.addf %77, %81 : vector<6x240xf32>
    %83 = vector.extract_strided_slice %1 {offsets = [3, 0, 0], sizes = [1, 6, 28], strides = [1, 1, 1]} : vector<4x7x28xf32> to vector<1x6x28xf32>
    %84 = vector.shape_cast %83 : vector<1x6x28xf32> to vector<6x28xf32>
    %c0_46 = arith.constant 0 : index
    %c0_47 = arith.constant 0 : index
    %85 = vector.load %arg2[%c0_46, %c0_47] : memref<160x240xf32, #tpu.memory_space<vmem>>, vector<28x240xf32>
    %cst_48 = arith.constant dense<0.000000e+00> : vector<6x240xf32>
    %86 = tpu.matmul %84, %85, %cst_48 {dimension_numbers = #tpu.dot_dimension_numbers<[1], [0], [0], [1], [0, 0, 1, 1], [], []>} : vector<6x28xf32>, vector<28x240xf32>, vector<6x240xf32> -> vector<6x240xf32>
    %87 = vector.extract_strided_slice %1 {offsets = [0, 1, 0], sizes = [1, 6, 28], strides = [1, 1, 1]} : vector<4x7x28xf32> to vector<1x6x28xf32>
    %88 = vector.shape_cast %87 : vector<1x6x28xf32> to vector<6x28xf32>
    %c32_49 = arith.constant 32 : index
    %c0_50 = arith.constant 0 : index
    %89 = vector.load %arg2[%c32_49, %c0_50] : memref<160x240xf32, #tpu.memory_space<vmem>>, vector<28x240xf32>
    %cst_51 = arith.constant dense<0.000000e+00> : vector<6x240xf32>
    %90 = tpu.matmul %88, %89, %cst_51 {dimension_numbers = #tpu.dot_dimension_numbers<[1], [0], [0], [1], [0, 0, 1, 1], [], []>} : vector<6x28xf32>, vector<28x240xf32>, vector<6x240xf32> -> vector<6x240xf32>
    %91 = arith.addf %86, %90 : vector<6x240xf32>
    %92 = vector.extract_strided_slice %1 {offsets = [1, 1, 0], sizes = [1, 6, 28], strides = [1, 1, 1]} : vector<4x7x28xf32> to vector<1x6x28xf32>
    %93 = vector.shape_cast %92 : vector<1x6x28xf32> to vector<6x28xf32>
    %c64_52 = arith.constant 64 : index
    %c0_53 = arith.constant 0 : index
    %94 = vector.load %arg2[%c64_52, %c0_53] : memref<160x240xf32, #tpu.memory_space<vmem>>, vector<28x240xf32>
    %cst_54 = arith.constant dense<0.000000e+00> : vector<6x240xf32>
    %95 = tpu.matmul %93, %94, %cst_54 {dimension_numbers = #tpu.dot_dimension_numbers<[1], [0], [0], [1], [0, 0, 1, 1], [], []>} : vector<6x28xf32>, vector<28x240xf32>, vector<6x240xf32> -> vector<6x240xf32>
    %96 = arith.addf %91, %95 : vector<6x240xf32>
    %97 = vector.extract_strided_slice %1 {offsets = [2, 1, 0], sizes = [1, 6, 28], strides = [1, 1, 1]} : vector<4x7x28xf32> to vector<1x6x28xf32>
    %98 = vector.shape_cast %97 : vector<1x6x28xf32> to vector<6x28xf32>
    %c96_55 = arith.constant 96 : index
    %c0_56 = arith.constant 0 : index
    %99 = vector.load %arg2[%c96_55, %c0_56] : memref<160x240xf32, #tpu.memory_space<vmem>>, vector<28x240xf32>
    %cst_57 = arith.constant dense<0.000000e+00> : vector<6x240xf32>
    %100 = tpu.matmul %98, %99, %cst_57 {dimension_numbers = #tpu.dot_dimension_numbers<[1], [0], [0], [1], [0, 0, 1, 1], [], []>} : vector<6x28xf32>, vector<28x240xf32>, vector<6x240xf32> -> vector<6x240xf32>
    %101 = arith.addf %96, %100 : vector<6x240xf32>
    %102 = vector.extract_strided_slice %1 {offsets = [3, 1, 0], sizes = [1, 6, 28], strides = [1, 1, 1]} : vector<4x7x28xf32> to vector<1x6x28xf32>
    %103 = vector.shape_cast %102 : vector<1x6x28xf32> to vector<6x28xf32>
    %c128_58 = arith.constant 128 : index
    %c0_59 = arith.constant 0 : index
    %104 = vector.load %arg2[%c128_58, %c0_59] : memref<160x240xf32, #tpu.memory_space<vmem>>, vector<28x240xf32>
    %cst_60 = arith.constant dense<0.000000e+00> : vector<6x240xf32>
    %105 = tpu.matmul %103, %104, %cst_60 {dimension_numbers = #tpu.dot_dimension_numbers<[1], [0], [0], [1], [0, 0, 1, 1], [], []>} : vector<6x28xf32>, vector<28x240xf32>, vector<6x240xf32> -> vector<6x240xf32>
    %106 = arith.addf %101, %105 : vector<6x240xf32>
    %107 = arith.maximumf %82, %106 : vector<6x240xf32>
    %108 = vector.extract_strided_slice %107 {offsets = [0, 0], sizes = [6, 120], strides = [1, 1]} : vector<6x240xf32> to vector<6x120xf32>
    %109 = vector.extract_strided_slice %107 {offsets = [0, 120], sizes = [6, 120], strides = [1, 1]} : vector<6x240xf32> to vector<6x120xf32>
    %110 = arith.maximumf %108, %109 : vector<6x120xf32>
    %c0_61 = arith.constant 0 : index
    %c0_62 = arith.constant 0 : index
    %111 = vector.load %arg3[%c0_61, %c0_62] : memref<1x120xf32, #tpu.memory_space<vmem>>, vector<1x120xf32>
    %112 = vector.broadcast %111 : vector<1x120xf32> to vector<6x120xf32>
    %113 = arith.addf %110, %112 : vector<6x120xf32>
    %cst_63 = arith.constant 0.000000e+00 : f32
    %114 = vector.broadcast %cst_63 : f32 to vector<6x120xf32>
    %115 = arith.maximumf %113, %114 : vector<6x120xf32>
    %116 = vector.extract_strided_slice %58 {offsets = [0, 0], sizes = [4, 120], strides = [1, 1]} : vector<6x120xf32> to vector<4x120xf32>
    %c0_64 = arith.constant 0 : index
    %c0_65 = arith.constant 0 : index
    %117 = vector.load %arg4[%c0_64, %c0_65] : memref<600x160xf32, #tpu.memory_space<vmem>>, vector<120x160xf32>
    %cst_66 = arith.constant dense<0.000000e+00> : vector<4x160xf32>
    %118 = tpu.matmul %116, %117, %cst_66 {dimension_numbers = #tpu.dot_dimension_numbers<[1], [0], [0], [1], [0, 0, 1, 1], [], []>} : vector<4x120xf32>, vector<120x160xf32>, vector<4x160xf32> -> vector<4x160xf32>
    %119 = vector.extract_strided_slice %115 {offsets = [0, 0], sizes = [4, 120], strides = [1, 1]} : vector<6x120xf32> to vector<4x120xf32>
    %c120 = arith.constant 120 : index
    %c0_67 = arith.constant 0 : index
    %120 = vector.load %arg4[%c120, %c0_67] : memref<600x160xf32, #tpu.memory_space<vmem>>, vector<120x160xf32>
    %cst_68 = arith.constant dense<0.000000e+00> : vector<4x160xf32>
    %121 = tpu.matmul %119, %120, %cst_68 {dimension_numbers = #tpu.dot_dimension_numbers<[1], [0], [0], [1], [0, 0, 1, 1], [], []>} : vector<4x120xf32>, vector<120x160xf32>, vector<4x160xf32> -> vector<4x160xf32>
    %122 = arith.addf %118, %121 : vector<4x160xf32>
    %123 = vector.extract_strided_slice %58 {offsets = [1, 0], sizes = [4, 120], strides = [1, 1]} : vector<6x120xf32> to vector<4x120xf32>
    %c240 = arith.constant 240 : index
    %c0_69 = arith.constant 0 : index
    %124 = vector.load %arg4[%c240, %c0_69] : memref<600x160xf32, #tpu.memory_space<vmem>>, vector<120x160xf32>
    %cst_70 = arith.constant dense<0.000000e+00> : vector<4x160xf32>
    %125 = tpu.matmul %123, %124, %cst_70 {dimension_numbers = #tpu.dot_dimension_numbers<[1], [0], [0], [1], [0, 0, 1, 1], [], []>} : vector<4x120xf32>, vector<120x160xf32>, vector<4x160xf32> -> vector<4x160xf32>
    %126 = arith.addf %122, %125 : vector<4x160xf32>
    %127 = vector.extract_strided_slice %115 {offsets = [1, 0], sizes = [4, 120], strides = [1, 1]} : vector<6x120xf32> to vector<4x120xf32>
    %c360 = arith.constant 360 : index
    %c0_71 = arith.constant 0 : index
    %128 = vector.load %arg4[%c360, %c0_71] : memref<600x160xf32, #tpu.memory_space<vmem>>, vector<120x160xf32>
    %cst_72 = arith.constant dense<0.000000e+00> : vector<4x160xf32>
    %129 = tpu.matmul %127, %128, %cst_72 {dimension_numbers = #tpu.dot_dimension_numbers<[1], [0], [0], [1], [0, 0, 1, 1], [], []>} : vector<4x120xf32>, vector<120x160xf32>, vector<4x160xf32> -> vector<4x160xf32>
    %130 = arith.addf %126, %129 : vector<4x160xf32>
    %131 = vector.extract_strided_slice %58 {offsets = [2, 0], sizes = [4, 120], strides = [1, 1]} : vector<6x120xf32> to vector<4x120xf32>
    %c480 = arith.constant 480 : index
    %c0_73 = arith.constant 0 : index
    %132 = vector.load %arg4[%c480, %c0_73] : memref<600x160xf32, #tpu.memory_space<vmem>>, vector<120x160xf32>
    %cst_74 = arith.constant dense<0.000000e+00> : vector<4x160xf32>
    %133 = tpu.matmul %131, %132, %cst_74 {dimension_numbers = #tpu.dot_dimension_numbers<[1], [0], [0], [1], [0, 0, 1, 1], [], []>} : vector<4x120xf32>, vector<120x160xf32>, vector<4x160xf32> -> vector<4x160xf32>
    %134 = arith.addf %130, %133 : vector<4x160xf32>
    %135 = vector.extract_strided_slice %115 {offsets = [0, 0], sizes = [4, 120], strides = [1, 1]} : vector<6x120xf32> to vector<4x120xf32>
    %c0_75 = arith.constant 0 : index
    %c0_76 = arith.constant 0 : index
    %136 = vector.load %arg4[%c0_75, %c0_76] : memref<600x160xf32, #tpu.memory_space<vmem>>, vector<120x160xf32>
    %cst_77 = arith.constant dense<0.000000e+00> : vector<4x160xf32>
    %137 = tpu.matmul %135, %136, %cst_77 {dimension_numbers = #tpu.dot_dimension_numbers<[1], [0], [0], [1], [0, 0, 1, 1], [], []>} : vector<4x120xf32>, vector<120x160xf32>, vector<4x160xf32> -> vector<4x160xf32>
    %138 = vector.extract_strided_slice %58 {offsets = [1, 0], sizes = [4, 120], strides = [1, 1]} : vector<6x120xf32> to vector<4x120xf32>
    %c120_78 = arith.constant 120 : index
    %c0_79 = arith.constant 0 : index
    %139 = vector.load %arg4[%c120_78, %c0_79] : memref<600x160xf32, #tpu.memory_space<vmem>>, vector<120x160xf32>
    %cst_80 = arith.constant dense<0.000000e+00> : vector<4x160xf32>
    %140 = tpu.matmul %138, %139, %cst_80 {dimension_numbers = #tpu.dot_dimension_numbers<[1], [0], [0], [1], [0, 0, 1, 1], [], []>} : vector<4x120xf32>, vector<120x160xf32>, vector<4x160xf32> -> vector<4x160xf32>
    %141 = arith.addf %137, %140 : vector<4x160xf32>
    %142 = vector.extract_strided_slice %115 {offsets = [1, 0], sizes = [4, 120], strides = [1, 1]} : vector<6x120xf32> to vector<4x120xf32>
    %c240_81 = arith.constant 240 : index
    %c0_82 = arith.constant 0 : index
    %143 = vector.load %arg4[%c240_81, %c0_82] : memref<600x160xf32, #tpu.memory_space<vmem>>, vector<120x160xf32>
    %cst_83 = arith.constant dense<0.000000e+00> : vector<4x160xf32>
    %144 = tpu.matmul %142, %143, %cst_83 {dimension_numbers = #tpu.dot_dimension_numbers<[1], [0], [0], [1], [0, 0, 1, 1], [], []>} : vector<4x120xf32>, vector<120x160xf32>, vector<4x160xf32> -> vector<4x160xf32>
    %145 = arith.addf %141, %144 : vector<4x160xf32>
    %146 = vector.extract_strided_slice %58 {offsets = [2, 0], sizes = [4, 120], strides = [1, 1]} : vector<6x120xf32> to vector<4x120xf32>
    %c360_84 = arith.constant 360 : index
    %c0_85 = arith.constant 0 : index
    %147 = vector.load %arg4[%c360_84, %c0_85] : memref<600x160xf32, #tpu.memory_space<vmem>>, vector<120x160xf32>
    %cst_86 = arith.constant dense<0.000000e+00> : vector<4x160xf32>
    %148 = tpu.matmul %146, %147, %cst_86 {dimension_numbers = #tpu.dot_dimension_numbers<[1], [0], [0], [1], [0, 0, 1, 1], [], []>} : vector<4x120xf32>, vector<120x160xf32>, vector<4x160xf32> -> vector<4x160xf32>
    %149 = arith.addf %145, %148 : vector<4x160xf32>
    %150 = vector.extract_strided_slice %115 {offsets = [2, 0], sizes = [4, 120], strides = [1, 1]} : vector<6x120xf32> to vector<4x120xf32>
    %c480_87 = arith.constant 480 : index
    %c0_88 = arith.constant 0 : index
    %151 = vector.load %arg4[%c480_87, %c0_88] : memref<600x160xf32, #tpu.memory_space<vmem>>, vector<120x160xf32>
    %cst_89 = arith.constant dense<0.000000e+00> : vector<4x160xf32>
    %152 = tpu.matmul %150, %151, %cst_89 {dimension_numbers = #tpu.dot_dimension_numbers<[1], [0], [0], [1], [0, 0, 1, 1], [], []>} : vector<4x120xf32>, vector<120x160xf32>, vector<4x160xf32> -> vector<4x160xf32>
    %153 = arith.addf %149, %152 : vector<4x160xf32>
    %154 = arith.maximumf %134, %153 : vector<4x160xf32>
    %155 = vector.extract_strided_slice %154 {offsets = [0, 0], sizes = [4, 80], strides = [1, 1]} : vector<4x160xf32> to vector<4x80xf32>
    %156 = vector.extract_strided_slice %154 {offsets = [0, 80], sizes = [4, 80], strides = [1, 1]} : vector<4x160xf32> to vector<4x80xf32>
    %157 = arith.maximumf %155, %156 : vector<4x80xf32>
    %c0_90 = arith.constant 0 : index
    %c0_91 = arith.constant 0 : index
    %158 = vector.load %arg5[%c0_90, %c0_91] : memref<1x80xf32, #tpu.memory_space<vmem>>, vector<1x80xf32>
    %159 = vector.broadcast %158 : vector<1x80xf32> to vector<4x80xf32>
    %160 = arith.addf %157, %159 : vector<4x80xf32>
    %cst_92 = arith.constant 0.000000e+00 : f32
    %161 = vector.broadcast %cst_92 : f32 to vector<4x80xf32>
    %162 = arith.maximumf %160, %161 : vector<4x80xf32>
    %c0_93 = arith.constant 0 : index
    %c0_94 = arith.constant 0 : index
    %163 = vector.load %arg7[%c0_93, %c0_94] : memref<1x128xf32, #tpu.memory_space<vmem>>, vector<1x128xf32>
    %c0_95 = arith.constant 0 : index
    %c0_96 = arith.constant 0 : index
    %164 = vector.load %arg6[%c0_95, %c0_96] : memref<320x128xf32, #tpu.memory_space<vmem>>, vector<80x128xf32>
    %cst_97 = arith.constant dense<0.000000e+00> : vector<4x128xf32>
    %165 = tpu.matmul %162, %164, %cst_97 {dimension_numbers = #tpu.dot_dimension_numbers<[1], [0], [0], [1], [0, 0, 1, 1], [], []>} : vector<4x80xf32>, vector<80x128xf32>, vector<4x128xf32> -> vector<4x128xf32>
    %166 = vector.extract_strided_slice %165 {offsets = [0, 0], sizes = [1, 128], strides = [1, 1]} : vector<4x128xf32> to vector<1x128xf32>
    %167 = arith.addf %163, %166 : vector<1x128xf32>
    %c80 = arith.constant 80 : index
    %c0_98 = arith.constant 0 : index
    %168 = vector.load %arg6[%c80, %c0_98] : memref<320x128xf32, #tpu.memory_space<vmem>>, vector<80x128xf32>
    %cst_99 = arith.constant dense<0.000000e+00> : vector<4x128xf32>
    %169 = tpu.matmul %162, %168, %cst_99 {dimension_numbers = #tpu.dot_dimension_numbers<[1], [0], [0], [1], [0, 0, 1, 1], [], []>} : vector<4x80xf32>, vector<80x128xf32>, vector<4x128xf32> -> vector<4x128xf32>
    %170 = vector.extract_strided_slice %169 {offsets = [1, 0], sizes = [1, 128], strides = [1, 1]} : vector<4x128xf32> to vector<1x128xf32>
    %171 = arith.addf %167, %170 : vector<1x128xf32>
    %c160 = arith.constant 160 : index
    %c0_100 = arith.constant 0 : index
    %172 = vector.load %arg6[%c160, %c0_100] : memref<320x128xf32, #tpu.memory_space<vmem>>, vector<80x128xf32>
    %cst_101 = arith.constant dense<0.000000e+00> : vector<4x128xf32>
    %173 = tpu.matmul %162, %172, %cst_101 {dimension_numbers = #tpu.dot_dimension_numbers<[1], [0], [0], [1], [0, 0, 1, 1], [], []>} : vector<4x80xf32>, vector<80x128xf32>, vector<4x128xf32> -> vector<4x128xf32>
    %174 = vector.extract_strided_slice %173 {offsets = [2, 0], sizes = [1, 128], strides = [1, 1]} : vector<4x128xf32> to vector<1x128xf32>
    %175 = arith.addf %171, %174 : vector<1x128xf32>
    %c240_102 = arith.constant 240 : index
    %c0_103 = arith.constant 0 : index
    %176 = vector.load %arg6[%c240_102, %c0_103] : memref<320x128xf32, #tpu.memory_space<vmem>>, vector<80x128xf32>
    %cst_104 = arith.constant dense<0.000000e+00> : vector<4x128xf32>
    %177 = tpu.matmul %162, %176, %cst_104 {dimension_numbers = #tpu.dot_dimension_numbers<[1], [0], [0], [1], [0, 0, 1, 1], [], []>} : vector<4x80xf32>, vector<80x128xf32>, vector<4x128xf32> -> vector<4x128xf32>
    %178 = vector.extract_strided_slice %177 {offsets = [3, 0], sizes = [1, 128], strides = [1, 1]} : vector<4x128xf32> to vector<1x128xf32>
    %179 = arith.addf %175, %178 : vector<1x128xf32>
    %c0_105 = arith.constant 0 : index
    %c0_106 = arith.constant 0 : index
    %c0_107 = arith.constant 0 : index
    %180 = vector.load %arg8[%c0_105, %c0_106, %c0_107] : memref<1x1x128xf32, #tpu.memory_space<vmem>>, vector<1x1x128xf32>
    %181 = vector.shape_cast %180 : vector<1x1x128xf32> to vector<1x128xf32>
    %182 = vector.shape_cast %179 : vector<1x128xf32> to vector<1x1x128xf32>
    tpu.vector_store %arg8[%c0_105, %c0_106, %c0_107], %182 {strides = array<i32>} : memref<1x1x128xf32, #tpu.memory_space<vmem>>, vector<1x1x128xf32>,
    return
  }
  func.func @transform_0(%arg0: i32) -> (i32, i32, i32, i32) {
    %c0_i32 = arith.constant 0 : i32
    %c0_i32_0 = arith.constant 0 : i32
    %c0_i32_1 = arith.constant 0 : i32
    %c0_i32_2 = arith.constant 0 : i32
    return %arg0, %c0_i32, %c0_i32_0, %c0_i32_1 : i32, i32, i32, i32
  }
  func.func @transform_1(%arg0: i32) -> (i32, i32) {
    %c0_i32 = arith.constant 0 : i32
    %c0_i32_0 = arith.constant 0 : i32
    %c0_i32_1 = arith.constant 0 : i32
    return %c0_i32, %c0_i32_0 : i32, i32
  }
  func.func @transform_2(%arg0: i32) -> (i32, i32) {
    %c0_i32 = arith.constant 0 : i32
    %c0_i32_0 = arith.constant 0 : i32
    %c0_i32_1 = arith.constant 0 : i32
    return %c0_i32, %c0_i32_0 : i32, i32
  }
  func.func @transform_3(%arg0: i32) -> (i32, i32) {
    %c0_i32 = arith.constant 0 : i32
    %c0_i32_0 = arith.constant 0 : i32
    %c0_i32_1 = arith.constant 0 : i32
    return %c0_i32, %c0_i32_0 : i32, i32
  }
  func.func @transform_4(%arg0: i32) -> (i32, i32) {
    %c0_i32 = arith.constant 0 : i32
    %c0_i32_0 = arith.constant 0 : i32
    %c0_i32_1 = arith.constant 0 : i32
    return %c0_i32, %c0_i32_0 : i32, i32
  }
  func.func @transform_5(%arg0: i32) -> (i32, i32) {
    %c0_i32 = arith.constant 0 : i32
    %c0_i32_0 = arith.constant 0 : i32
    %c0_i32_1 = arith.constant 0 : i32
    return %c0_i32, %c0_i32_0 : i32, i32
  }
  func.func @transform_6(%arg0: i32) -> (i32, i32) {
    %c0_i32 = arith.constant 0 : i32
    %c0_i32_0 = arith.constant 0 : i32
    %c0_i32_1 = arith.constant 0 : i32
    return %c0_i32, %c0_i32_0 : i32, i32
  }
  func.func @transform_7(%arg0: i32) -> (i32, i32, i32) {
    %c0_i32 = arith.constant 0 : i32
    %c0_i32_0 = arith.constant 0 : i32
    %c0_i32_1 = arith.constant 0 : i32
    return %arg0, %c0_i32, %c0_i32_0 : i32, i32, i32
  }
}

</mosaic_0001>

<llo_original>
// kernel: tile.13
$region0: #{tile.13}
  #allocation0 [shape = 's32[1]{0}', space=sflag, size = 0x4, scoped, tag = 'scoped memory for tile.13']
  %s0 = inlined_call_operand.vmem [shape: f32[10], index: 0, kind: input, shape index: {}]
  %s1 = inlined_call_operand.vmem [shape: f32[12,10], index: 1, kind: output, shape index: {}]
  // Predicated region
  $region2: #{tile.13} parent=0 // pred_check
    _
  $region3: #{tile.13} parent=0 // pred_check_branch
    %3 = sbr.rel (0) target = $region5
  $region4: #{tile.13} parent=0 // pred_region
    _
  $region5: #{tile.13} parent=0 // pred_fallthru
    _
  %v4 = vld [vmem:[%s0] ss:$0 sm:$0xff]
  %5 = vst [vmem:[%s1] sm:$0xff] %v4
  %s6 = scalar_lea.vmem %s1, 8
  %7 = vst [vmem:[%s6] sm:$0xff] %v4

// kernel: tile.14
$region0: #{tile.14}
  %s0 = inlined_call_operand.vmem [shape: f32[12,10], index: 0, kind: input, shape index: {}]
  %s1 = inlined_call_operand.vmem [shape: f32[1,120], index: 1, kind: output, shape index: {}]
  $region1: #{tile.14} parent=0
    #allocation0 [shape = 'u8[4096]{0}', space=vmem, size = 0x1000, scoped, tag = 'scoped mem for output reshape']
    %v2 = vld [vmem:[%s0] sm:$0x1]
    %vm3 = vcmask 80896
    %4 = vst.msk [vmem:[#allocation0] sm:$0x1] %vm3, %v2
    %s5 = scalar_lea.vmem %s0, 11
    %v6 = vld [vmem:[%s5] sm:$0x1]
    %7 = vrot.lane.b32.xlu0 %v6, 110
    %v8 = vpop.permute.xlu0 %7
    %vm9 = vcmask 982896
    %10 = vst.msk [vmem:[#allocation0] sm:$0x1] %vm9, %v8
    %s11 = scalar_lea.vmem %s0, 10
    %v12 = vld [vmem:[%s11] sm:$0x1]
    %13 = vrot.lane.b32.xlu0 %v12, 100
    %v14 = vpop.permute.xlu0 %13
    %vm15 = vcmask 900896
    %16 = vst.msk [vmem:[#allocation0] sm:$0x1] %vm15, %v14
    %s17 = scalar_lea.vmem %s0, 9
    %v18 = vld [vmem:[%s17] sm:$0x1]
    %19 = vrot.lane.b32.xlu0 %v18, 90
    %v20 = vpop.permute.xlu0 %19
    %vm21 = vcmask 818896
    %22 = vst.msk [vmem:[#allocation0] sm:$0x1] %vm21, %v20
    %s23 = scalar_lea.vmem %s0, 8
    %v24 = vld [vmem:[%s23] sm:$0x1]
    %25 = vrot.lane.b32.xlu0 %v24, 80
    %v26 = vpop.permute.xlu0 %25
    %vm27 = vcmask 736896
    %28 = vst.msk [vmem:[#allocation0] sm:$0x1] %vm27, %v26
    %s29 = scalar_lea.vmem %s0, 7
    %v30 = vld [vmem:[%s29] sm:$0x1]
    %31 = vrot.lane.b32.xlu0 %v30, 70
    %v32 = vpop.permute.xlu0 %31
    %vm33 = vcmask 654896
    %34 = vst.msk [vmem:[#allocation0] sm:$0x1] %vm33, %v32
    %s35 = scalar_lea.vmem %s0, 6
    %v36 = vld [vmem:[%s35] sm:$0x1]
    %37 = vrot.lane.b32.xlu0 %v36, 60
    %v38 = vpop.permute.xlu0 %37
    %vm39 = vcmask 572896
    %40 = vst.msk [vmem:[#allocation0] sm:$0x1] %vm39, %v38
    %s41 = scalar_lea.vmem %s0, 5
    %v42 = vld [vmem:[%s41] sm:$0x1]
    %43 = vrot.lane.b32.xlu0 %v42, 50
    %v44 = vpop.permute.xlu0 %43
    %vm45 = vcmask 490896
    %46 = vst.msk [vmem:[#allocation0] sm:$0x1] %vm45, %v44
    %s47 = scalar_lea.vmem %s0, 4
    %v48 = vld [vmem:[%s47] sm:$0x1]
    %49 = vrot.lane.b32.xlu0 %v48, 40
    %v50 = vpop.permute.xlu0 %49
    %vm51 = vcmask 408896
    %52 = vst.msk [vmem:[#allocation0] sm:$0x1] %vm51, %v50
    %s53 = scalar_lea.vmem %s0, 3
    %v54 = vld [vmem:[%s53] sm:$0x1]
    %55 = vrot.lane.b32.xlu0 %v54, 30
    %v56 = vpop.permute.xlu0 %55
    %vm57 = vcmask 326896
    %58 = vst.msk [vmem:[#allocation0] sm:$0x1] %vm57, %v56
    %s59 = scalar_lea.vmem %s0, 2
    %v60 = vld [vmem:[%s59] sm:$0x1]
    %61 = vrot.lane.b32.xlu0 %v60, 20
    %v62 = vpop.permute.xlu0 %61
    %vm63 = vcmask 244896
    %64 = vst.msk [vmem:[#allocation0] sm:$0x1] %vm63, %v62
    %s65 = scalar_lea.vmem %s0, 1
    %v66 = vld [vmem:[%s65] sm:$0x1]
    %67 = vrot.lane.b32.xlu0 %v66, 10
    %v68 = vpop.permute.xlu0 %67
    %vm69 = vcmask 162896
    %70 = vst.msk [vmem:[#allocation0] sm:$0x1] %vm69, %v68
    %s72 = sshll.u32 1, 1
    %s73 = ssub.s32 %s72, 1
    %v75 = vld [vmem:[#allocation0] sm:%s73]
    %s76 = sshll.u32 1, 1
    %s77 = ssub.s32 %s76, 1
    %78 = vst [vmem:[%s1] sm:%s77] %v75

// kernel: tile.18
$region0: #{tile.18}
  #allocation0 [shape = 's32[1]{0}', space=sflag, size = 0x4, scoped, tag = 'scoped memory for tile.18']
  %s0 = inlined_call_operand.vmem [shape: f32[20], index: 0, kind: input, shape index: {}]
  %s1 = inlined_call_operand.vmem [shape: f32[4,20], index: 1, kind: output, shape index: {}]
  // Predicated region
  $region2: #{tile.18} parent=0 // pred_check
    _
  $region3: #{tile.18} parent=0 // pred_check_branch
    %3 = sbr.rel (0) target = $region5
  $region4: #{tile.18} parent=0 // pred_region
    _
  $region5: #{tile.18} parent=0 // pred_fallthru
    _
  %v4 = vld [vmem:[%s0] ss:$0 sm:$0xff]
  %5 = vst [vmem:[%s1] sm:$0xf] %v4

// kernel: tile.19
$region0: #{tile.19}
  %s0 = inlined_call_operand.vmem [shape: f32[4,20], index: 0, kind: input, shape index: {}]
  %s1 = inlined_call_operand.vmem [shape: f32[1,80], index: 1, kind: output, shape index: {}]
  $region1: #{tile.19} parent=0
    #allocation0 [shape = 'u8[4096]{0}', space=vmem, size = 0x1000, scoped, tag = 'scoped mem for output reshape']
    #allocation1 [shape = 'u8[4096]{0}', space=vmem, size = 0x1000, scoped, tag = 'scoped mem for input reshape']
    %s3 = sshll.u32 1, 4
    %s4 = ssub.s32 %s3, 1
    %v5 = vld [vmem:[%s0] sm:%s4]
    %6 = vst [vmem:[#allocation1] sm:%s4] %v5
    %v7 = vld [vmem:[#allocation1] sm:$0x1]
    %vm8 = vcmask 162816
    %9 = vst.msk [vmem:[#allocation0] sm:$0x1] %vm8, %v7
    %s10 = scalar_lea.vmem [#allocation1], 3
    %v11 = vld [vmem:[%s10] sm:$0x1]
    %12 = vrot.lane.b32.xlu0 %v11, 60
    %v13 = vpop.permute.xlu0 %12
    %vm14 = vcmask 654816
    %15 = vst.msk [vmem:[#allocation0] sm:$0x1] %vm14, %v13
    %s16 = scalar_lea.vmem [#allocation1], 2
    %v17 = vld [vmem:[%s16] sm:$0x1]
    %18 = vrot.lane.b32.xlu0 %v17, 40
    %v19 = vpop.permute.xlu0 %18
    %vm20 = vcmask 490816
    %21 = vst.msk [vmem:[#allocation0] sm:$0x1] %vm20, %v19
    %s22 = scalar_lea.vmem [#allocation1], 1
    %v23 = vld [vmem:[%s22] sm:$0x1]
    %24 = vrot.lane.b32.xlu0 %v23, 20
    %v25 = vpop.permute.xlu0 %24
    %vm26 = vcmask 326816
    %27 = vst.msk [vmem:[#allocation0] sm:$0x1] %vm26, %v25
    %s29 = sshll.u32 1, 1
    %s30 = ssub.s32 %s29, 1
    %v32 = vld [vmem:[#allocation0] sm:%s30]
    %s33 = sshll.u32 1, 1
    %s34 = ssub.s32 %s33, 1
    %35 = vst [vmem:[%s1] sm:%s34] %v32

// kernel: network_mnist_1.1
$region0: #{network_mnist_1.1}
  #allocation0 [shape = 'u32[]', space=smem, size = 0x4, offset = 0x4, fixed_abs, tag = 'smem constant byte address 0x4 - core index']
  #allocation1 [shape = 'u32[144,128]{1,0:T(1,128)}', space=vmem, size = 0x12000, scoped, tag = 'internal scratch']
  %s0 = inlined_call_operand.vmem [shape: f32[2,4,7,28], index: 0, kind: input, shape index: {}]
  %s1 = inlined_call_operand.vmem [shape: f32[160,240], index: 1, kind: input, shape index: {}]
  %s2 = inlined_call_operand.vmem [shape: f32[1,120], index: 2, kind: input, shape index: {}]
  %s3 = inlined_call_operand.vmem [shape: f32[600,160], index: 3, kind: input, shape index: {}]
  %s4 = inlined_call_operand.vmem [shape: f32[1,80], index: 4, kind: input, shape index: {}]
  %s5 = inlined_call_operand.vmem [shape: f32[320,128], index: 5, kind: input, shape index: {}]
  %s6 = inlined_call_operand.vmem [shape: f32[1,128], index: 6, kind: input, shape index: {}]
  %s7 = inlined_call_operand.hbm [shape: f32[2,1,128], index: 7, kind: output, shape index: {}]
  %s8 = sld [smem:[#allocation0]]
  $region61: #{network_mnist_1.1} parent=0
    _
  %s10 = ssub.s32 1, %s8
  %s11 = scalar_select 0, %s10, %s8
  $region1: #{network_mnist_1.1} parent=0
    #allocation2 [shape = 'u8[1024]{0}', space=vmem, size = 0x400, scoped, tag = 'output window, operand 0']
    #allocation3 [shape = 's32[2]{0}', space=sflag, size = 0x8, scoped, tag = 'scoped memory for network_mnist_1.1']
    %12 = vsyncpa [#allocation3], 0
    %s13 = scalar_lea.sflag [#allocation3], 1
    %14 = vsyncpa %s13, 0
    loop: start=0, step=1, limit=4
    $region2: #{network_mnist_1.1} parent=1 // loop_pre_header
      _
    $region3: #{network_mnist_1.1} parent=1 // loop_header
      %s16 = sphi 0, %s20
      %p17 = scmp.ge.s32.totalorder %s16, 4
      %s26 = sphi 0, %s28
      %s29 = sphi 0, %s26
      %s30 = sphi 0, %s29
      %s46 = sphi 0, %s30
      %s50 = sphi 0, %s50
      %s52 = sphi 0, %s50
      %s53 = sphi 0, %s52
      %s67 = sphi 0, %s53
      %s71 = sphi 0, %s71
      %s73 = sphi 0, %s71
      %s74 = sphi 0, %s73
      %s88 = sphi 0, %s74
      %s92 = sphi 0, %s92
      %s94 = sphi 0, %s92
      %s95 = sphi 0, %s94
      %s109 = sphi 0, %s95
      %s113 = sphi 0, %s113
      %s115 = sphi 0, %s113
      %s116 = sphi 0, %s115
      %s130 = sphi 0, %s116
      %s134 = sphi 0, %s134
      %s136 = sphi 0, %s134
      %s137 = sphi 0, %s136
      %s151 = sphi 0, %s137
      %s155 = sphi 0, %s155
      %s157 = sphi 0, %s155
      %s158 = sphi 0, %s157
      %s172 = sphi 0, %s158
      %s178 = sphi 0, %s180
      %s181 = sphi 0, %s178
      %s182 = sphi 0, %s181
      %s198 = sphi 0, %s182
    $region4: #{network_mnist_1.1} parent=1 // loop_header_branch
      %19 = sbr.rel (%p17) target = $region8
    $region5: #{network_mnist_1.1} parent=1 // loop_body
      %s21 = ssub.s32 %s16, 1
      %s22 = ssub.s32 %s16, 2
      %s23 = sadd.s32 %s16, 1
      %s24 = ssub.s32 %s16, %s23
      %p25 = scmp.eq.s32.totalorder %s24, 0
      %s27 = sadd.s32 %s26, 1
      %s28 = scalar_select %p25, %s26, %s27
      %p31 = pneg %p25
      %p32 = scmp.eq.s32.totalorder %s16, 1
      %p33 = por %p31, %p32
      %p34 = scmp.ne.s32.totalorder %s26, %s29
      %p35 = scmp.eq.s32.totalorder %s16, 0
      %p36 = por %p34, %p35
      %p37 = scmp.ne.s32.totalorder %s26, %s29
      %p38 = scmp.eq.s32.totalorder %s21, 1
      %p39 = por %p37, %p38
      %p40 = scmp.ne.s32.totalorder %s29, %s30
      %p41 = scmp.eq.s32.totalorder %s21, 0
      %p42 = por %p40, %p41
      %p43 = scmp.ne.s32.totalorder %s29, %s30
      %p44 = scmp.eq.s32.totalorder %s22, 1
      %p45 = por %p43, %p44
      %p47 = scmp.ne.s32.totalorder %s30, %s46
      %p48 = scmp.eq.s32.totalorder %s22, 0
      %p49 = por %p47, %p48
      %s51 = sadd.s32 %s50, 1
      %p54 = scmp.eq.s32.totalorder %s16, 1
      %p55 = scmp.ne.s32.totalorder %s50, %s52
      %p56 = scmp.eq.s32.totalorder %s16, 0
      %p57 = por %p55, %p56
      %p58 = scmp.ne.s32.totalorder %s50, %s52
      %p59 = scmp.eq.s32.totalorder %s21, 1
      %p60 = por %p58, %p59
      %p61 = scmp.ne.s32.totalorder %s52, %s53
      %p62 = scmp.eq.s32.totalorder %s21, 0
      %p63 = por %p61, %p62
      %p64 = scmp.ne.s32.totalorder %s52, %s53
      %p65 = scmp.eq.s32.totalorder %s22, 1
      %p66 = por %p64, %p65
      %p68 = scmp.ne.s32.totalorder %s53, %s67
      %p69 = scmp.eq.s32.totalorder %s22, 0
      %p70 = por %p68, %p69
      %s72 = sadd.s32 %s71, 1
      %p75 = scmp.eq.s32.totalorder %s16, 1
      %p76 = scmp.ne.s32.totalorder %s71, %s73
      %p77 = scmp.eq.s32.totalorder %s16, 0
      %p78 = por %p76, %p77
      %p79 = scmp.ne.s32.totalorder %s71, %s73
      %p80 = scmp.eq.s32.totalorder %s21, 1
      %p81 = por %p79, %p80
      %p82 = scmp.ne.s32.totalorder %s73, %s74
      %p83 = scmp.eq.s32.totalorder %s21, 0
      %p84 = por %p82, %p83
      %p85 = scmp.ne.s32.totalorder %s73, %s74
      %p86 = scmp.eq.s32.totalorder %s22, 1
      %p87 = por %p85, %p86
      %p89 = scmp.ne.s32.totalorder %s74, %s88
      %p90 = scmp.eq.s32.totalorder %s22, 0
      %p91 = por %p89, %p90
      %s93 = sadd.s32 %s92, 1
      %p96 = scmp.eq.s32.totalorder %s16, 1
      %p97 = scmp.ne.s32.totalorder %s92, %s94
      %p98 = scmp.eq.s32.totalorder %s16, 0
      %p99 = por %p97, %p98
      %p100 = scmp.ne.s32.totalorder %s92, %s94
      %p101 = scmp.eq.s32.totalorder %s21, 1
      %p102 = por %p100, %p101
      %p103 = scmp.ne.s32.totalorder %s94, %s95
      %p104 = scmp.eq.s32.totalorder %s21, 0
      %p105 = por %p103, %p104
      %p106 = scmp.ne.s32.totalorder %s94, %s95
      %p107 = scmp.eq.s32.totalorder %s22, 1
      %p108 = por %p106, %p107
      %p110 = scmp.ne.s32.totalorder %s95, %s109
      %p111 = scmp.eq.s32.totalorder %s22, 0
      %p112 = por %p110, %p111
      %s114 = sadd.s32 %s113, 1
      %p117 = scmp.eq.s32.totalorder %s16, 1
      %p118 = scmp.ne.s32.totalorder %s113, %s115
      %p119 = scmp.eq.s32.totalorder %s16, 0
      %p120 = por %p118, %p119
      %p121 = scmp.ne.s32.totalorder %s113, %s115
      %p122 = scmp.eq.s32.totalorder %s21, 1
      %p123 = por %p121, %p122
      %p124 = scmp.ne.s32.totalorder %s115, %s116
      %p125 = scmp.eq.s32.totalorder %s21, 0
      %p126 = por %p124, %p125
      %p127 = scmp.ne.s32.totalorder %s115, %s116
      %p128 = scmp.eq.s32.totalorder %s22, 1
      %p129 = por %p127, %p128
      %p131 = scmp.ne.s32.totalorder %s116, %s130
      %p132 = scmp.eq.s32.totalorder %s22, 0
      %p133 = por %p131, %p132
      %s135 = sadd.s32 %s134, 1
      %p138 = scmp.eq.s32.totalorder %s16, 1
      %p139 = scmp.ne.s32.totalorder %s134, %s136
      %p140 = scmp.eq.s32.totalorder %s16, 0
      %p141 = por %p139, %p140
      %p142 = scmp.ne.s32.totalorder %s134, %s136
      %p143 = scmp.eq.s32.totalorder %s21, 1
      %p144 = por %p142, %p143
      %p145 = scmp.ne.s32.totalorder %s136, %s137
      %p146 = scmp.eq.s32.totalorder %s21, 0
      %p147 = por %p145, %p146
      %p148 = scmp.ne.s32.totalorder %s136, %s137
      %p149 = scmp.eq.s32.totalorder %s22, 1
      %p150 = por %p148, %p149
      %p152 = scmp.ne.s32.totalorder %s137, %s151
      %p153 = scmp.eq.s32.totalorder %s22, 0
      %p154 = por %p152, %p153
      %s156 = sadd.s32 %s155, 1
      %p159 = scmp.eq.s32.totalorder %s16, 1
      %p160 = scmp.ne.s32.totalorder %s155, %s157
      %p161 = scmp.eq.s32.totalorder %s16, 0
      %p162 = por %p160, %p161
      %p163 = scmp.ne.s32.totalorder %s155, %s157
      %p164 = scmp.eq.s32.totalorder %s21, 1
      %p165 = por %p163, %p164
      %p166 = scmp.ne.s32.totalorder %s157, %s158
      %p167 = scmp.eq.s32.totalorder %s21, 0
      %p168 = por %p166, %p167
      %p169 = scmp.ne.s32.totalorder %s157, %s158
      %p170 = scmp.eq.s32.totalorder %s22, 1
      %p171 = por %p169, %p170
      %p173 = scmp.ne.s32.totalorder %s158, %s172
      %p174 = scmp.eq.s32.totalorder %s22, 0
      %p175 = por %p173, %p174
      %s176 = ssub.s32 %s16, %s23
      %p177 = scmp.eq.s32.totalorder %s176, 0
      %s179 = sadd.s32 %s178, 1
      %s180 = scalar_select %p177, %s178, %s179
      %p183 = pneg %p177
      %p184 = scmp.eq.s32.totalorder %s16, 1
      %p185 = por %p183, %p184
      %p186 = scmp.ne.s32.totalorder %s178, %s181
      %p187 = scmp.eq.s32.totalorder %s16, 0
      %p188 = por %p186, %p187
      %p189 = scmp.ne.s32.totalorder %s178, %s181
      %p190 = scmp.eq.s32.totalorder %s21, 1
      %p191 = por %p189, %p190
      %p192 = scmp.ne.s32.totalorder %s181, %s182
      %p193 = scmp.eq.s32.totalorder %s21, 0
      %p194 = por %p192, %p193
      %p195 = scmp.ne.s32.totalorder %s181, %s182
      %p196 = scmp.eq.s32.totalorder %s22, 1
      %p197 = por %p195, %p196
      %p199 = scmp.ne.s32.totalorder %s182, %s198
      %p200 = scmp.eq.s32.totalorder %s22, 0
      %p201 = por %p199, %p200
      %p202 = scmp.le.s32.totalorder 1, %s16
      %p203 = scmp.lt.s32.totalorder %s16, 3
      %p204 = pnand %p202, %p203
      %p205 = pneg %p204
      // Predicated region
      $region9: #{network_mnist_1.1} parent=5 // pred_check
        _
      $region10: #{network_mnist_1.1} parent=5 // pred_check_branch
        %207 = sbr.rel (%p204) target = $region12
      $region11: #{network_mnist_1.1} parent=5 // pred_region
        %s208 = ssub.s32 %s16, 1
        // Predicated region
        $region13: #{network_mnist_1.1} parent=11 // pred_check
          %p209 = pneg %p63
        $region14: #{network_mnist_1.1} parent=11 // pred_check_branch
          %211 = sbr.rel (%p209) target = $region16
        $region15: #{network_mnist_1.1} parent=11 // pred_region
          _
        $region16: #{network_mnist_1.1} parent=11 // pred_fallthru
          _
        // Predicated region
        $region17: #{network_mnist_1.1} parent=11 // pred_check
          %p212 = pneg %p84
        $region18: #{network_mnist_1.1} parent=11 // pred_check_branch
          %214 = sbr.rel (%p212) target = $region20
        $region19: #{network_mnist_1.1} parent=11 // pred_region
          _
        $region20: #{network_mnist_1.1} parent=11 // pred_fallthru
          _
        // Predicated region
        $region21: #{network_mnist_1.1} parent=11 // pred_check
          %p215 = pneg %p105
        $region22: #{network_mnist_1.1} parent=11 // pred_check_branch
          %217 = sbr.rel (%p215) target = $region24
        $region23: #{network_mnist_1.1} parent=11 // pred_region
          _
        $region24: #{network_mnist_1.1} parent=11 // pred_fallthru
          _
        // Predicated region
        $region25: #{network_mnist_1.1} parent=11 // pred_check
          %p218 = pneg %p126
        $region26: #{network_mnist_1.1} parent=11 // pred_check_branch
          %220 = sbr.rel (%p218) target = $region28
        $region27: #{network_mnist_1.1} parent=11 // pred_region
          _
        $region28: #{network_mnist_1.1} parent=11 // pred_fallthru
          _
        // Predicated region
        $region29: #{network_mnist_1.1} parent=11 // pred_check
          %p221 = pneg %p147
        $region30: #{network_mnist_1.1} parent=11 // pred_check_branch
          %223 = sbr.rel (%p221) target = $region32
        $region31: #{network_mnist_1.1} parent=11 // pred_region
          _
        $region32: #{network_mnist_1.1} parent=11 // pred_fallthru
          _
        // Predicated region
        $region33: #{network_mnist_1.1} parent=11 // pred_check
          %p224 = pneg %p168
        $region34: #{network_mnist_1.1} parent=11 // pred_check_branch
          %226 = sbr.rel (%p224) target = $region36
        $region35: #{network_mnist_1.1} parent=11 // pred_region
          _
        $region36: #{network_mnist_1.1} parent=11 // pred_fallthru
          _
      $region12: #{network_mnist_1.1} parent=5 // pred_fallthru
        _
      %p227 = scmp.lt.s32.totalorder %s16, 2
      // Predicated region
      $region37: #{network_mnist_1.1} parent=5 // pred_check
        %p228 = pneg %p227
      $region38: #{network_mnist_1.1} parent=5 // pred_check_branch
        %230 = sbr.rel (%p228) target = $region40
      $region39: #{network_mnist_1.1} parent=5 // pred_region
        // Predicated region
        $region41: #{network_mnist_1.1} parent=39 // pred_check
          %p231 = pneg %p36
        $region42: #{network_mnist_1.1} parent=39 // pred_check_branch
          %233 = sbr.rel (%p231) target = $region44
        $region43: #{network_mnist_1.1} parent=39 // pred_region
          %p234 = scmp.lt.s32.totalorder %s16, 1
          %s235 = scalar_select %p234, %s16, 1
          %s236 = smul.addr %s235, 4
          %s237 = smul.addr %s236, 8
          %s238 = scalar_lea.vmem %s0, %s237
        $region44: #{network_mnist_1.1} parent=39 // pred_fallthru
          _
      $region40: #{network_mnist_1.1} parent=5 // pred_fallthru
        _
      %p239 = scmp.le.s32.totalorder 1, %s16
      %p240 = scmp.lt.s32.totalorder %s16, 3
      %p241 = pnand %p239, %p240
      %p242 = pneg %p241
      // Predicated region
      $region45: #{network_mnist_1.1} parent=5 // pred_check
        _
      $region46: #{network_mnist_1.1} parent=5 // pred_check_branch
        %244 = sbr.rel (%p241) target = $region48
      $region47: #{network_mnist_1.1} parent=5 // pred_region
        %s245 = ssub.s32 %s16, 1
        %p246 = scmp.lt.s32.totalorder %s21, 1
        %s247 = scalar_select %p246, %s21, 1
        %s248 = smul.addr %s247, 4
        %s249 = smul.addr %s248, 8
        %s250 = scalar_lea.vmem %s0, %s249
        %p251 = pneg %p42
        %p252 = pneg %p39
        %p253 = pneg %p63
        %p254 = pneg %p60
        %p255 = pneg %p84
        %p256 = pneg %p81
        %p257 = pneg %p105
        %p258 = pneg %p102
        %p259 = pneg %p126
        %p260 = pneg %p123
        %p261 = pneg %p147
        %p262 = pneg %p144
        %p263 = pneg %p168
        %p264 = pneg %p165
        %p265 = pneg %p194
        %p266 = pneg %p191
        %s267 = sand.u32 %s181, 1
        %s268 = scalar_lea.sflag [#allocation3], %s267
        %s269 = sand.u32 %s181, 1
        %s270 = scalar_lea.vmem [#allocation2], %s269
        %p271 = scmp.lt.s32.totalorder %s21, 1
        %s272 = scalar_select %p271, %s21, 1
        %s273 = smul.addr %s272, 4
        %s274 = smul.addr %s273, 8
        %s275 = scalar_lea.vmem %s0, %s274
        %v276 = vld [vmem:[%s275] sm:$0x7f]
        %v277 = vld [vmem:[%s275 + $0x8] sm:$0x7f]
        %v278 = vld [vmem:[%s275 + $0x10] sm:$0x7f]
        %v279 = vld [vmem:[%s275 + $0x18] sm:$0x7f]
        %v280 = vld [vmem:[%s1] sm:$0xff]
        %v281 = vld [vmem:[%s1 + $0x8] sm:$0xff]
        %v282 = vld [vmem:[%s1 + $0x10] sm:$0xff]
        %v283 = vld [vmem:[%s1 + $0x18] sm:$0xff]
        %v284 = vld [vmem:[%s1 + $0x20] sm:$0xff]
        %v285 = vld [vmem:[%s1 + $0x28] sm:$0xff]
        %v286 = vld [vmem:[%s1 + $0x30] sm:$0xf]
        %v287 = vld [vmem:[%s1 + $0x38] sm:$0xf]
        %v288 = vld [vmem:[%s1 + $0x40] sm:$0xff]
        %v289 = vld [vmem:[%s1 + $0x48] sm:$0xff]
        %v290 = vld [vmem:[%s1 + $0x50] sm:$0xff]
        %v291 = vld [vmem:[%s1 + $0x58] sm:$0xff]
        %v292 = vld [vmem:[%s1 + $0x60] sm:$0xff]
        %v293 = vld [vmem:[%s1 + $0x68] sm:$0xff]
        %v294 = vld [vmem:[%s1 + $0x70] sm:$0xf]
        %v295 = vld [vmem:[%s1 + $0x78] sm:$0xf]
        %vm296 = vcmask 228352
        %v298 = vsel %vm296, %v277, 0
        %vm300 = vcmask 1043456
        %v302 = vsel %vm300, %v294, 0
        %v305 = vsel %vm300, %v295, 0
        %307 = vmatprep.subr.mxu0 0.0
        %308 = vmatpush1.msra.mxu0 0.0
        %309 = vmatprep.subr.mxu0 0.0
        %310 = vmatpush1.msra.mxu0 0.0
        %311 = vmatprep.subr.mxu0 0.0
        %312 = vmatpush1.msra.mxu0 0.0
        %313 = vmatprep.subr.mxu0 0.0
        %314 = vmatpush1.msra.mxu0 0.0
        %315 = vmatprep.subr.mxu0 0.0
        %316 = vmatpush1.msra.mxu0 0.0
        %317 = vmatprep.subr.mxu0 0.0
        %318 = vmatpush1.msra.mxu0 0.0
        %319 = vmatprep.subr.mxu0 0.0
        %320 = vmatpush1.msra.mxu0 0.0
        %321 = vmatprep.subr.mxu0 0.0
        %322 = vmatpush1.msra.mxu0 0.0
        %323 = vmatprep.subr.mxu0 0.0
        %324 = vmatpush1.msra.mxu0 0.0
        %325 = vmatprep.subr.mxu0 0.0
        %326 = vmatpush1.msra.mxu0 0.0
        %327 = vmatprep.subr.mxu0 0.0
        %328 = vmatpush1.msra.mxu0 0.0
        %329 = vmatprep.subr.mxu0 0.0
        %330 = vmatpush1.msra.mxu0 0.0
        %331 = vmatprep.subr.mxu0 %v305
        %332 = vmatpush1.msra.mxu0 %v302
        %333 = vmatprep.subr.mxu0 %v293
        %334 = vmatpush1.msra.mxu0 %v292
        %335 = vmatprep.subr.mxu0 %v291
        %336 = vmatpush1.msra.mxu0 %v290
        %337 = vmatprep.subr.mxu0 %v289
        %338 = vmatpush1.msra.mxu0 %v288
        %339 = vmatprep.subr.mxu0 0.0
        %340 = vmatpush2.msra.mxu0 0.0
        %341 = vmatprep.subr.mxu0 0.0
        %342 = vmatpush2.msra.mxu0 0.0
        %343 = vmatprep.subr.mxu0 0.0
        %344 = vmatpush2.msra.mxu0 0.0
        %345 = vmatprep.subr.mxu0 0.0
        %346 = vmatpush2.msra.mxu0 0.0
        %347 = vmatprep.subr.mxu0 0.0
        %348 = vmatpush2.msra.mxu0 0.0
        %349 = vmatprep.subr.mxu0 0.0
        %350 = vmatpush2.msra.mxu0 0.0
        %351 = vmatprep.subr.mxu0 0.0
        %352 = vmatpush2.msra.mxu0 0.0
        %353 = vmatprep.subr.mxu0 0.0
        %354 = vmatpush2.msra.mxu0 0.0
        %355 = vmatprep.subr.mxu0 0.0
        %356 = vmatpush2.msra.mxu0 0.0
        %357 = vmatprep.subr.mxu0 0.0
        %358 = vmatpush2.msra.mxu0 0.0
        %359 = vmatprep.subr.mxu0 0.0
        %360 = vmatpush2.msra.mxu0 0.0
        %361 = vmatprep.subr.mxu0 0.0
        %362 = vmatpush2.msra.mxu0 0.0
        %363 = vmatprep.subr.mxu0 0.0
        %364 = vmatpush2.msra.mxu0 0.0
        %365 = vmatprep.subr.mxu0 0.0
        %366 = vmatpush2.msra.mxu0 0.0
        %367 = vmatprep.subr.mxu0 0.0
        %368 = vmatpush2.msra.mxu0 0.0
        %369 = vmatprep.subr.mxu0 0.0
        %370 = vmatpush2.msra.mxu0 0.0
        %371 = vmatprep.mubr.f32.mxu0 0.0
        %372 = vmatmul.mubr.f32.gmra.mxu0 %v298
        %v373 = vpop.f32.mrf.mxu0
        %v374 = vadd.f32 0.0, %v373
        %v375 = vpop.f32.mrf.mxu0
        %v376 = vadd.f32 0.0, %v375
        %377 = vdwg.mxu0
        %v379 = vsel %vm296, %v276, 0
        %v382 = vsel %vm300, %v286, 0
        %v385 = vsel %vm300, %v287, 0
        %387 = vmatprep.subr.mxu0 0.0
        %388 = vmatpush1.msra.mxu0 0.0
        %389 = vmatprep.subr.mxu0 0.0
        %390 = vmatpush1.msra.mxu0 0.0
        %391 = vmatprep.subr.mxu0 0.0
        %392 = vmatpush1.msra.mxu0 0.0
        %393 = vmatprep.subr.mxu0 0.0
        %394 = vmatpush1.msra.mxu0 0.0
        %395 = vmatprep.subr.mxu0 0.0
        %396 = vmatpush1.msra.mxu0 0.0
        %397 = vmatprep.subr.mxu0 0.0
        %398 = vmatpush1.msra.mxu0 0.0
        %399 = vmatprep.subr.mxu0 0.0
        %400 = vmatpush1.msra.mxu0 0.0
        %401 = vmatprep.subr.mxu0 0.0
        %402 = vmatpush1.msra.mxu0 0.0
        %403 = vmatprep.subr.mxu0 0.0
        %404 = vmatpush1.msra.mxu0 0.0
        %405 = vmatprep.subr.mxu0 0.0
        %406 = vmatpush1.msra.mxu0 0.0
        %407 = vmatprep.subr.mxu0 0.0
        %408 = vmatpush1.msra.mxu0 0.0
        %409 = vmatprep.subr.mxu0 0.0
        %410 = vmatpush1.msra.mxu0 0.0
        %411 = vmatprep.subr.mxu0 %v385
        %412 = vmatpush1.msra.mxu0 %v382
        %413 = vmatprep.subr.mxu0 %v285
        %414 = vmatpush1.msra.mxu0 %v284
        %415 = vmatprep.subr.mxu0 %v283
        %416 = vmatpush1.msra.mxu0 %v282
        %417 = vmatprep.subr.mxu0 %v281
        %418 = vmatpush1.msra.mxu0 %v280
        %419 = vmatprep.subr.mxu0 0.0
        %420 = vmatpush2.msra.mxu0 0.0
        %421 = vmatprep.subr.mxu0 0.0
        %422 = vmatpush2.msra.mxu0 0.0
        %423 = vmatprep.subr.mxu0 0.0
        %424 = vmatpush2.msra.mxu0 0.0
        %425 = vmatprep.subr.mxu0 0.0
        %426 = vmatpush2.msra.mxu0 0.0
        %427 = vmatprep.subr.mxu0 0.0
        %428 = vmatpush2.msra.mxu0 0.0
        %429 = vmatprep.subr.mxu0 0.0
        %430 = vmatpush2.msra.mxu0 0.0
        %431 = vmatprep.subr.mxu0 0.0
        %432 = vmatpush2.msra.mxu0 0.0
        %433 = vmatprep.subr.mxu0 0.0
        %434 = vmatpush2.msra.mxu0 0.0
        %435 = vmatprep.subr.mxu0 0.0
        %436 = vmatpush2.msra.mxu0 0.0
        %437 = vmatprep.subr.mxu0 0.0
        %438 = vmatpush2.msra.mxu0 0.0
        %439 = vmatprep.subr.mxu0 0.0
        %440 = vmatpush2.msra.mxu0 0.0
        %441 = vmatprep.subr.mxu0 0.0
        %442 = vmatpush2.msra.mxu0 0.0
        %443 = vmatprep.subr.mxu0 0.0
        %444 = vmatpush2.msra.mxu0 0.0
        %445 = vmatprep.subr.mxu0 0.0
        %446 = vmatpush2.msra.mxu0 0.0
        %447 = vmatprep.subr.mxu0 0.0
        %448 = vmatpush2.msra.mxu0 0.0
        %449 = vmatprep.subr.mxu0 0.0
        %450 = vmatpush2.msra.mxu0 0.0
        %451 = vmatprep.mubr.f32.mxu0 0.0
        %452 = vmatmul.mubr.f32.gmra.mxu0 %v379
        %v453 = vpop.f32.mrf.mxu0
        %v454 = vadd.f32 %v374, %v453
        %v455 = vpop.f32.mrf.mxu0
        %v456 = vadd.f32 %v376, %v455
        %457 = vdwg.mxu0
        %v458 = vld [vmem:[%s1 + $0x80] sm:$0xff]
        %v459 = vld [vmem:[%s1 + $0x88] sm:$0xff]
        %v460 = vld [vmem:[%s1 + $0x90] sm:$0xff]
        %v461 = vld [vmem:[%s1 + $0x98] sm:$0xff]
        %v462 = vld [vmem:[%s1 + $0xa0] sm:$0xff]
        %v463 = vld [vmem:[%s1 + $0xa8] sm:$0xff]
        %v464 = vld [vmem:[%s1 + $0xb0] sm:$0xf]
        %v465 = vld [vmem:[%s1 + $0xb8] sm:$0xf]
        %v467 = vsel %vm296, %v278, 0
        %v470 = vsel %vm300, %v464, 0
        %v473 = vsel %vm300, %v465, 0
        %475 = vmatprep.subr.mxu0 0.0
        %476 = vmatpush1.msra.mxu0 0.0
        %477 = vmatprep.subr.mxu0 0.0
        %478 = vmatpush1.msra.mxu0 0.0
        %479 = vmatprep.subr.mxu0 0.0
        %480 = vmatpush1.msra.mxu0 0.0
        %481 = vmatprep.subr.mxu0 0.0
        %482 = vmatpush1.msra.mxu0 0.0
        %483 = vmatprep.subr.mxu0 0.0
        %484 = vmatpush1.msra.mxu0 0.0
        %485 = vmatprep.subr.mxu0 0.0
        %486 = vmatpush1.msra.mxu0 0.0
        %487 = vmatprep.subr.mxu0 0.0
        %488 = vmatpush1.msra.mxu0 0.0
        %489 = vmatprep.subr.mxu0 0.0
        %490 = vmatpush1.msra.mxu0 0.0
        %491 = vmatprep.subr.mxu0 0.0
        %492 = vmatpush1.msra.mxu0 0.0
        %493 = vmatprep.subr.mxu0 0.0
        %494 = vmatpush1.msra.mxu0 0.0
        %495 = vmatprep.subr.mxu0 0.0
        %496 = vmatpush1.msra.mxu0 0.0
        %497 = vmatprep.subr.mxu0 0.0
        %498 = vmatpush1.msra.mxu0 0.0
        %499 = vmatprep.subr.mxu0 %v473
        %500 = vmatpush1.msra.mxu0 %v470
        %501 = vmatprep.subr.mxu0 %v463
        %502 = vmatpush1.msra.mxu0 %v462
        %503 = vmatprep.subr.mxu0 %v461
        %504 = vmatpush1.msra.mxu0 %v460
        %505 = vmatprep.subr.mxu0 %v459
        %506 = vmatpush1.msra.mxu0 %v458
        %507 = vmatprep.subr.mxu0 0.0
        %508 = vmatpush2.msra.mxu0 0.0
        %509 = vmatprep.subr.mxu0 0.0
        %510 = vmatpush2.msra.mxu0 0.0
        %511 = vmatprep.subr.mxu0 0.0
        %512 = vmatpush2.msra.mxu0 0.0
        %513 = vmatprep.subr.mxu0 0.0
        %514 = vmatpush2.msra.mxu0 0.0
        %515 = vmatprep.subr.mxu0 0.0
        %516 = vmatpush2.msra.mxu0 0.0
        %517 = vmatprep.subr.mxu0 0.0
        %518 = vmatpush2.msra.mxu0 0.0
        %519 = vmatprep.subr.mxu0 0.0
        %520 = vmatpush2.msra.mxu0 0.0
        %521 = vmatprep.subr.mxu0 0.0
        %522 = vmatpush2.msra.mxu0 0.0
        %523 = vmatprep.subr.mxu0 0.0
        %524 = vmatpush2.msra.mxu0 0.0
        %525 = vmatprep.subr.mxu0 0.0
        %526 = vmatpush2.msra.mxu0 0.0
        %527 = vmatprep.subr.mxu0 0.0
        %528 = vmatpush2.msra.mxu0 0.0
        %529 = vmatprep.subr.mxu0 0.0
        %530 = vmatpush2.msra.mxu0 0.0
        %531 = vmatprep.subr.mxu0 0.0
        %532 = vmatpush2.msra.mxu0 0.0
        %533 = vmatprep.subr.mxu0 0.0
        %534 = vmatpush2.msra.mxu0 0.0
        %535 = vmatprep.subr.mxu0 0.0
        %536 = vmatpush2.msra.mxu0 0.0
        %537 = vmatprep.subr.mxu0 0.0
        %538 = vmatpush2.msra.mxu0 0.0
        %539 = vmatprep.mubr.f32.mxu0 0.0
        %540 = vmatmul.mubr.f32.gmra.mxu0 %v467
        %v541 = vpop.f32.mrf.mxu0
        %v542 = vadd.f32 0.0, %v541
        %v543 = vpop.f32.mrf.mxu0
        %v544 = vadd.f32 0.0, %v543
        %545 = vdwg.mxu0
        %v546 = vadd.f32 %v454, %v542
        %v547 = vadd.f32 %v456, %v544
        %v548 = vld [vmem:[%s1 + $0xc0] sm:$0xff]
        %v549 = vld [vmem:[%s1 + $0xc8] sm:$0xff]
        %v550 = vld [vmem:[%s1 + $0xd0] sm:$0xff]
        %v551 = vld [vmem:[%s1 + $0xd8] sm:$0xff]
        %v552 = vld [vmem:[%s1 + $0xe0] sm:$0xff]
        %v553 = vld [vmem:[%s1 + $0xe8] sm:$0xff]
        %v554 = vld [vmem:[%s1 + $0xf0] sm:$0xf]
        %v555 = vld [vmem:[%s1 + $0xf8] sm:$0xf]
        %v557 = vsel %vm296, %v279, 0
        %v560 = vsel %vm300, %v554, 0
        %v563 = vsel %vm300, %v555, 0
        %565 = vmatprep.subr.mxu0 0.0
        %566 = vmatpush1.msra.mxu0 0.0
        %567 = vmatprep.subr.mxu0 0.0
        %568 = vmatpush1.msra.mxu0 0.0
        %569 = vmatprep.subr.mxu0 0.0
        %570 = vmatpush1.msra.mxu0 0.0
        %571 = vmatprep.subr.mxu0 0.0
        %572 = vmatpush1.msra.mxu0 0.0
        %573 = vmatprep.subr.mxu0 0.0
        %574 = vmatpush1.msra.mxu0 0.0
        %575 = vmatprep.subr.mxu0 0.0
        %576 = vmatpush1.msra.mxu0 0.0
        %577 = vmatprep.subr.mxu0 0.0
        %578 = vmatpush1.msra.mxu0 0.0
        %579 = vmatprep.subr.mxu0 0.0
        %580 = vmatpush1.msra.mxu0 0.0
        %581 = vmatprep.subr.mxu0 0.0
        %582 = vmatpush1.msra.mxu0 0.0
        %583 = vmatprep.subr.mxu0 0.0
        %584 = vmatpush1.msra.mxu0 0.0
        %585 = vmatprep.subr.mxu0 0.0
        %586 = vmatpush1.msra.mxu0 0.0
        %587 = vmatprep.subr.mxu0 0.0
        %588 = vmatpush1.msra.mxu0 0.0
        %589 = vmatprep.subr.mxu0 %v563
        %590 = vmatpush1.msra.mxu0 %v560
        %591 = vmatprep.subr.mxu0 %v553
        %592 = vmatpush1.msra.mxu0 %v552
        %593 = vmatprep.subr.mxu0 %v551
        %594 = vmatpush1.msra.mxu0 %v550
        %595 = vmatprep.subr.mxu0 %v549
        %596 = vmatpush1.msra.mxu0 %v548
        %597 = vmatprep.subr.mxu0 0.0
        %598 = vmatpush2.msra.mxu0 0.0
        %599 = vmatprep.subr.mxu0 0.0
        %600 = vmatpush2.msra.mxu0 0.0
        %601 = vmatprep.subr.mxu0 0.0
        %602 = vmatpush2.msra.mxu0 0.0
        %603 = vmatprep.subr.mxu0 0.0
        %604 = vmatpush2.msra.mxu0 0.0
        %605 = vmatprep.subr.mxu0 0.0
        %606 = vmatpush2.msra.mxu0 0.0
        %607 = vmatprep.subr.mxu0 0.0
        %608 = vmatpush2.msra.mxu0 0.0
        %609 = vmatprep.subr.mxu0 0.0
        %610 = vmatpush2.msra.mxu0 0.0
        %611 = vmatprep.subr.mxu0 0.0
        %612 = vmatpush2.msra.mxu0 0.0
        %613 = vmatprep.subr.mxu0 0.0
        %614 = vmatpush2.msra.mxu0 0.0
        %615 = vmatprep.subr.mxu0 0.0
        %616 = vmatpush2.msra.mxu0 0.0
        %617 = vmatprep.subr.mxu0 0.0
        %618 = vmatpush2.msra.mxu0 0.0
        %619 = vmatprep.subr.mxu0 0.0
        %620 = vmatpush2.msra.mxu0 0.0
        %621 = vmatprep.subr.mxu0 0.0
        %622 = vmatpush2.msra.mxu0 0.0
        %623 = vmatprep.subr.mxu0 0.0
        %624 = vmatpush2.msra.mxu0 0.0
        %625 = vmatprep.subr.mxu0 0.0
        %626 = vmatpush2.msra.mxu0 0.0
        %627 = vmatprep.subr.mxu0 0.0
        %628 = vmatpush2.msra.mxu0 0.0
        %629 = vmatprep.mubr.f32.mxu0 0.0
        %630 = vmatmul.mubr.f32.gmra.mxu0 %v557
        %v631 = vpop.f32.mrf.mxu0
        %v632 = vadd.f32 0.0, %v631
        %v633 = vpop.f32.mrf.mxu0
        %v634 = vadd.f32 0.0, %v633
        %635 = vdwg.mxu0
        %v636 = vadd.f32 %v546, %v632
        %v637 = vadd.f32 %v547, %v634
        %v638 = vld [vmem:[%s1 + $0x100] sm:$0xff]
        %v639 = vld [vmem:[%s1 + $0x108] sm:$0xff]
        %v640 = vld [vmem:[%s1 + $0x110] sm:$0xff]
        %v641 = vld [vmem:[%s1 + $0x118] sm:$0xff]
        %v642 = vld [vmem:[%s1 + $0x120] sm:$0xff]
        %v643 = vld [vmem:[%s1 + $0x128] sm:$0xff]
        %v644 = vld [vmem:[%s1 + $0x130] sm:$0xf]
        %v645 = vld [vmem:[%s1 + $0x138] sm:$0xf]
        %v646 = vrot.slane %v276, 1
        %v647 = vsel %vm296, %v646, 0
        %v650 = vsel %vm300, %v644, 0
        %v653 = vsel %vm300, %v645, 0
        %655 = vmatprep.subr.mxu0 0.0
        %656 = vmatpush1.msra.mxu0 0.0
        %657 = vmatprep.subr.mxu0 0.0
        %658 = vmatpush1.msra.mxu0 0.0
        %659 = vmatprep.subr.mxu0 0.0
        %660 = vmatpush1.msra.mxu0 0.0
        %661 = vmatprep.subr.mxu0 0.0
        %662 = vmatpush1.msra.mxu0 0.0
        %663 = vmatprep.subr.mxu0 0.0
        %664 = vmatpush1.msra.mxu0 0.0
        %665 = vmatprep.subr.mxu0 0.0
        %666 = vmatpush1.msra.mxu0 0.0
        %667 = vmatprep.subr.mxu0 0.0
        %668 = vmatpush1.msra.mxu0 0.0
        %669 = vmatprep.subr.mxu0 0.0
        %670 = vmatpush1.msra.mxu0 0.0
        %671 = vmatprep.subr.mxu0 0.0
        %672 = vmatpush1.msra.mxu0 0.0
        %673 = vmatprep.subr.mxu0 0.0
        %674 = vmatpush1.msra.mxu0 0.0
        %675 = vmatprep.subr.mxu0 0.0
        %676 = vmatpush1.msra.mxu0 0.0
        %677 = vmatprep.subr.mxu0 0.0
        %678 = vmatpush1.msra.mxu0 0.0
        %679 = vmatprep.subr.mxu0 %v653
        %680 = vmatpush1.msra.mxu0 %v650
        %681 = vmatprep.subr.mxu0 %v643
        %682 = vmatpush1.msra.mxu0 %v642
        %683 = vmatprep.subr.mxu0 %v641
        %684 = vmatpush1.msra.mxu0 %v640
        %685 = vmatprep.subr.mxu0 %v639
        %686 = vmatpush1.msra.mxu0 %v638
        %687 = vmatprep.subr.mxu0 0.0
        %688 = vmatpush2.msra.mxu0 0.0
        %689 = vmatprep.subr.mxu0 0.0
        %690 = vmatpush2.msra.mxu0 0.0
        %691 = vmatprep.subr.mxu0 0.0
        %692 = vmatpush2.msra.mxu0 0.0
        %693 = vmatprep.subr.mxu0 0.0
        %694 = vmatpush2.msra.mxu0 0.0
        %695 = vmatprep.subr.mxu0 0.0
        %696 = vmatpush2.msra.mxu0 0.0
        %697 = vmatprep.subr.mxu0 0.0
        %698 = vmatpush2.msra.mxu0 0.0
        %699 = vmatprep.subr.mxu0 0.0
        %700 = vmatpush2.msra.mxu0 0.0
        %701 = vmatprep.subr.mxu0 0.0
        %702 = vmatpush2.msra.mxu0 0.0
        %703 = vmatprep.subr.mxu0 0.0
        %704 = vmatpush2.msra.mxu0 0.0
        %705 = vmatprep.subr.mxu0 0.0
        %706 = vmatpush2.msra.mxu0 0.0
        %707 = vmatprep.subr.mxu0 0.0
        %708 = vmatpush2.msra.mxu0 0.0
        %709 = vmatprep.subr.mxu0 0.0
        %710 = vmatpush2.msra.mxu0 0.0
        %711 = vmatprep.subr.mxu0 0.0
        %712 = vmatpush2.msra.mxu0 0.0
        %713 = vmatprep.subr.mxu0 0.0
        %714 = vmatpush2.msra.mxu0 0.0
        %715 = vmatprep.subr.mxu0 0.0
        %716 = vmatpush2.msra.mxu0 0.0
        %717 = vmatprep.subr.mxu0 0.0
        %718 = vmatpush2.msra.mxu0 0.0
        %719 = vmatprep.mubr.f32.mxu0 0.0
        %720 = vmatmul.mubr.f32.gmra.mxu0 %v647
        %v721 = vpop.f32.mrf.mxu0
        %v722 = vadd.f32 0.0, %v721
        %v723 = vpop.f32.mrf.mxu0
        %v724 = vadd.f32 0.0, %v723
        %725 = vdwg.mxu0
        %v726 = vadd.f32 %v636, %v722
        %v727 = vadd.f32 %v637, %v724
        %728 = vmatprep.subr.mxu0 0.0
        %729 = vmatpush1.msra.mxu0 0.0
        %730 = vmatprep.subr.mxu0 0.0
        %731 = vmatpush1.msra.mxu0 0.0
        %732 = vmatprep.subr.mxu0 0.0
        %733 = vmatpush1.msra.mxu0 0.0
        %734 = vmatprep.subr.mxu0 0.0
        %735 = vmatpush1.msra.mxu0 0.0
        %736 = vmatprep.subr.mxu0 0.0
        %737 = vmatpush1.msra.mxu0 0.0
        %738 = vmatprep.subr.mxu0 0.0
        %739 = vmatpush1.msra.mxu0 0.0
        %740 = vmatprep.subr.mxu0 0.0
        %741 = vmatpush1.msra.mxu0 0.0
        %742 = vmatprep.subr.mxu0 0.0
        %743 = vmatpush1.msra.mxu0 0.0
        %744 = vmatprep.subr.mxu0 0.0
        %745 = vmatpush1.msra.mxu0 0.0
        %746 = vmatprep.subr.mxu0 0.0
        %747 = vmatpush1.msra.mxu0 0.0
        %748 = vmatprep.subr.mxu0 0.0
        %749 = vmatpush1.msra.mxu0 0.0
        %750 = vmatprep.subr.mxu0 0.0
        %751 = vmatpush1.msra.mxu0 0.0
        %752 = vmatprep.subr.mxu0 %v305
        %753 = vmatpush1.msra.mxu0 %v302
        %754 = vmatprep.subr.mxu0 %v293
        %755 = vmatpush1.msra.mxu0 %v292
        %756 = vmatprep.subr.mxu0 %v291
        %757 = vmatpush1.msra.mxu0 %v290
        %758 = vmatprep.subr.mxu0 %v289
        %759 = vmatpush1.msra.mxu0 %v288
        %760 = vmatprep.subr.mxu0 0.0
        %761 = vmatpush2.msra.mxu0 0.0
        %762 = vmatprep.subr.mxu0 0.0
        %763 = vmatpush2.msra.mxu0 0.0
        %764 = vmatprep.subr.mxu0 0.0
        %765 = vmatpush2.msra.mxu0 0.0
        %766 = vmatprep.subr.mxu0 0.0
        %767 = vmatpush2.msra.mxu0 0.0
        %768 = vmatprep.subr.mxu0 0.0
        %769 = vmatpush2.msra.mxu0 0.0
        %770 = vmatprep.subr.mxu0 0.0
        %771 = vmatpush2.msra.mxu0 0.0
        %772 = vmatprep.subr.mxu0 0.0
        %773 = vmatpush2.msra.mxu0 0.0
        %774 = vmatprep.subr.mxu0 0.0
        %775 = vmatpush2.msra.mxu0 0.0
        %776 = vmatprep.subr.mxu0 0.0
        %777 = vmatpush2.msra.mxu0 0.0
        %778 = vmatprep.subr.mxu0 0.0
        %779 = vmatpush2.msra.mxu0 0.0
        %780 = vmatprep.subr.mxu0 0.0
        %781 = vmatpush2.msra.mxu0 0.0
        %782 = vmatprep.subr.mxu0 0.0
        %783 = vmatpush2.msra.mxu0 0.0
        %784 = vmatprep.subr.mxu0 0.0
        %785 = vmatpush2.msra.mxu0 0.0
        %786 = vmatprep.subr.mxu0 0.0
        %787 = vmatpush2.msra.mxu0 0.0
        %788 = vmatprep.subr.mxu0 0.0
        %789 = vmatpush2.msra.mxu0 0.0
        %790 = vmatprep.subr.mxu0 0.0
        %791 = vmatpush2.msra.mxu0 0.0
        %792 = vmatprep.mubr.f32.mxu0 0.0
        %793 = vmatmul.mubr.f32.gmra.mxu0 %v467
        %v794 = vpop.f32.mrf.mxu0
        %v795 = vadd.f32 0.0, %v794
        %v796 = vpop.f32.mrf.mxu0
        %v797 = vadd.f32 0.0, %v796
        %798 = vdwg.mxu0
        %799 = vmatprep.subr.mxu0 0.0
        %800 = vmatpush1.msra.mxu0 0.0
        %801 = vmatprep.subr.mxu0 0.0
        %802 = vmatpush1.msra.mxu0 0.0
        %803 = vmatprep.subr.mxu0 0.0
        %804 = vmatpush1.msra.mxu0 0.0
        %805 = vmatprep.subr.mxu0 0.0
        %806 = vmatpush1.msra.mxu0 0.0
        %807 = vmatprep.subr.mxu0 0.0
        %808 = vmatpush1.msra.mxu0 0.0
        %809 = vmatprep.subr.mxu0 0.0
        %810 = vmatpush1.msra.mxu0 0.0
        %811 = vmatprep.subr.mxu0 0.0
        %812 = vmatpush1.msra.mxu0 0.0
        %813 = vmatprep.subr.mxu0 0.0
        %814 = vmatpush1.msra.mxu0 0.0
        %815 = vmatprep.subr.mxu0 0.0
        %816 = vmatpush1.msra.mxu0 0.0
        %817 = vmatprep.subr.mxu0 0.0
        %818 = vmatpush1.msra.mxu0 0.0
        %819 = vmatprep.subr.mxu0 0.0
        %820 = vmatpush1.msra.mxu0 0.0
        %821 = vmatprep.subr.mxu0 0.0
        %822 = vmatpush1.msra.mxu0 0.0
        %823 = vmatprep.subr.mxu0 %v385
        %824 = vmatpush1.msra.mxu0 %v382
        %825 = vmatprep.subr.mxu0 %v285
        %826 = vmatpush1.msra.mxu0 %v284
        %827 = vmatprep.subr.mxu0 %v283
        %828 = vmatpush1.msra.mxu0 %v282
        %829 = vmatprep.subr.mxu0 %v281
        %830 = vmatpush1.msra.mxu0 %v280
        %831 = vmatprep.subr.mxu0 0.0
        %832 = vmatpush2.msra.mxu0 0.0
        %833 = vmatprep.subr.mxu0 0.0
        %834 = vmatpush2.msra.mxu0 0.0
        %835 = vmatprep.subr.mxu0 0.0
        %836 = vmatpush2.msra.mxu0 0.0
        %837 = vmatprep.subr.mxu0 0.0
        %838 = vmatpush2.msra.mxu0 0.0
        %839 = vmatprep.subr.mxu0 0.0
        %840 = vmatpush2.msra.mxu0 0.0
        %841 = vmatprep.subr.mxu0 0.0
        %842 = vmatpush2.msra.mxu0 0.0
        %843 = vmatprep.subr.mxu0 0.0
        %844 = vmatpush2.msra.mxu0 0.0
        %845 = vmatprep.subr.mxu0 0.0
        %846 = vmatpush2.msra.mxu0 0.0
        %847 = vmatprep.subr.mxu0 0.0
        %848 = vmatpush2.msra.mxu0 0.0
        %849 = vmatprep.subr.mxu0 0.0
        %850 = vmatpush2.msra.mxu0 0.0
        %851 = vmatprep.subr.mxu0 0.0
        %852 = vmatpush2.msra.mxu0 0.0
        %853 = vmatprep.subr.mxu0 0.0
        %854 = vmatpush2.msra.mxu0 0.0
        %855 = vmatprep.subr.mxu0 0.0
        %856 = vmatpush2.msra.mxu0 0.0
        %857 = vmatprep.subr.mxu0 0.0
        %858 = vmatpush2.msra.mxu0 0.0
        %859 = vmatprep.subr.mxu0 0.0
        %860 = vmatpush2.msra.mxu0 0.0
        %861 = vmatprep.subr.mxu0 0.0
        %862 = vmatpush2.msra.mxu0 0.0
        %863 = vmatprep.mubr.f32.mxu0 0.0
        %864 = vmatmul.mubr.f32.gmra.mxu0 %v298
        %v865 = vpop.f32.mrf.mxu0
        %v866 = vadd.f32 %v795, %v865
        %v867 = vpop.f32.mrf.mxu0
        %v868 = vadd.f32 %v797, %v867
        %869 = vdwg.mxu0
        %870 = vmatprep.subr.mxu0 0.0
        %871 = vmatpush1.msra.mxu0 0.0
        %872 = vmatprep.subr.mxu0 0.0
        %873 = vmatpush1.msra.mxu0 0.0
        %874 = vmatprep.subr.mxu0 0.0
        %875 = vmatpush1.msra.mxu0 0.0
        %876 = vmatprep.subr.mxu0 0.0
        %877 = vmatpush1.msra.mxu0 0.0
        %878 = vmatprep.subr.mxu0 0.0
        %879 = vmatpush1.msra.mxu0 0.0
        %880 = vmatprep.subr.mxu0 0.0
        %881 = vmatpush1.msra.mxu0 0.0
        %882 = vmatprep.subr.mxu0 0.0
        %883 = vmatpush1.msra.mxu0 0.0
        %884 = vmatprep.subr.mxu0 0.0
        %885 = vmatpush1.msra.mxu0 0.0
        %886 = vmatprep.subr.mxu0 0.0
        %887 = vmatpush1.msra.mxu0 0.0
        %888 = vmatprep.subr.mxu0 0.0
        %889 = vmatpush1.msra.mxu0 0.0
        %890 = vmatprep.subr.mxu0 0.0
        %891 = vmatpush1.msra.mxu0 0.0
        %892 = vmatprep.subr.mxu0 0.0
        %893 = vmatpush1.msra.mxu0 0.0
        %894 = vmatprep.subr.mxu0 %v473
        %895 = vmatpush1.msra.mxu0 %v470
        %896 = vmatprep.subr.mxu0 %v463
        %897 = vmatpush1.msra.mxu0 %v462
        %898 = vmatprep.subr.mxu0 %v461
        %899 = vmatpush1.msra.mxu0 %v460
        %900 = vmatprep.subr.mxu0 %v459
        %901 = vmatpush1.msra.mxu0 %v458
        %902 = vmatprep.subr.mxu0 0.0
        %903 = vmatpush2.msra.mxu0 0.0
        %904 = vmatprep.subr.mxu0 0.0
        %905 = vmatpush2.msra.mxu0 0.0
        %906 = vmatprep.subr.mxu0 0.0
        %907 = vmatpush2.msra.mxu0 0.0
        %908 = vmatprep.subr.mxu0 0.0
        %909 = vmatpush2.msra.mxu0 0.0
        %910 = vmatprep.subr.mxu0 0.0
        %911 = vmatpush2.msra.mxu0 0.0
        %912 = vmatprep.subr.mxu0 0.0
        %913 = vmatpush2.msra.mxu0 0.0
        %914 = vmatprep.subr.mxu0 0.0
        %915 = vmatpush2.msra.mxu0 0.0
        %916 = vmatprep.subr.mxu0 0.0
        %917 = vmatpush2.msra.mxu0 0.0
        %918 = vmatprep.subr.mxu0 0.0
        %919 = vmatpush2.msra.mxu0 0.0
        %920 = vmatprep.subr.mxu0 0.0
        %921 = vmatpush2.msra.mxu0 0.0
        %922 = vmatprep.subr.mxu0 0.0
        %923 = vmatpush2.msra.mxu0 0.0
        %924 = vmatprep.subr.mxu0 0.0
        %925 = vmatpush2.msra.mxu0 0.0
        %926 = vmatprep.subr.mxu0 0.0
        %927 = vmatpush2.msra.mxu0 0.0
        %928 = vmatprep.subr.mxu0 0.0
        %929 = vmatpush2.msra.mxu0 0.0
        %930 = vmatprep.subr.mxu0 0.0
        %931 = vmatpush2.msra.mxu0 0.0
        %932 = vmatprep.subr.mxu0 0.0
        %933 = vmatpush2.msra.mxu0 0.0
        %934 = vmatprep.mubr.f32.mxu0 0.0
        %935 = vmatmul.mubr.f32.gmra.mxu0 %v557
        %v936 = vpop.f32.mrf.mxu0
        %v937 = vadd.f32 0.0, %v936
        %v938 = vpop.f32.mrf.mxu0
        %v939 = vadd.f32 0.0, %v938
        %940 = vdwg.mxu0
        %v941 = vadd.f32 %v866, %v937
        %v942 = vadd.f32 %v868, %v939
        %943 = vmatprep.subr.mxu0 0.0
        %944 = vmatpush1.msra.mxu0 0.0
        %945 = vmatprep.subr.mxu0 0.0
        %946 = vmatpush1.msra.mxu0 0.0
        %947 = vmatprep.subr.mxu0 0.0
        %948 = vmatpush1.msra.mxu0 0.0
        %949 = vmatprep.subr.mxu0 0.0
        %950 = vmatpush1.msra.mxu0 0.0
        %951 = vmatprep.subr.mxu0 0.0
        %952 = vmatpush1.msra.mxu0 0.0
        %953 = vmatprep.subr.mxu0 0.0
        %954 = vmatpush1.msra.mxu0 0.0
        %955 = vmatprep.subr.mxu0 0.0
        %956 = vmatpush1.msra.mxu0 0.0
        %957 = vmatprep.subr.mxu0 0.0
        %958 = vmatpush1.msra.mxu0 0.0
        %959 = vmatprep.subr.mxu0 0.0
        %960 = vmatpush1.msra.mxu0 0.0
        %961 = vmatprep.subr.mxu0 0.0
        %962 = vmatpush1.msra.mxu0 0.0
        %963 = vmatprep.subr.mxu0 0.0
        %964 = vmatpush1.msra.mxu0 0.0
        %965 = vmatprep.subr.mxu0 0.0
        %966 = vmatpush1.msra.mxu0 0.0
        %967 = vmatprep.subr.mxu0 %v563
        %968 = vmatpush1.msra.mxu0 %v560
        %969 = vmatprep.subr.mxu0 %v553
        %970 = vmatpush1.msra.mxu0 %v552
        %971 = vmatprep.subr.mxu0 %v551
        %972 = vmatpush1.msra.mxu0 %v550
        %973 = vmatprep.subr.mxu0 %v549
        %974 = vmatpush1.msra.mxu0 %v548
        %975 = vmatprep.subr.mxu0 0.0
        %976 = vmatpush2.msra.mxu0 0.0
        %977 = vmatprep.subr.mxu0 0.0
        %978 = vmatpush2.msra.mxu0 0.0
        %979 = vmatprep.subr.mxu0 0.0
        %980 = vmatpush2.msra.mxu0 0.0
        %981 = vmatprep.subr.mxu0 0.0
        %982 = vmatpush2.msra.mxu0 0.0
        %983 = vmatprep.subr.mxu0 0.0
        %984 = vmatpush2.msra.mxu0 0.0
        %985 = vmatprep.subr.mxu0 0.0
        %986 = vmatpush2.msra.mxu0 0.0
        %987 = vmatprep.subr.mxu0 0.0
        %988 = vmatpush2.msra.mxu0 0.0
        %989 = vmatprep.subr.mxu0 0.0
        %990 = vmatpush2.msra.mxu0 0.0
        %991 = vmatprep.subr.mxu0 0.0
        %992 = vmatpush2.msra.mxu0 0.0
        %993 = vmatprep.subr.mxu0 0.0
        %994 = vmatpush2.msra.mxu0 0.0
        %995 = vmatprep.subr.mxu0 0.0
        %996 = vmatpush2.msra.mxu0 0.0
        %997 = vmatprep.subr.mxu0 0.0
        %998 = vmatpush2.msra.mxu0 0.0
        %999 = vmatprep.subr.mxu0 0.0
        %1000 = vmatpush2.msra.mxu0 0.0
        %1001 = vmatprep.subr.mxu0 0.0
        %1002 = vmatpush2.msra.mxu0 0.0
        %1003 = vmatprep.subr.mxu0 0.0
        %1004 = vmatpush2.msra.mxu0 0.0
        %1005 = vmatprep.subr.mxu0 0.0
        %1006 = vmatpush2.msra.mxu0 0.0
        %1007 = vmatprep.mubr.f32.mxu0 0.0
        %1008 = vmatmul.mubr.f32.gmra.mxu0 %v647
        %v1009 = vpop.f32.mrf.mxu0
        %v1010 = vadd.f32 0.0, %v1009
        %v1011 = vpop.f32.mrf.mxu0
        %v1012 = vadd.f32 0.0, %v1011
        %1013 = vdwg.mxu0
        %v1014 = vadd.f32 %v941, %v1010
        %v1015 = vadd.f32 %v942, %v1012
        %v1016 = vrot.slane %v277, 1
        %v1017 = vsel %vm296, %v1016, 0
        %1019 = vmatprep.subr.mxu0 0.0
        %1020 = vmatpush1.msra.mxu0 0.0
        %1021 = vmatprep.subr.mxu0 0.0
        %1022 = vmatpush1.msra.mxu0 0.0
        %1023 = vmatprep.subr.mxu0 0.0
        %1024 = vmatpush1.msra.mxu0 0.0
        %1025 = vmatprep.subr.mxu0 0.0
        %1026 = vmatpush1.msra.mxu0 0.0
        %1027 = vmatprep.subr.mxu0 0.0
        %1028 = vmatpush1.msra.mxu0 0.0
        %1029 = vmatprep.subr.mxu0 0.0
        %1030 = vmatpush1.msra.mxu0 0.0
        %1031 = vmatprep.subr.mxu0 0.0
        %1032 = vmatpush1.msra.mxu0 0.0
        %1033 = vmatprep.subr.mxu0 0.0
        %1034 = vmatpush1.msra.mxu0 0.0
        %1035 = vmatprep.subr.mxu0 0.0
        %1036 = vmatpush1.msra.mxu0 0.0
        %1037 = vmatprep.subr.mxu0 0.0
        %1038 = vmatpush1.msra.mxu0 0.0
        %1039 = vmatprep.subr.mxu0 0.0
        %1040 = vmatpush1.msra.mxu0 0.0
        %1041 = vmatprep.subr.mxu0 0.0
        %1042 = vmatpush1.msra.mxu0 0.0
        %1043 = vmatprep.subr.mxu0 %v653
        %1044 = vmatpush1.msra.mxu0 %v650
        %1045 = vmatprep.subr.mxu0 %v643
        %1046 = vmatpush1.msra.mxu0 %v642
        %1047 = vmatprep.subr.mxu0 %v641
        %1048 = vmatpush1.msra.mxu0 %v640
        %1049 = vmatprep.subr.mxu0 %v639
        %1050 = vmatpush1.msra.mxu0 %v638
        %1051 = vmatprep.subr.mxu0 0.0
        %1052 = vmatpush2.msra.mxu0 0.0
        %1053 = vmatprep.subr.mxu0 0.0
        %1054 = vmatpush2.msra.mxu0 0.0
        %1055 = vmatprep.subr.mxu0 0.0
        %1056 = vmatpush2.msra.mxu0 0.0
        %1057 = vmatprep.subr.mxu0 0.0
        %1058 = vmatpush2.msra.mxu0 0.0
        %1059 = vmatprep.subr.mxu0 0.0
        %1060 = vmatpush2.msra.mxu0 0.0
        %1061 = vmatprep.subr.mxu0 0.0
        %1062 = vmatpush2.msra.mxu0 0.0
        %1063 = vmatprep.subr.mxu0 0.0
        %1064 = vmatpush2.msra.mxu0 0.0
        %1065 = vmatprep.subr.mxu0 0.0
        %1066 = vmatpush2.msra.mxu0 0.0
        %1067 = vmatprep.subr.mxu0 0.0
        %1068 = vmatpush2.msra.mxu0 0.0
        %1069 = vmatprep.subr.mxu0 0.0
        %1070 = vmatpush2.msra.mxu0 0.0
        %1071 = vmatprep.subr.mxu0 0.0
        %1072 = vmatpush2.msra.mxu0 0.0
        %1073 = vmatprep.subr.mxu0 0.0
        %1074 = vmatpush2.msra.mxu0 0.0
        %1075 = vmatprep.subr.mxu0 0.0
        %1076 = vmatpush2.msra.mxu0 0.0
        %1077 = vmatprep.subr.mxu0 0.0
        %1078 = vmatpush2.msra.mxu0 0.0
        %1079 = vmatprep.subr.mxu0 0.0
        %1080 = vmatpush2.msra.mxu0 0.0
        %1081 = vmatprep.subr.mxu0 0.0
        %1082 = vmatpush2.msra.mxu0 0.0
        %1083 = vmatprep.mubr.f32.mxu0 0.0
        %1084 = vmatmul.mubr.f32.gmra.mxu0 %v1017
        %v1085 = vpop.f32.mrf.mxu0
        %v1086 = vadd.f32 0.0, %v1085
        %v1087 = vpop.f32.mrf.mxu0
        %v1088 = vadd.f32 0.0, %v1087
        %1089 = vdwg.mxu0
        %v1090 = vadd.f32 %v1014, %v1086
        %v1091 = vadd.f32 %v1015, %v1088
        %v1092 = vmax.f32 %v726, %v1090
        %v1093 = vmax.f32 %v727, %v1091
        %1096 = vrot.lane.b32.xlu0 %v1092, 8
        %v1097 = vpop.permute.xlu0 %1096
        %1098 = vrot.lane.b32.xlu0 %v1093, 8
        %v1099 = vpop.permute.xlu0 %1098
        %vm1100 = vcmask 64512
        %v1101 = vsel %vm1100, %v1097, %v1099
        %v1103 = vmax.f32 %v1092, %v1101
        %v1104 = vld [vmem:[%s2] sm:$0x1]
        %v1106 = vlaneseq
        %v1107 = vshrl.u32 %v1106, 7
        %v1108 = vsub.s32 0, %v1107
        %v1109 = vrot.slane %v1104, %v1108
        %v1111 = vadd.f32 %v1103, %v1109
        %v1112 = vmax.f32 %v1111, 0.0
        %1113 = vmatprep.subr.mxu0 0.0
        %1114 = vmatpush1.msra.mxu0 0.0
        %1115 = vmatprep.subr.mxu0 0.0
        %1116 = vmatpush1.msra.mxu0 0.0
        %1117 = vmatprep.subr.mxu0 0.0
        %1118 = vmatpush1.msra.mxu0 0.0
        %1119 = vmatprep.subr.mxu0 0.0
        %1120 = vmatpush1.msra.mxu0 0.0
        %1121 = vmatprep.subr.mxu0 0.0
        %1122 = vmatpush1.msra.mxu0 0.0
        %1123 = vmatprep.subr.mxu0 0.0
        %1124 = vmatpush1.msra.mxu0 0.0
        %1125 = vmatprep.subr.mxu0 0.0
        %1126 = vmatpush1.msra.mxu0 0.0
        %1127 = vmatprep.subr.mxu0 0.0
        %1128 = vmatpush1.msra.mxu0 0.0
        %1129 = vmatprep.subr.mxu0 0.0
        %1130 = vmatpush1.msra.mxu0 0.0
        %1131 = vmatprep.subr.mxu0 0.0
        %1132 = vmatpush1.msra.mxu0 0.0
        %1133 = vmatprep.subr.mxu0 0.0
        %1134 = vmatpush1.msra.mxu0 0.0
        %1135 = vmatprep.subr.mxu0 0.0
        %1136 = vmatpush1.msra.mxu0 0.0
        %1137 = vmatprep.subr.mxu0 %v305
        %1138 = vmatpush1.msra.mxu0 %v302
        %1139 = vmatprep.subr.mxu0 %v293
        %1140 = vmatpush1.msra.mxu0 %v292
        %1141 = vmatprep.subr.mxu0 %v291
        %1142 = vmatpush1.msra.mxu0 %v290
        %1143 = vmatprep.subr.mxu0 %v289
        %1144 = vmatpush1.msra.mxu0 %v288
        %1145 = vmatprep.subr.mxu0 0.0
        %1146 = vmatpush2.msra.mxu0 0.0
        %1147 = vmatprep.subr.mxu0 0.0
        %1148 = vmatpush2.msra.mxu0 0.0
        %1149 = vmatprep.subr.mxu0 0.0
        %1150 = vmatpush2.msra.mxu0 0.0
        %1151 = vmatprep.subr.mxu0 0.0
        %1152 = vmatpush2.msra.mxu0 0.0
        %1153 = vmatprep.subr.mxu0 0.0
        %1154 = vmatpush2.msra.mxu0 0.0
        %1155 = vmatprep.subr.mxu0 0.0
        %1156 = vmatpush2.msra.mxu0 0.0
        %1157 = vmatprep.subr.mxu0 0.0
        %1158 = vmatpush2.msra.mxu0 0.0
        %1159 = vmatprep.subr.mxu0 0.0
        %1160 = vmatpush2.msra.mxu0 0.0
        %1161 = vmatprep.subr.mxu0 0.0
        %1162 = vmatpush2.msra.mxu0 0.0
        %1163 = vmatprep.subr.mxu0 0.0
        %1164 = vmatpush2.msra.mxu0 0.0
        %1165 = vmatprep.subr.mxu0 0.0
        %1166 = vmatpush2.msra.mxu0 0.0
        %1167 = vmatprep.subr.mxu0 0.0
        %1168 = vmatpush2.msra.mxu0 0.0
        %1169 = vmatprep.subr.mxu0 0.0
        %1170 = vmatpush2.msra.mxu0 0.0
        %1171 = vmatprep.subr.mxu0 0.0
        %1172 = vmatpush2.msra.mxu0 0.0
        %1173 = vmatprep.subr.mxu0 0.0
        %1174 = vmatpush2.msra.mxu0 0.0
        %1175 = vmatprep.subr.mxu0 0.0
        %1176 = vmatpush2.msra.mxu0 0.0
        %1177 = vmatprep.mubr.f32.mxu0 0.0
        %1178 = vmatmul.mubr.f32.gmra.mxu0 %v557
        %v1179 = vpop.f32.mrf.mxu0
        %v1180 = vadd.f32 0.0, %v1179
        %v1181 = vpop.f32.mrf.mxu0
        %v1182 = vadd.f32 0.0, %v1181
        %1183 = vdwg.mxu0
        %1184 = vmatprep.subr.mxu0 0.0
        %1185 = vmatpush1.msra.mxu0 0.0
        %1186 = vmatprep.subr.mxu0 0.0
        %1187 = vmatpush1.msra.mxu0 0.0
        %1188 = vmatprep.subr.mxu0 0.0
        %1189 = vmatpush1.msra.mxu0 0.0
        %1190 = vmatprep.subr.mxu0 0.0
        %1191 = vmatpush1.msra.mxu0 0.0
        %1192 = vmatprep.subr.mxu0 0.0
        %1193 = vmatpush1.msra.mxu0 0.0
        %1194 = vmatprep.subr.mxu0 0.0
        %1195 = vmatpush1.msra.mxu0 0.0
        %1196 = vmatprep.subr.mxu0 0.0
        %1197 = vmatpush1.msra.mxu0 0.0
        %1198 = vmatprep.subr.mxu0 0.0
        %1199 = vmatpush1.msra.mxu0 0.0
        %1200 = vmatprep.subr.mxu0 0.0
        %1201 = vmatpush1.msra.mxu0 0.0
        %1202 = vmatprep.subr.mxu0 0.0
        %1203 = vmatpush1.msra.mxu0 0.0
        %1204 = vmatprep.subr.mxu0 0.0
        %1205 = vmatpush1.msra.mxu0 0.0
        %1206 = vmatprep.subr.mxu0 0.0
        %1207 = vmatpush1.msra.mxu0 0.0
        %1208 = vmatprep.subr.mxu0 %v385
        %1209 = vmatpush1.msra.mxu0 %v382
        %1210 = vmatprep.subr.mxu0 %v285
        %1211 = vmatpush1.msra.mxu0 %v284
        %1212 = vmatprep.subr.mxu0 %v283
        %1213 = vmatpush1.msra.mxu0 %v282
        %1214 = vmatprep.subr.mxu0 %v281
        %1215 = vmatpush1.msra.mxu0 %v280
        %1216 = vmatprep.subr.mxu0 0.0
        %1217 = vmatpush2.msra.mxu0 0.0
        %1218 = vmatprep.subr.mxu0 0.0
        %1219 = vmatpush2.msra.mxu0 0.0
        %1220 = vmatprep.subr.mxu0 0.0
        %1221 = vmatpush2.msra.mxu0 0.0
        %1222 = vmatprep.subr.mxu0 0.0
        %1223 = vmatpush2.msra.mxu0 0.0
        %1224 = vmatprep.subr.mxu0 0.0
        %1225 = vmatpush2.msra.mxu0 0.0
        %1226 = vmatprep.subr.mxu0 0.0
        %1227 = vmatpush2.msra.mxu0 0.0
        %1228 = vmatprep.subr.mxu0 0.0
        %1229 = vmatpush2.msra.mxu0 0.0
        %1230 = vmatprep.subr.mxu0 0.0
        %1231 = vmatpush2.msra.mxu0 0.0
        %1232 = vmatprep.subr.mxu0 0.0
        %1233 = vmatpush2.msra.mxu0 0.0
        %1234 = vmatprep.subr.mxu0 0.0
        %1235 = vmatpush2.msra.mxu0 0.0
        %1236 = vmatprep.subr.mxu0 0.0
        %1237 = vmatpush2.msra.mxu0 0.0
        %1238 = vmatprep.subr.mxu0 0.0
        %1239 = vmatpush2.msra.mxu0 0.0
        %1240 = vmatprep.subr.mxu0 0.0
        %1241 = vmatpush2.msra.mxu0 0.0
        %1242 = vmatprep.subr.mxu0 0.0
        %1243 = vmatpush2.msra.mxu0 0.0
        %1244 = vmatprep.subr.mxu0 0.0
        %1245 = vmatpush2.msra.mxu0 0.0
        %1246 = vmatprep.subr.mxu0 0.0
        %1247 = vmatpush2.msra.mxu0 0.0
        %1248 = vmatprep.mubr.f32.mxu0 0.0
        %1249 = vmatmul.mubr.f32.gmra.mxu0 %v467
        %v1250 = vpop.f32.mrf.mxu0
        %v1251 = vadd.f32 %v1180, %v1250
        %v1252 = vpop.f32.mrf.mxu0
        %v1253 = vadd.f32 %v1182, %v1252
        %1254 = vdwg.mxu0
        %1255 = vmatprep.subr.mxu0 0.0
        %1256 = vmatpush1.msra.mxu0 0.0
        %1257 = vmatprep.subr.mxu0 0.0
        %1258 = vmatpush1.msra.mxu0 0.0
        %1259 = vmatprep.subr.mxu0 0.0
        %1260 = vmatpush1.msra.mxu0 0.0
        %1261 = vmatprep.subr.mxu0 0.0
        %1262 = vmatpush1.msra.mxu0 0.0
        %1263 = vmatprep.subr.mxu0 0.0
        %1264 = vmatpush1.msra.mxu0 0.0
        %1265 = vmatprep.subr.mxu0 0.0
        %1266 = vmatpush1.msra.mxu0 0.0
        %1267 = vmatprep.subr.mxu0 0.0
        %1268 = vmatpush1.msra.mxu0 0.0
        %1269 = vmatprep.subr.mxu0 0.0
        %1270 = vmatpush1.msra.mxu0 0.0
        %1271 = vmatprep.subr.mxu0 0.0
        %1272 = vmatpush1.msra.mxu0 0.0
        %1273 = vmatprep.subr.mxu0 0.0
        %1274 = vmatpush1.msra.mxu0 0.0
        %1275 = vmatprep.subr.mxu0 0.0
        %1276 = vmatpush1.msra.mxu0 0.0
        %1277 = vmatprep.subr.mxu0 0.0
        %1278 = vmatpush1.msra.mxu0 0.0
        %1279 = vmatprep.subr.mxu0 %v473
        %1280 = vmatpush1.msra.mxu0 %v470
        %1281 = vmatprep.subr.mxu0 %v463
        %1282 = vmatpush1.msra.mxu0 %v462
        %1283 = vmatprep.subr.mxu0 %v461
        %1284 = vmatpush1.msra.mxu0 %v460
        %1285 = vmatprep.subr.mxu0 %v459
        %1286 = vmatpush1.msra.mxu0 %v458
        %1287 = vmatprep.subr.mxu0 0.0
        %1288 = vmatpush2.msra.mxu0 0.0
        %1289 = vmatprep.subr.mxu0 0.0
        %1290 = vmatpush2.msra.mxu0 0.0
        %1291 = vmatprep.subr.mxu0 0.0
        %1292 = vmatpush2.msra.mxu0 0.0
        %1293 = vmatprep.subr.mxu0 0.0
        %1294 = vmatpush2.msra.mxu0 0.0
        %1295 = vmatprep.subr.mxu0 0.0
        %1296 = vmatpush2.msra.mxu0 0.0
        %1297 = vmatprep.subr.mxu0 0.0
        %1298 = vmatpush2.msra.mxu0 0.0
        %1299 = vmatprep.subr.mxu0 0.0
        %1300 = vmatpush2.msra.mxu0 0.0
        %1301 = vmatprep.subr.mxu0 0.0
        %1302 = vmatpush2.msra.mxu0 0.0
        %1303 = vmatprep.subr.mxu0 0.0
        %1304 = vmatpush2.msra.mxu0 0.0
        %1305 = vmatprep.subr.mxu0 0.0
        %1306 = vmatpush2.msra.mxu0 0.0
        %1307 = vmatprep.subr.mxu0 0.0
        %1308 = vmatpush2.msra.mxu0 0.0
        %1309 = vmatprep.subr.mxu0 0.0
        %1310 = vmatpush2.msra.mxu0 0.0
        %1311 = vmatprep.subr.mxu0 0.0
        %1312 = vmatpush2.msra.mxu0 0.0
        %1313 = vmatprep.subr.mxu0 0.0
        %1314 = vmatpush2.msra.mxu0 0.0
        %1315 = vmatprep.subr.mxu0 0.0
        %1316 = vmatpush2.msra.mxu0 0.0
        %1317 = vmatprep.subr.mxu0 0.0
        %1318 = vmatpush2.msra.mxu0 0.0
        %1319 = vmatprep.mubr.f32.mxu0 0.0
        %1320 = vmatmul.mubr.f32.gmra.mxu0 %v647
        %v1321 = vpop.f32.mrf.mxu0
        %v1322 = vadd.f32 0.0, %v1321
        %v1323 = vpop.f32.mrf.mxu0
        %v1324 = vadd.f32 0.0, %v1323
        %1325 = vdwg.mxu0
        %v1326 = vadd.f32 %v1251, %v1322
        %v1327 = vadd.f32 %v1253, %v1324
        %1328 = vmatprep.subr.mxu0 0.0
        %1329 = vmatpush1.msra.mxu0 0.0
        %1330 = vmatprep.subr.mxu0 0.0
        %1331 = vmatpush1.msra.mxu0 0.0
        %1332 = vmatprep.subr.mxu0 0.0
        %1333 = vmatpush1.msra.mxu0 0.0
        %1334 = vmatprep.subr.mxu0 0.0
        %1335 = vmatpush1.msra.mxu0 0.0
        %1336 = vmatprep.subr.mxu0 0.0
        %1337 = vmatpush1.msra.mxu0 0.0
        %1338 = vmatprep.subr.mxu0 0.0
        %1339 = vmatpush1.msra.mxu0 0.0
        %1340 = vmatprep.subr.mxu0 0.0
        %1341 = vmatpush1.msra.mxu0 0.0
        %1342 = vmatprep.subr.mxu0 0.0
        %1343 = vmatpush1.msra.mxu0 0.0
        %1344 = vmatprep.subr.mxu0 0.0
        %1345 = vmatpush1.msra.mxu0 0.0
        %1346 = vmatprep.subr.mxu0 0.0
        %1347 = vmatpush1.msra.mxu0 0.0
        %1348 = vmatprep.subr.mxu0 0.0
        %1349 = vmatpush1.msra.mxu0 0.0
        %1350 = vmatprep.subr.mxu0 0.0
        %1351 = vmatpush1.msra.mxu0 0.0
        %1352 = vmatprep.subr.mxu0 %v563
        %1353 = vmatpush1.msra.mxu0 %v560
        %1354 = vmatprep.subr.mxu0 %v553
        %1355 = vmatpush1.msra.mxu0 %v552
        %1356 = vmatprep.subr.mxu0 %v551
        %1357 = vmatpush1.msra.mxu0 %v550
        %1358 = vmatprep.subr.mxu0 %v549
        %1359 = vmatpush1.msra.mxu0 %v548
        %1360 = vmatprep.subr.mxu0 0.0
        %1361 = vmatpush2.msra.mxu0 0.0
        %1362 = vmatprep.subr.mxu0 0.0
        %1363 = vmatpush2.msra.mxu0 0.0
        %1364 = vmatprep.subr.mxu0 0.0
        %1365 = vmatpush2.msra.mxu0 0.0
        %1366 = vmatprep.subr.mxu0 0.0
        %1367 = vmatpush2.msra.mxu0 0.0
        %1368 = vmatprep.subr.mxu0 0.0
        %1369 = vmatpush2.msra.mxu0 0.0
        %1370 = vmatprep.subr.mxu0 0.0
        %1371 = vmatpush2.msra.mxu0 0.0
        %1372 = vmatprep.subr.mxu0 0.0
        %1373 = vmatpush2.msra.mxu0 0.0
        %1374 = vmatprep.subr.mxu0 0.0
        %1375 = vmatpush2.msra.mxu0 0.0
        %1376 = vmatprep.subr.mxu0 0.0
        %1377 = vmatpush2.msra.mxu0 0.0
        %1378 = vmatprep.subr.mxu0 0.0
        %1379 = vmatpush2.msra.mxu0 0.0
        %1380 = vmatprep.subr.mxu0 0.0
        %1381 = vmatpush2.msra.mxu0 0.0
        %1382 = vmatprep.subr.mxu0 0.0
        %1383 = vmatpush2.msra.mxu0 0.0
        %1384 = vmatprep.subr.mxu0 0.0
        %1385 = vmatpush2.msra.mxu0 0.0
        %1386 = vmatprep.subr.mxu0 0.0
        %1387 = vmatpush2.msra.mxu0 0.0
        %1388 = vmatprep.subr.mxu0 0.0
        %1389 = vmatpush2.msra.mxu0 0.0
        %1390 = vmatprep.subr.mxu0 0.0
        %1391 = vmatpush2.msra.mxu0 0.0
        %1392 = vmatprep.mubr.f32.mxu0 0.0
        %1393 = vmatmul.mubr.f32.gmra.mxu0 %v1017
        %v1394 = vpop.f32.mrf.mxu0
        %v1395 = vadd.f32 0.0, %v1394
        %v1396 = vpop.f32.mrf.mxu0
        %v1397 = vadd.f32 0.0, %v1396
        %1398 = vdwg.mxu0
        %v1399 = vadd.f32 %v1326, %v1395
        %v1400 = vadd.f32 %v1327, %v1397
        %v1401 = vrot.slane %v278, 1
        %v1402 = vsel %vm296, %v1401, 0
        %1404 = vmatprep.subr.mxu0 0.0
        %1405 = vmatpush1.msra.mxu0 0.0
        %1406 = vmatprep.subr.mxu0 0.0
        %1407 = vmatpush1.msra.mxu0 0.0
        %1408 = vmatprep.subr.mxu0 0.0
        %1409 = vmatpush1.msra.mxu0 0.0
        %1410 = vmatprep.subr.mxu0 0.0
        %1411 = vmatpush1.msra.mxu0 0.0
        %1412 = vmatprep.subr.mxu0 0.0
        %1413 = vmatpush1.msra.mxu0 0.0
        %1414 = vmatprep.subr.mxu0 0.0
        %1415 = vmatpush1.msra.mxu0 0.0
        %1416 = vmatprep.subr.mxu0 0.0
        %1417 = vmatpush1.msra.mxu0 0.0
        %1418 = vmatprep.subr.mxu0 0.0
        %1419 = vmatpush1.msra.mxu0 0.0
        %1420 = vmatprep.subr.mxu0 0.0
        %1421 = vmatpush1.msra.mxu0 0.0
        %1422 = vmatprep.subr.mxu0 0.0
        %1423 = vmatpush1.msra.mxu0 0.0
        %1424 = vmatprep.subr.mxu0 0.0
        %1425 = vmatpush1.msra.mxu0 0.0
        %1426 = vmatprep.subr.mxu0 0.0
        %1427 = vmatpush1.msra.mxu0 0.0
        %1428 = vmatprep.subr.mxu0 %v653
        %1429 = vmatpush1.msra.mxu0 %v650
        %1430 = vmatprep.subr.mxu0 %v643
        %1431 = vmatpush1.msra.mxu0 %v642
        %1432 = vmatprep.subr.mxu0 %v641
        %1433 = vmatpush1.msra.mxu0 %v640
        %1434 = vmatprep.subr.mxu0 %v639
        %1435 = vmatpush1.msra.mxu0 %v638
        %1436 = vmatprep.subr.mxu0 0.0
        %1437 = vmatpush2.msra.mxu0 0.0
        %1438 = vmatprep.subr.mxu0 0.0
        %1439 = vmatpush2.msra.mxu0 0.0
        %1440 = vmatprep.subr.mxu0 0.0
        %1441 = vmatpush2.msra.mxu0 0.0
        %1442 = vmatprep.subr.mxu0 0.0
        %1443 = vmatpush2.msra.mxu0 0.0
        %1444 = vmatprep.subr.mxu0 0.0
        %1445 = vmatpush2.msra.mxu0 0.0
        %1446 = vmatprep.subr.mxu0 0.0
        %1447 = vmatpush2.msra.mxu0 0.0
        %1448 = vmatprep.subr.mxu0 0.0
        %1449 = vmatpush2.msra.mxu0 0.0
        %1450 = vmatprep.subr.mxu0 0.0
        %1451 = vmatpush2.msra.mxu0 0.0
        %1452 = vmatprep.subr.mxu0 0.0
        %1453 = vmatpush2.msra.mxu0 0.0
        %1454 = vmatprep.subr.mxu0 0.0
        %1455 = vmatpush2.msra.mxu0 0.0
        %1456 = vmatprep.subr.mxu0 0.0
        %1457 = vmatpush2.msra.mxu0 0.0
        %1458 = vmatprep.subr.mxu0 0.0
        %1459 = vmatpush2.msra.mxu0 0.0
        %1460 = vmatprep.subr.mxu0 0.0
        %1461 = vmatpush2.msra.mxu0 0.0
        %1462 = vmatprep.subr.mxu0 0.0
        %1463 = vmatpush2.msra.mxu0 0.0
        %1464 = vmatprep.subr.mxu0 0.0
        %1465 = vmatpush2.msra.mxu0 0.0
        %1466 = vmatprep.subr.mxu0 0.0
        %1467 = vmatpush2.msra.mxu0 0.0
        %1468 = vmatprep.mubr.f32.mxu0 0.0
        %1469 = vmatmul.mubr.f32.gmra.mxu0 %v1402
        %v1470 = vpop.f32.mrf.mxu0
        %v1471 = vadd.f32 0.0, %v1470
        %v1472 = vpop.f32.mrf.mxu0
        %v1473 = vadd.f32 0.0, %v1472
        %1474 = vdwg.mxu0
        %v1475 = vadd.f32 %v1399, %v1471
        %v1476 = vadd.f32 %v1400, %v1473
        %1477 = vmatprep.subr.mxu0 0.0
        %1478 = vmatpush1.msra.mxu0 0.0
        %1479 = vmatprep.subr.mxu0 0.0
        %1480 = vmatpush1.msra.mxu0 0.0
        %1481 = vmatprep.subr.mxu0 0.0
        %1482 = vmatpush1.msra.mxu0 0.0
        %1483 = vmatprep.subr.mxu0 0.0
        %1484 = vmatpush1.msra.mxu0 0.0
        %1485 = vmatprep.subr.mxu0 0.0
        %1486 = vmatpush1.msra.mxu0 0.0
        %1487 = vmatprep.subr.mxu0 0.0
        %1488 = vmatpush1.msra.mxu0 0.0
        %1489 = vmatprep.subr.mxu0 0.0
        %1490 = vmatpush1.msra.mxu0 0.0
        %1491 = vmatprep.subr.mxu0 0.0
        %1492 = vmatpush1.msra.mxu0 0.0
        %1493 = vmatprep.subr.mxu0 0.0
        %1494 = vmatpush1.msra.mxu0 0.0
        %1495 = vmatprep.subr.mxu0 0.0
        %1496 = vmatpush1.msra.mxu0 0.0
        %1497 = vmatprep.subr.mxu0 0.0
        %1498 = vmatpush1.msra.mxu0 0.0
        %1499 = vmatprep.subr.mxu0 0.0
        %1500 = vmatpush1.msra.mxu0 0.0
        %1501 = vmatprep.subr.mxu0 %v305
        %1502 = vmatpush1.msra.mxu0 %v302
        %1503 = vmatprep.subr.mxu0 %v293
        %1504 = vmatpush1.msra.mxu0 %v292
        %1505 = vmatprep.subr.mxu0 %v291
        %1506 = vmatpush1.msra.mxu0 %v290
        %1507 = vmatprep.subr.mxu0 %v289
        %1508 = vmatpush1.msra.mxu0 %v288
        %1509 = vmatprep.subr.mxu0 0.0
        %1510 = vmatpush2.msra.mxu0 0.0
        %1511 = vmatprep.subr.mxu0 0.0
        %1512 = vmatpush2.msra.mxu0 0.0
        %1513 = vmatprep.subr.mxu0 0.0
        %1514 = vmatpush2.msra.mxu0 0.0
        %1515 = vmatprep.subr.mxu0 0.0
        %1516 = vmatpush2.msra.mxu0 0.0
        %1517 = vmatprep.subr.mxu0 0.0
        %1518 = vmatpush2.msra.mxu0 0.0
        %1519 = vmatprep.subr.mxu0 0.0
        %1520 = vmatpush2.msra.mxu0 0.0
        %1521 = vmatprep.subr.mxu0 0.0
        %1522 = vmatpush2.msra.mxu0 0.0
        %1523 = vmatprep.subr.mxu0 0.0
        %1524 = vmatpush2.msra.mxu0 0.0
        %1525 = vmatprep.subr.mxu0 0.0
        %1526 = vmatpush2.msra.mxu0 0.0
        %1527 = vmatprep.subr.mxu0 0.0
        %1528 = vmatpush2.msra.mxu0 0.0
        %1529 = vmatprep.subr.mxu0 0.0
        %1530 = vmatpush2.msra.mxu0 0.0
        %1531 = vmatprep.subr.mxu0 0.0
        %1532 = vmatpush2.msra.mxu0 0.0
        %1533 = vmatprep.subr.mxu0 0.0
        %1534 = vmatpush2.msra.mxu0 0.0
        %1535 = vmatprep.subr.mxu0 0.0
        %1536 = vmatpush2.msra.mxu0 0.0
        %1537 = vmatprep.subr.mxu0 0.0
        %1538 = vmatpush2.msra.mxu0 0.0
        %1539 = vmatprep.subr.mxu0 0.0
        %1540 = vmatpush2.msra.mxu0 0.0
        %1541 = vmatprep.mubr.f32.mxu0 0.0
        %1542 = vmatmul.mubr.f32.gmra.mxu0 %v647
        %v1543 = vpop.f32.mrf.mxu0
        %v1544 = vadd.f32 0.0, %v1543
        %v1545 = vpop.f32.mrf.mxu0
        %v1546 = vadd.f32 0.0, %v1545
        %1547 = vdwg.mxu0
        %1548 = vmatprep.subr.mxu0 0.0
        %1549 = vmatpush1.msra.mxu0 0.0
        %1550 = vmatprep.subr.mxu0 0.0
        %1551 = vmatpush1.msra.mxu0 0.0
        %1552 = vmatprep.subr.mxu0 0.0
        %1553 = vmatpush1.msra.mxu0 0.0
        %1554 = vmatprep.subr.mxu0 0.0
        %1555 = vmatpush1.msra.mxu0 0.0
        %1556 = vmatprep.subr.mxu0 0.0
        %1557 = vmatpush1.msra.mxu0 0.0
        %1558 = vmatprep.subr.mxu0 0.0
        %1559 = vmatpush1.msra.mxu0 0.0
        %1560 = vmatprep.subr.mxu0 0.0
        %1561 = vmatpush1.msra.mxu0 0.0
        %1562 = vmatprep.subr.mxu0 0.0
        %1563 = vmatpush1.msra.mxu0 0.0
        %1564 = vmatprep.subr.mxu0 0.0
        %1565 = vmatpush1.msra.mxu0 0.0
        %1566 = vmatprep.subr.mxu0 0.0
        %1567 = vmatpush1.msra.mxu0 0.0
        %1568 = vmatprep.subr.mxu0 0.0
        %1569 = vmatpush1.msra.mxu0 0.0
        %1570 = vmatprep.subr.mxu0 0.0
        %1571 = vmatpush1.msra.mxu0 0.0
        %1572 = vmatprep.subr.mxu0 %v385
        %1573 = vmatpush1.msra.mxu0 %v382
        %1574 = vmatprep.subr.mxu0 %v285
        %1575 = vmatpush1.msra.mxu0 %v284
        %1576 = vmatprep.subr.mxu0 %v283
        %1577 = vmatpush1.msra.mxu0 %v282
        %1578 = vmatprep.subr.mxu0 %v281
        %1579 = vmatpush1.msra.mxu0 %v280
        %1580 = vmatprep.subr.mxu0 0.0
        %1581 = vmatpush2.msra.mxu0 0.0
        %1582 = vmatprep.subr.mxu0 0.0
        %1583 = vmatpush2.msra.mxu0 0.0
        %1584 = vmatprep.subr.mxu0 0.0
        %1585 = vmatpush2.msra.mxu0 0.0
        %1586 = vmatprep.subr.mxu0 0.0
        %1587 = vmatpush2.msra.mxu0 0.0
        %1588 = vmatprep.subr.mxu0 0.0
        %1589 = vmatpush2.msra.mxu0 0.0
        %1590 = vmatprep.subr.mxu0 0.0
        %1591 = vmatpush2.msra.mxu0 0.0
        %1592 = vmatprep.subr.mxu0 0.0
        %1593 = vmatpush2.msra.mxu0 0.0
        %1594 = vmatprep.subr.mxu0 0.0
        %1595 = vmatpush2.msra.mxu0 0.0
        %1596 = vmatprep.subr.mxu0 0.0
        %1597 = vmatpush2.msra.mxu0 0.0
        %1598 = vmatprep.subr.mxu0 0.0
        %1599 = vmatpush2.msra.mxu0 0.0
        %1600 = vmatprep.subr.mxu0 0.0
        %1601 = vmatpush2.msra.mxu0 0.0
        %1602 = vmatprep.subr.mxu0 0.0
        %1603 = vmatpush2.msra.mxu0 0.0
        %1604 = vmatprep.subr.mxu0 0.0
        %1605 = vmatpush2.msra.mxu0 0.0
        %1606 = vmatprep.subr.mxu0 0.0
        %1607 = vmatpush2.msra.mxu0 0.0
        %1608 = vmatprep.subr.mxu0 0.0
        %1609 = vmatpush2.msra.mxu0 0.0
        %1610 = vmatprep.subr.mxu0 0.0
        %1611 = vmatpush2.msra.mxu0 0.0
        %1612 = vmatprep.mubr.f32.mxu0 0.0
        %1613 = vmatmul.mubr.f32.gmra.mxu0 %v557
        %v1614 = vpop.f32.mrf.mxu0
        %v1615 = vadd.f32 %v1544, %v1614
        %v1616 = vpop.f32.mrf.mxu0
        %v1617 = vadd.f32 %v1546, %v1616
        %1618 = vdwg.mxu0
        %1619 = vmatprep.subr.mxu0 0.0
        %1620 = vmatpush1.msra.mxu0 0.0
        %1621 = vmatprep.subr.mxu0 0.0
        %1622 = vmatpush1.msra.mxu0 0.0
        %1623 = vmatprep.subr.mxu0 0.0
        %1624 = vmatpush1.msra.mxu0 0.0
        %1625 = vmatprep.subr.mxu0 0.0
        %1626 = vmatpush1.msra.mxu0 0.0
        %1627 = vmatprep.subr.mxu0 0.0
        %1628 = vmatpush1.msra.mxu0 0.0
        %1629 = vmatprep.subr.mxu0 0.0
        %1630 = vmatpush1.msra.mxu0 0.0
        %1631 = vmatprep.subr.mxu0 0.0
        %1632 = vmatpush1.msra.mxu0 0.0
        %1633 = vmatprep.subr.mxu0 0.0
        %1634 = vmatpush1.msra.mxu0 0.0
        %1635 = vmatprep.subr.mxu0 0.0
        %1636 = vmatpush1.msra.mxu0 0.0
        %1637 = vmatprep.subr.mxu0 0.0
        %1638 = vmatpush1.msra.mxu0 0.0
        %1639 = vmatprep.subr.mxu0 0.0
        %1640 = vmatpush1.msra.mxu0 0.0
        %1641 = vmatprep.subr.mxu0 0.0
        %1642 = vmatpush1.msra.mxu0 0.0
        %1643 = vmatprep.subr.mxu0 %v473
        %1644 = vmatpush1.msra.mxu0 %v470
        %1645 = vmatprep.subr.mxu0 %v463
        %1646 = vmatpush1.msra.mxu0 %v462
        %1647 = vmatprep.subr.mxu0 %v461
        %1648 = vmatpush1.msra.mxu0 %v460
        %1649 = vmatprep.subr.mxu0 %v459
        %1650 = vmatpush1.msra.mxu0 %v458
        %1651 = vmatprep.subr.mxu0 0.0
        %1652 = vmatpush2.msra.mxu0 0.0
        %1653 = vmatprep.subr.mxu0 0.0
        %1654 = vmatpush2.msra.mxu0 0.0
        %1655 = vmatprep.subr.mxu0 0.0
        %1656 = vmatpush2.msra.mxu0 0.0
        %1657 = vmatprep.subr.mxu0 0.0
        %1658 = vmatpush2.msra.mxu0 0.0
        %1659 = vmatprep.subr.mxu0 0.0
        %1660 = vmatpush2.msra.mxu0 0.0
        %1661 = vmatprep.subr.mxu0 0.0
        %1662 = vmatpush2.msra.mxu0 0.0
        %1663 = vmatprep.subr.mxu0 0.0
        %1664 = vmatpush2.msra.mxu0 0.0
        %1665 = vmatprep.subr.mxu0 0.0
        %1666 = vmatpush2.msra.mxu0 0.0
        %1667 = vmatprep.subr.mxu0 0.0
        %1668 = vmatpush2.msra.mxu0 0.0
        %1669 = vmatprep.subr.mxu0 0.0
        %1670 = vmatpush2.msra.mxu0 0.0
        %1671 = vmatprep.subr.mxu0 0.0
        %1672 = vmatpush2.msra.mxu0 0.0
        %1673 = vmatprep.subr.mxu0 0.0
        %1674 = vmatpush2.msra.mxu0 0.0
        %1675 = vmatprep.subr.mxu0 0.0
        %1676 = vmatpush2.msra.mxu0 0.0
        %1677 = vmatprep.subr.mxu0 0.0
        %1678 = vmatpush2.msra.mxu0 0.0
        %1679 = vmatprep.subr.mxu0 0.0
        %1680 = vmatpush2.msra.mxu0 0.0
        %1681 = vmatprep.subr.mxu0 0.0
        %1682 = vmatpush2.msra.mxu0 0.0
        %1683 = vmatprep.mubr.f32.mxu0 0.0
        %1684 = vmatmul.mubr.f32.gmra.mxu0 %v1017
        %v1685 = vpop.f32.mrf.mxu0
        %v1686 = vadd.f32 0.0, %v1685
        %v1687 = vpop.f32.mrf.mxu0
        %v1688 = vadd.f32 0.0, %v1687
        %1689 = vdwg.mxu0
        %v1690 = vadd.f32 %v1615, %v1686
        %v1691 = vadd.f32 %v1617, %v1688
        %1692 = vmatprep.subr.mxu0 0.0
        %1693 = vmatpush1.msra.mxu0 0.0
        %1694 = vmatprep.subr.mxu0 0.0
        %1695 = vmatpush1.msra.mxu0 0.0
        %1696 = vmatprep.subr.mxu0 0.0
        %1697 = vmatpush1.msra.mxu0 0.0
        %1698 = vmatprep.subr.mxu0 0.0
        %1699 = vmatpush1.msra.mxu0 0.0
        %1700 = vmatprep.subr.mxu0 0.0
        %1701 = vmatpush1.msra.mxu0 0.0
        %1702 = vmatprep.subr.mxu0 0.0
        %1703 = vmatpush1.msra.mxu0 0.0
        %1704 = vmatprep.subr.mxu0 0.0
        %1705 = vmatpush1.msra.mxu0 0.0
        %1706 = vmatprep.subr.mxu0 0.0
        %1707 = vmatpush1.msra.mxu0 0.0
        %1708 = vmatprep.subr.mxu0 0.0
        %1709 = vmatpush1.msra.mxu0 0.0
        %1710 = vmatprep.subr.mxu0 0.0
        %1711 = vmatpush1.msra.mxu0 0.0
        %1712 = vmatprep.subr.mxu0 0.0
        %1713 = vmatpush1.msra.mxu0 0.0
        %1714 = vmatprep.subr.mxu0 0.0
        %1715 = vmatpush1.msra.mxu0 0.0
        %1716 = vmatprep.subr.mxu0 %v563
        %1717 = vmatpush1.msra.mxu0 %v560
        %1718 = vmatprep.subr.mxu0 %v553
        %1719 = vmatpush1.msra.mxu0 %v552
        %1720 = vmatprep.subr.mxu0 %v551
        %1721 = vmatpush1.msra.mxu0 %v550
        %1722 = vmatprep.subr.mxu0 %v549
        %1723 = vmatpush1.msra.mxu0 %v548
        %1724 = vmatprep.subr.mxu0 0.0
        %1725 = vmatpush2.msra.mxu0 0.0
        %1726 = vmatprep.subr.mxu0 0.0
        %1727 = vmatpush2.msra.mxu0 0.0
        %1728 = vmatprep.subr.mxu0 0.0
        %1729 = vmatpush2.msra.mxu0 0.0
        %1730 = vmatprep.subr.mxu0 0.0
        %1731 = vmatpush2.msra.mxu0 0.0
        %1732 = vmatprep.subr.mxu0 0.0
        %1733 = vmatpush2.msra.mxu0 0.0
        %1734 = vmatprep.subr.mxu0 0.0
        %1735 = vmatpush2.msra.mxu0 0.0
        %1736 = vmatprep.subr.mxu0 0.0
        %1737 = vmatpush2.msra.mxu0 0.0
        %1738 = vmatprep.subr.mxu0 0.0
        %1739 = vmatpush2.msra.mxu0 0.0
        %1740 = vmatprep.subr.mxu0 0.0
        %1741 = vmatpush2.msra.mxu0 0.0
        %1742 = vmatprep.subr.mxu0 0.0
        %1743 = vmatpush2.msra.mxu0 0.0
        %1744 = vmatprep.subr.mxu0 0.0
        %1745 = vmatpush2.msra.mxu0 0.0
        %1746 = vmatprep.subr.mxu0 0.0
        %1747 = vmatpush2.msra.mxu0 0.0
        %1748 = vmatprep.subr.mxu0 0.0
        %1749 = vmatpush2.msra.mxu0 0.0
        %1750 = vmatprep.subr.mxu0 0.0
        %1751 = vmatpush2.msra.mxu0 0.0
        %1752 = vmatprep.subr.mxu0 0.0
        %1753 = vmatpush2.msra.mxu0 0.0
        %1754 = vmatprep.subr.mxu0 0.0
        %1755 = vmatpush2.msra.mxu0 0.0
        %1756 = vmatprep.mubr.f32.mxu0 0.0
        %1757 = vmatmul.mubr.f32.gmra.mxu0 %v1402
        %v1758 = vpop.f32.mrf.mxu0
        %v1759 = vadd.f32 0.0, %v1758
        %v1760 = vpop.f32.mrf.mxu0
        %v1761 = vadd.f32 0.0, %v1760
        %1762 = vdwg.mxu0
        %v1763 = vadd.f32 %v1690, %v1759
        %v1764 = vadd.f32 %v1691, %v1761
        %v1765 = vrot.slane %v279, 1
        %v1766 = vsel %vm296, %v1765, 0
        %1768 = vmatprep.subr.mxu0 0.0
        %1769 = vmatpush1.msra.mxu0 0.0
        %1770 = vmatprep.subr.mxu0 0.0
        %1771 = vmatpush1.msra.mxu0 0.0
        %1772 = vmatprep.subr.mxu0 0.0
        %1773 = vmatpush1.msra.mxu0 0.0
        %1774 = vmatprep.subr.mxu0 0.0
        %1775 = vmatpush1.msra.mxu0 0.0
        %1776 = vmatprep.subr.mxu0 0.0
        %1777 = vmatpush1.msra.mxu0 0.0
        %1778 = vmatprep.subr.mxu0 0.0
        %1779 = vmatpush1.msra.mxu0 0.0
        %1780 = vmatprep.subr.mxu0 0.0
        %1781 = vmatpush1.msra.mxu0 0.0
        %1782 = vmatprep.subr.mxu0 0.0
        %1783 = vmatpush1.msra.mxu0 0.0
        %1784 = vmatprep.subr.mxu0 0.0
        %1785 = vmatpush1.msra.mxu0 0.0
        %1786 = vmatprep.subr.mxu0 0.0
        %1787 = vmatpush1.msra.mxu0 0.0
        %1788 = vmatprep.subr.mxu0 0.0
        %1789 = vmatpush1.msra.mxu0 0.0
        %1790 = vmatprep.subr.mxu0 0.0
        %1791 = vmatpush1.msra.mxu0 0.0
        %1792 = vmatprep.subr.mxu0 %v653
        %1793 = vmatpush1.msra.mxu0 %v650
        %1794 = vmatprep.subr.mxu0 %v643
        %1795 = vmatpush1.msra.mxu0 %v642
        %1796 = vmatprep.subr.mxu0 %v641
        %1797 = vmatpush1.msra.mxu0 %v640
        %1798 = vmatprep.subr.mxu0 %v639
        %1799 = vmatpush1.msra.mxu0 %v638
        %1800 = vmatprep.subr.mxu0 0.0
        %1801 = vmatpush2.msra.mxu0 0.0
        %1802 = vmatprep.subr.mxu0 0.0
        %1803 = vmatpush2.msra.mxu0 0.0
        %1804 = vmatprep.subr.mxu0 0.0
        %1805 = vmatpush2.msra.mxu0 0.0
        %1806 = vmatprep.subr.mxu0 0.0
        %1807 = vmatpush2.msra.mxu0 0.0
        %1808 = vmatprep.subr.mxu0 0.0
        %1809 = vmatpush2.msra.mxu0 0.0
        %1810 = vmatprep.subr.mxu0 0.0
        %1811 = vmatpush2.msra.mxu0 0.0
        %1812 = vmatprep.subr.mxu0 0.0
        %1813 = vmatpush2.msra.mxu0 0.0
        %1814 = vmatprep.subr.mxu0 0.0
        %1815 = vmatpush2.msra.mxu0 0.0
        %1816 = vmatprep.subr.mxu0 0.0
        %1817 = vmatpush2.msra.mxu0 0.0
        %1818 = vmatprep.subr.mxu0 0.0
        %1819 = vmatpush2.msra.mxu0 0.0
        %1820 = vmatprep.subr.mxu0 0.0
        %1821 = vmatpush2.msra.mxu0 0.0
        %1822 = vmatprep.subr.mxu0 0.0
        %1823 = vmatpush2.msra.mxu0 0.0
        %1824 = vmatprep.subr.mxu0 0.0
        %1825 = vmatpush2.msra.mxu0 0.0
        %1826 = vmatprep.subr.mxu0 0.0
        %1827 = vmatpush2.msra.mxu0 0.0
        %1828 = vmatprep.subr.mxu0 0.0
        %1829 = vmatpush2.msra.mxu0 0.0
        %1830 = vmatprep.subr.mxu0 0.0
        %1831 = vmatpush2.msra.mxu0 0.0
        %1832 = vmatprep.mubr.f32.mxu0 0.0
        %1833 = vmatmul.mubr.f32.gmra.mxu0 %v1766
        %v1834 = vpop.f32.mrf.mxu0
        %v1835 = vadd.f32 0.0, %v1834
        %v1836 = vpop.f32.mrf.mxu0
        %v1837 = vadd.f32 0.0, %v1836
        %1838 = vdwg.mxu0
        %v1839 = vadd.f32 %v1763, %v1835
        %v1840 = vadd.f32 %v1764, %v1837
        %v1841 = vmax.f32 %v1475, %v1839
        %v1842 = vmax.f32 %v1476, %v1840
        %1845 = vrot.lane.b32.xlu0 %v1841, 8
        %v1846 = vpop.permute.xlu0 %1845
        %1847 = vrot.lane.b32.xlu0 %v1842, 8
        %v1848 = vpop.permute.xlu0 %1847
        %v1849 = vsel %vm1100, %v1846, %v1848
        %v1851 = vmax.f32 %v1841, %v1849
        %v1852 = vadd.f32 %v1851, %v1109
        %v1853 = vmax.f32 %v1852, 0.0
        %v1854 = vld [vmem:[%s3] sm:$0xff]
        %v1855 = vld [vmem:[%s3 + $0x8] sm:$0xff]
        %v1856 = vld [vmem:[%s3 + $0x10] sm:$0xff]
        %v1857 = vld [vmem:[%s3 + $0x18] sm:$0xff]
        %v1858 = vld [vmem:[%s3 + $0x20] sm:$0xff]
        %v1859 = vld [vmem:[%s3 + $0x28] sm:$0xff]
        %v1860 = vld [vmem:[%s3 + $0x30] sm:$0xff]
        %v1861 = vld [vmem:[%s3 + $0x38] sm:$0xff]
        %v1862 = vld [vmem:[%s3 + $0x40] sm:$0xff]
        %v1863 = vld [vmem:[%s3 + $0x48] sm:$0xff]
        %v1864 = vld [vmem:[%s3 + $0x50] sm:$0xff]
        %v1865 = vld [vmem:[%s3 + $0x58] sm:$0xff]
        %v1866 = vld [vmem:[%s3 + $0x60] sm:$0xff]
        %v1867 = vld [vmem:[%s3 + $0x68] sm:$0xff]
        %v1868 = vld [vmem:[%s3 + $0x70] sm:$0xff]
        %v1869 = vld [vmem:[%s3 + $0x78] sm:$0xff]
        %v1870 = vld [vmem:[%s3 + $0x80] sm:$0xff]
        %v1871 = vld [vmem:[%s3 + $0x88] sm:$0xff]
        %v1872 = vld [vmem:[%s3 + $0x90] sm:$0xff]
        %v1873 = vld [vmem:[%s3 + $0x98] sm:$0xff]
        %v1874 = vld [vmem:[%s3 + $0xa0] sm:$0xff]
        %v1875 = vld [vmem:[%s3 + $0xa8] sm:$0xff]
        %v1876 = vld [vmem:[%s3 + $0xb0] sm:$0xff]
        %v1877 = vld [vmem:[%s3 + $0xb8] sm:$0xff]
        %v1878 = vld [vmem:[%s3 + $0xc0] sm:$0xff]
        %v1879 = vld [vmem:[%s3 + $0xc8] sm:$0xff]
        %v1880 = vld [vmem:[%s3 + $0xd0] sm:$0xff]
        %v1881 = vld [vmem:[%s3 + $0xd8] sm:$0xff]
        %v1882 = vld [vmem:[%s3 + $0xe0] sm:$0xff]
        %v1883 = vld [vmem:[%s3 + $0xe8] sm:$0xff]
        %v1884 = vld [vmem:[%s3 + $0xf0] sm:$0xff]
        %v1885 = vld [vmem:[%s3 + $0xf8] sm:$0xff]
        %v1886 = vld [vmem:[%s3 + $0x100] sm:$0xff]
        %v1887 = vld [vmem:[%s3 + $0x108] sm:$0xff]
        %v1888 = vld [vmem:[%s3 + $0x110] sm:$0xff]
        %v1889 = vld [vmem:[%s3 + $0x118] sm:$0xff]
        %v1890 = vld [vmem:[%s3 + $0x120] sm:$0xff]
        %v1891 = vld [vmem:[%s3 + $0x128] sm:$0xff]
        %v1892 = vld [vmem:[%s3 + $0x130] sm:$0xff]
        %v1893 = vld [vmem:[%s3 + $0x138] sm:$0xff]
        %v1894 = vld [vmem:[%s3 + $0x140] sm:$0xff]
        %v1895 = vld [vmem:[%s3 + $0x148] sm:$0xff]
        %v1896 = vld [vmem:[%s3 + $0x150] sm:$0xff]
        %v1897 = vld [vmem:[%s3 + $0x158] sm:$0xff]
        %v1898 = vld [vmem:[%s3 + $0x160] sm:$0xff]
        %v1899 = vld [vmem:[%s3 + $0x168] sm:$0xff]
        %v1900 = vld [vmem:[%s3 + $0x170] sm:$0xff]
        %v1901 = vld [vmem:[%s3 + $0x178] sm:$0xff]
        %v1902 = vld [vmem:[%s3 + $0x180] sm:$0xff]
        %v1903 = vld [vmem:[%s3 + $0x188] sm:$0xff]
        %v1904 = vld [vmem:[%s3 + $0x190] sm:$0xff]
        %v1905 = vld [vmem:[%s3 + $0x198] sm:$0xff]
        %v1906 = vld [vmem:[%s3 + $0x1a0] sm:$0xff]
        %v1907 = vld [vmem:[%s3 + $0x1a8] sm:$0xff]
        %v1908 = vld [vmem:[%s3 + $0x1b0] sm:$0xff]
        %v1909 = vld [vmem:[%s3 + $0x1b8] sm:$0xff]
        %v1910 = vld [vmem:[%s3 + $0x1c0] sm:$0xff]
        %v1911 = vld [vmem:[%s3 + $0x1c8] sm:$0xff]
        %v1912 = vld [vmem:[%s3 + $0x1d0] sm:$0xff]
        %v1913 = vld [vmem:[%s3 + $0x1d8] sm:$0xff]
        %vm1914 = vcmask 982016
        %v1916 = vsel %vm1914, %v1853, 0
        %1918 = vmatprep.subr.mxu0 0.0
        %1919 = vmatpush1.msra.mxu0 0.0
        %1920 = vmatprep.subr.mxu0 %v1913
        %1921 = vmatpush1.msra.mxu0 %v1912
        %1922 = vmatprep.subr.mxu0 %v1911
        %1923 = vmatpush1.msra.mxu0 %v1910
        %1924 = vmatprep.subr.mxu0 %v1909
        %1925 = vmatpush1.msra.mxu0 %v1908
        %1926 = vmatprep.subr.mxu0 %v1907
        %1927 = vmatpush1.msra.mxu0 %v1906
        %1928 = vmatprep.subr.mxu0 %v1905
        %1929 = vmatpush1.msra.mxu0 %v1904
        %1930 = vmatprep.subr.mxu0 %v1903
        %1931 = vmatpush1.msra.mxu0 %v1902
        %1932 = vmatprep.subr.mxu0 %v1901
        %1933 = vmatpush1.msra.mxu0 %v1900
        %1934 = vmatprep.subr.mxu0 %v1899
        %1935 = vmatpush1.msra.mxu0 %v1898
        %1936 = vmatprep.subr.mxu0 %v1897
        %1937 = vmatpush1.msra.mxu0 %v1896
        %1938 = vmatprep.subr.mxu0 %v1895
        %1939 = vmatpush1.msra.mxu0 %v1894
        %1940 = vmatprep.subr.mxu0 %v1893
        %1941 = vmatpush1.msra.mxu0 %v1892
        %1942 = vmatprep.subr.mxu0 %v1891
        %1943 = vmatpush1.msra.mxu0 %v1890
        %1944 = vmatprep.subr.mxu0 %v1889
        %1945 = vmatpush1.msra.mxu0 %v1888
        %1946 = vmatprep.subr.mxu0 %v1887
        %1947 = vmatpush1.msra.mxu0 %v1886
        %1948 = vmatprep.subr.mxu0 %v1885
        %1949 = vmatpush1.msra.mxu0 %v1884
        %1950 = vmatprep.subr.mxu0 0.0
        %1951 = vmatpush2.msra.mxu0 0.0
        %1952 = vmatprep.subr.mxu0 0.0
        %1953 = vmatpush2.msra.mxu0 0.0
        %1954 = vmatprep.subr.mxu0 0.0
        %1955 = vmatpush2.msra.mxu0 0.0
        %1956 = vmatprep.subr.mxu0 0.0
        %1957 = vmatpush2.msra.mxu0 0.0
        %1958 = vmatprep.subr.mxu0 0.0
        %1959 = vmatpush2.msra.mxu0 0.0
        %1960 = vmatprep.subr.mxu0 0.0
        %1961 = vmatpush2.msra.mxu0 0.0
        %1962 = vmatprep.subr.mxu0 0.0
        %1963 = vmatpush2.msra.mxu0 0.0
        %1964 = vmatprep.subr.mxu0 0.0
        %1965 = vmatpush2.msra.mxu0 0.0
        %1966 = vmatprep.subr.mxu0 0.0
        %1967 = vmatpush2.msra.mxu0 0.0
        %1968 = vmatprep.subr.mxu0 0.0
        %1969 = vmatpush2.msra.mxu0 0.0
        %1970 = vmatprep.subr.mxu0 0.0
        %1971 = vmatpush2.msra.mxu0 0.0
        %1972 = vmatprep.subr.mxu0 0.0
        %1973 = vmatpush2.msra.mxu0 0.0
        %1974 = vmatprep.subr.mxu0 0.0
        %1975 = vmatpush2.msra.mxu0 0.0
        %1976 = vmatprep.subr.mxu0 0.0
        %1977 = vmatpush2.msra.mxu0 0.0
        %1978 = vmatprep.subr.mxu0 0.0
        %1979 = vmatpush2.msra.mxu0 0.0
        %1980 = vmatprep.subr.mxu0 0.0
        %1981 = vmatpush2.msra.mxu0 0.0
        %1982 = vmatprep.mubr.f32.mxu0 0.0
        %1983 = vmatmul.mubr.f32.gmra.mxu0 %v1916
        %v1984 = vpop.f32.mrf.mxu0
        %v1985 = vadd.f32 0.0, %v1984
        %v1986 = vpop.f32.mrf.mxu0
        %v1987 = vadd.f32 0.0, %v1986
        %1988 = vdwg.mxu0
        %v1990 = vsel %vm1914, %v1112, 0
        %1992 = vmatprep.subr.mxu0 0.0
        %1993 = vmatpush1.msra.mxu0 0.0
        %1994 = vmatprep.subr.mxu0 %v1883
        %1995 = vmatpush1.msra.mxu0 %v1882
        %1996 = vmatprep.subr.mxu0 %v1881
        %1997 = vmatpush1.msra.mxu0 %v1880
        %1998 = vmatprep.subr.mxu0 %v1879
        %1999 = vmatpush1.msra.mxu0 %v1878
        %2000 = vmatprep.subr.mxu0 %v1877
        %2001 = vmatpush1.msra.mxu0 %v1876
        %2002 = vmatprep.subr.mxu0 %v1875
        %2003 = vmatpush1.msra.mxu0 %v1874
        %2004 = vmatprep.subr.mxu0 %v1873
        %2005 = vmatpush1.msra.mxu0 %v1872
        %2006 = vmatprep.subr.mxu0 %v1871
        %2007 = vmatpush1.msra.mxu0 %v1870
        %2008 = vmatprep.subr.mxu0 %v1869
        %2009 = vmatpush1.msra.mxu0 %v1868
        %2010 = vmatprep.subr.mxu0 %v1867
        %2011 = vmatpush1.msra.mxu0 %v1866
        %2012 = vmatprep.subr.mxu0 %v1865
        %2013 = vmatpush1.msra.mxu0 %v1864
        %2014 = vmatprep.subr.mxu0 %v1863
        %2015 = vmatpush1.msra.mxu0 %v1862
        %2016 = vmatprep.subr.mxu0 %v1861
        %2017 = vmatpush1.msra.mxu0 %v1860
        %2018 = vmatprep.subr.mxu0 %v1859
        %2019 = vmatpush1.msra.mxu0 %v1858
        %2020 = vmatprep.subr.mxu0 %v1857
        %2021 = vmatpush1.msra.mxu0 %v1856
        %2022 = vmatprep.subr.mxu0 %v1855
        %2023 = vmatpush1.msra.mxu0 %v1854
        %2024 = vmatprep.subr.mxu0 0.0
        %2025 = vmatpush2.msra.mxu0 0.0
        %2026 = vmatprep.subr.mxu0 0.0
        %2027 = vmatpush2.msra.mxu0 0.0
        %2028 = vmatprep.subr.mxu0 0.0
        %2029 = vmatpush2.msra.mxu0 0.0
        %2030 = vmatprep.subr.mxu0 0.0
        %2031 = vmatpush2.msra.mxu0 0.0
        %2032 = vmatprep.subr.mxu0 0.0
        %2033 = vmatpush2.msra.mxu0 0.0
        %2034 = vmatprep.subr.mxu0 0.0
        %2035 = vmatpush2.msra.mxu0 0.0
        %2036 = vmatprep.subr.mxu0 0.0
        %2037 = vmatpush2.msra.mxu0 0.0
        %2038 = vmatprep.subr.mxu0 0.0
        %2039 = vmatpush2.msra.mxu0 0.0
        %2040 = vmatprep.subr.mxu0 0.0
        %2041 = vmatpush2.msra.mxu0 0.0
        %2042 = vmatprep.subr.mxu0 0.0
        %2043 = vmatpush2.msra.mxu0 0.0
        %2044 = vmatprep.subr.mxu0 0.0
        %2045 = vmatpush2.msra.mxu0 0.0
        %2046 = vmatprep.subr.mxu0 0.0
        %2047 = vmatpush2.msra.mxu0 0.0
        %2048 = vmatprep.subr.mxu0 0.0
        %2049 = vmatpush2.msra.mxu0 0.0
        %2050 = vmatprep.subr.mxu0 0.0
        %2051 = vmatpush2.msra.mxu0 0.0
        %2052 = vmatprep.subr.mxu0 0.0
        %2053 = vmatpush2.msra.mxu0 0.0
        %2054 = vmatprep.subr.mxu0 0.0
        %2055 = vmatpush2.msra.mxu0 0.0
        %2056 = vmatprep.mubr.f32.mxu0 0.0
        %2057 = vmatmul.mubr.f32.gmra.mxu0 %v1990
        %v2058 = vpop.f32.mrf.mxu0
        %v2059 = vadd.f32 %v1985, %v2058
        %v2060 = vpop.f32.mrf.mxu0
        %v2061 = vadd.f32 %v1987, %v2060
        %2062 = vdwg.mxu0
        %v2063 = vld [vmem:[%s3 + $0x1e0] sm:$0xff]
        %v2064 = vld [vmem:[%s3 + $0x1e8] sm:$0xff]
        %v2065 = vld [vmem:[%s3 + $0x1f0] sm:$0xff]
        %v2066 = vld [vmem:[%s3 + $0x1f8] sm:$0xff]
        %v2067 = vld [vmem:[%s3 + $0x200] sm:$0xff]
        %v2068 = vld [vmem:[%s3 + $0x208] sm:$0xff]
        %v2069 = vld [vmem:[%s3 + $0x210] sm:$0xff]
        %v2070 = vld [vmem:[%s3 + $0x218] sm:$0xff]
        %v2071 = vld [vmem:[%s3 + $0x220] sm:$0xff]
        %v2072 = vld [vmem:[%s3 + $0x228] sm:$0xff]
        %v2073 = vld [vmem:[%s3 + $0x230] sm:$0xff]
        %v2074 = vld [vmem:[%s3 + $0x238] sm:$0xff]
        %v2075 = vld [vmem:[%s3 + $0x240] sm:$0xff]
        %v2076 = vld [vmem:[%s3 + $0x248] sm:$0xff]
        %v2077 = vld [vmem:[%s3 + $0x250] sm:$0xff]
        %v2078 = vld [vmem:[%s3 + $0x258] sm:$0xff]
        %v2079 = vld [vmem:[%s3 + $0x260] sm:$0xff]
        %v2080 = vld [vmem:[%s3 + $0x268] sm:$0xff]
        %v2081 = vld [vmem:[%s3 + $0x270] sm:$0xff]
        %v2082 = vld [vmem:[%s3 + $0x278] sm:$0xff]
        %v2083 = vld [vmem:[%s3 + $0x280] sm:$0xff]
        %v2084 = vld [vmem:[%s3 + $0x288] sm:$0xff]
        %v2085 = vld [vmem:[%s3 + $0x290] sm:$0xff]
        %v2086 = vld [vmem:[%s3 + $0x298] sm:$0xff]
        %v2087 = vld [vmem:[%s3 + $0x2a0] sm:$0xff]
        %v2088 = vld [vmem:[%s3 + $0x2a8] sm:$0xff]
        %v2089 = vld [vmem:[%s3 + $0x2b0] sm:$0xff]
        %v2090 = vld [vmem:[%s3 + $0x2b8] sm:$0xff]
        %v2091 = vld [vmem:[%s3 + $0x2c0] sm:$0xff]
        %v2092 = vld [vmem:[%s3 + $0x2c8] sm:$0xff]
        %v2093 = vrot.slane %v1112, 1
        %v2094 = vsel %vm1914, %v2093, 0
        %2096 = vmatprep.subr.mxu0 0.0
        %2097 = vmatpush1.msra.mxu0 0.0
        %2098 = vmatprep.subr.mxu0 %v2092
        %2099 = vmatpush1.msra.mxu0 %v2091
        %2100 = vmatprep.subr.mxu0 %v2090
        %2101 = vmatpush1.msra.mxu0 %v2089
        %2102 = vmatprep.subr.mxu0 %v2088
        %2103 = vmatpush1.msra.mxu0 %v2087
        %2104 = vmatprep.subr.mxu0 %v2086
        %2105 = vmatpush1.msra.mxu0 %v2085
        %2106 = vmatprep.subr.mxu0 %v2084
        %2107 = vmatpush1.msra.mxu0 %v2083
        %2108 = vmatprep.subr.mxu0 %v2082
        %2109 = vmatpush1.msra.mxu0 %v2081
        %2110 = vmatprep.subr.mxu0 %v2080
        %2111 = vmatpush1.msra.mxu0 %v2079
        %2112 = vmatprep.subr.mxu0 %v2078
        %2113 = vmatpush1.msra.mxu0 %v2077
        %2114 = vmatprep.subr.mxu0 %v2076
        %2115 = vmatpush1.msra.mxu0 %v2075
        %2116 = vmatprep.subr.mxu0 %v2074
        %2117 = vmatpush1.msra.mxu0 %v2073
        %2118 = vmatprep.subr.mxu0 %v2072
        %2119 = vmatpush1.msra.mxu0 %v2071
        %2120 = vmatprep.subr.mxu0 %v2070
        %2121 = vmatpush1.msra.mxu0 %v2069
        %2122 = vmatprep.subr.mxu0 %v2068
        %2123 = vmatpush1.msra.mxu0 %v2067
        %2124 = vmatprep.subr.mxu0 %v2066
        %2125 = vmatpush1.msra.mxu0 %v2065
        %2126 = vmatprep.subr.mxu0 %v2064
        %2127 = vmatpush1.msra.mxu0 %v2063
        %2128 = vmatprep.subr.mxu0 0.0
        %2129 = vmatpush2.msra.mxu0 0.0
        %2130 = vmatprep.subr.mxu0 0.0
        %2131 = vmatpush2.msra.mxu0 0.0
        %2132 = vmatprep.subr.mxu0 0.0
        %2133 = vmatpush2.msra.mxu0 0.0
        %2134 = vmatprep.subr.mxu0 0.0
        %2135 = vmatpush2.msra.mxu0 0.0
        %2136 = vmatprep.subr.mxu0 0.0
        %2137 = vmatpush2.msra.mxu0 0.0
        %2138 = vmatprep.subr.mxu0 0.0
        %2139 = vmatpush2.msra.mxu0 0.0
        %2140 = vmatprep.subr.mxu0 0.0
        %2141 = vmatpush2.msra.mxu0 0.0
        %2142 = vmatprep.subr.mxu0 0.0
        %2143 = vmatpush2.msra.mxu0 0.0
        %2144 = vmatprep.subr.mxu0 0.0
        %2145 = vmatpush2.msra.mxu0 0.0
        %2146 = vmatprep.subr.mxu0 0.0
        %2147 = vmatpush2.msra.mxu0 0.0
        %2148 = vmatprep.subr.mxu0 0.0
        %2149 = vmatpush2.msra.mxu0 0.0
        %2150 = vmatprep.subr.mxu0 0.0
        %2151 = vmatpush2.msra.mxu0 0.0
        %2152 = vmatprep.subr.mxu0 0.0
        %2153 = vmatpush2.msra.mxu0 0.0
        %2154 = vmatprep.subr.mxu0 0.0
        %2155 = vmatpush2.msra.mxu0 0.0
        %2156 = vmatprep.subr.mxu0 0.0
        %2157 = vmatpush2.msra.mxu0 0.0
        %2158 = vmatprep.subr.mxu0 0.0
        %2159 = vmatpush2.msra.mxu0 0.0
        %2160 = vmatprep.mubr.f32.mxu0 0.0
        %2161 = vmatmul.mubr.f32.gmra.mxu0 %v2094
        %v2162 = vpop.f32.mrf.mxu0
        %v2163 = vadd.f32 0.0, %v2162
        %v2164 = vpop.f32.mrf.mxu0
        %v2165 = vadd.f32 0.0, %v2164
        %2166 = vdwg.mxu0
        %v2167 = vadd.f32 %v2059, %v2163
        %v2168 = vadd.f32 %v2061, %v2165
        %v2169 = vld [vmem:[%s3 + $0x2d0] sm:$0xff]
        %v2170 = vld [vmem:[%s3 + $0x2d8] sm:$0xff]
        %v2171 = vld [vmem:[%s3 + $0x2e0] sm:$0xff]
        %v2172 = vld [vmem:[%s3 + $0x2e8] sm:$0xff]
        %v2173 = vld [vmem:[%s3 + $0x2f0] sm:$0xff]
        %v2174 = vld [vmem:[%s3 + $0x2f8] sm:$0xff]
        %v2175 = vld [vmem:[%s3 + $0x300] sm:$0xff]
        %v2176 = vld [vmem:[%s3 + $0x308] sm:$0xff]
        %v2177 = vld [vmem:[%s3 + $0x310] sm:$0xff]
        %v2178 = vld [vmem:[%s3 + $0x318] sm:$0xff]
        %v2179 = vld [vmem:[%s3 + $0x320] sm:$0xff]
        %v2180 = vld [vmem:[%s3 + $0x328] sm:$0xff]
        %v2181 = vld [vmem:[%s3 + $0x330] sm:$0xff]
        %v2182 = vld [vmem:[%s3 + $0x338] sm:$0xff]
        %v2183 = vld [vmem:[%s3 + $0x340] sm:$0xff]
        %v2184 = vld [vmem:[%s3 + $0x348] sm:$0xff]
        %v2185 = vld [vmem:[%s3 + $0x350] sm:$0xff]
        %v2186 = vld [vmem:[%s3 + $0x358] sm:$0xff]
        %v2187 = vld [vmem:[%s3 + $0x360] sm:$0xff]
        %v2188 = vld [vmem:[%s3 + $0x368] sm:$0xff]
        %v2189 = vld [vmem:[%s3 + $0x370] sm:$0xff]
        %v2190 = vld [vmem:[%s3 + $0x378] sm:$0xff]
        %v2191 = vld [vmem:[%s3 + $0x380] sm:$0xff]
        %v2192 = vld [vmem:[%s3 + $0x388] sm:$0xff]
        %v2193 = vld [vmem:[%s3 + $0x390] sm:$0xff]
        %v2194 = vld [vmem:[%s3 + $0x398] sm:$0xff]
        %v2195 = vld [vmem:[%s3 + $0x3a0] sm:$0xff]
        %v2196 = vld [vmem:[%s3 + $0x3a8] sm:$0xff]
        %v2197 = vld [vmem:[%s3 + $0x3b0] sm:$0xff]
        %v2198 = vld [vmem:[%s3 + $0x3b8] sm:$0xff]
        %v2199 = vrot.slane %v1853, 1
        %v2200 = vsel %vm1914, %v2199, 0
        %2202 = vmatprep.subr.mxu0 0.0
        %2203 = vmatpush1.msra.mxu0 0.0
        %2204 = vmatprep.subr.mxu0 %v2198
        %2205 = vmatpush1.msra.mxu0 %v2197
        %2206 = vmatprep.subr.mxu0 %v2196
        %2207 = vmatpush1.msra.mxu0 %v2195
        %2208 = vmatprep.subr.mxu0 %v2194
        %2209 = vmatpush1.msra.mxu0 %v2193
        %2210 = vmatprep.subr.mxu0 %v2192
        %2211 = vmatpush1.msra.mxu0 %v2191
        %2212 = vmatprep.subr.mxu0 %v2190
        %2213 = vmatpush1.msra.mxu0 %v2189
        %2214 = vmatprep.subr.mxu0 %v2188
        %2215 = vmatpush1.msra.mxu0 %v2187
        %2216 = vmatprep.subr.mxu0 %v2186
        %2217 = vmatpush1.msra.mxu0 %v2185
        %2218 = vmatprep.subr.mxu0 %v2184
        %2219 = vmatpush1.msra.mxu0 %v2183
        %2220 = vmatprep.subr.mxu0 %v2182
        %2221 = vmatpush1.msra.mxu0 %v2181
        %2222 = vmatprep.subr.mxu0 %v2180
        %2223 = vmatpush1.msra.mxu0 %v2179
        %2224 = vmatprep.subr.mxu0 %v2178
        %2225 = vmatpush1.msra.mxu0 %v2177
        %2226 = vmatprep.subr.mxu0 %v2176
        %2227 = vmatpush1.msra.mxu0 %v2175
        %2228 = vmatprep.subr.mxu0 %v2174
        %2229 = vmatpush1.msra.mxu0 %v2173
        %2230 = vmatprep.subr.mxu0 %v2172
        %2231 = vmatpush1.msra.mxu0 %v2171
        %2232 = vmatprep.subr.mxu0 %v2170
        %2233 = vmatpush1.msra.mxu0 %v2169
        %2234 = vmatprep.subr.mxu0 0.0
        %2235 = vmatpush2.msra.mxu0 0.0
        %2236 = vmatprep.subr.mxu0 0.0
        %2237 = vmatpush2.msra.mxu0 0.0
        %2238 = vmatprep.subr.mxu0 0.0
        %2239 = vmatpush2.msra.mxu0 0.0
        %2240 = vmatprep.subr.mxu0 0.0
        %2241 = vmatpush2.msra.mxu0 0.0
        %2242 = vmatprep.subr.mxu0 0.0
        %2243 = vmatpush2.msra.mxu0 0.0
        %2244 = vmatprep.subr.mxu0 0.0
        %2245 = vmatpush2.msra.mxu0 0.0
        %2246 = vmatprep.subr.mxu0 0.0
        %2247 = vmatpush2.msra.mxu0 0.0
        %2248 = vmatprep.subr.mxu0 0.0
        %2249 = vmatpush2.msra.mxu0 0.0
        %2250 = vmatprep.subr.mxu0 0.0
        %2251 = vmatpush2.msra.mxu0 0.0
        %2252 = vmatprep.subr.mxu0 0.0
        %2253 = vmatpush2.msra.mxu0 0.0
        %2254 = vmatprep.subr.mxu0 0.0
        %2255 = vmatpush2.msra.mxu0 0.0
        %2256 = vmatprep.subr.mxu0 0.0
        %2257 = vmatpush2.msra.mxu0 0.0
        %2258 = vmatprep.subr.mxu0 0.0
        %2259 = vmatpush2.msra.mxu0 0.0
        %2260 = vmatprep.subr.mxu0 0.0
        %2261 = vmatpush2.msra.mxu0 0.0
        %2262 = vmatprep.subr.mxu0 0.0
        %2263 = vmatpush2.msra.mxu0 0.0
        %2264 = vmatprep.subr.mxu0 0.0
        %2265 = vmatpush2.msra.mxu0 0.0
        %2266 = vmatprep.mubr.f32.mxu0 0.0
        %2267 = vmatmul.mubr.f32.gmra.mxu0 %v2200
        %v2268 = vpop.f32.mrf.mxu0
        %v2269 = vadd.f32 0.0, %v2268
        %v2270 = vpop.f32.mrf.mxu0
        %v2271 = vadd.f32 0.0, %v2270
        %2272 = vdwg.mxu0
        %v2273 = vadd.f32 %v2167, %v2269
        %v2274 = vadd.f32 %v2168, %v2271
        %v2275 = vld [vmem:[%s3 + $0x3c0] sm:$0xff]
        %v2276 = vld [vmem:[%s3 + $0x3c8] sm:$0xff]
        %v2277 = vld [vmem:[%s3 + $0x3d0] sm:$0xff]
        %v2278 = vld [vmem:[%s3 + $0x3d8] sm:$0xff]
        %v2279 = vld [vmem:[%s3 + $0x3e0] sm:$0xff]
        %v2280 = vld [vmem:[%s3 + $0x3e8] sm:$0xff]
        %v2281 = vld [vmem:[%s3 + $0x3f0] sm:$0xff]
        %v2282 = vld [vmem:[%s3 + $0x3f8] sm:$0xff]
        %v2283 = vld [vmem:[%s3 + $0x400] sm:$0xff]
        %v2284 = vld [vmem:[%s3 + $0x408] sm:$0xff]
        %v2285 = vld [vmem:[%s3 + $0x410] sm:$0xff]
        %v2286 = vld [vmem:[%s3 + $0x418] sm:$0xff]
        %v2287 = vld [vmem:[%s3 + $0x420] sm:$0xff]
        %v2288 = vld [vmem:[%s3 + $0x428] sm:$0xff]
        %v2289 = vld [vmem:[%s3 + $0x430] sm:$0xff]
        %v2290 = vld [vmem:[%s3 + $0x438] sm:$0xff]
        %v2291 = vld [vmem:[%s3 + $0x440] sm:$0xff]
        %v2292 = vld [vmem:[%s3 + $0x448] sm:$0xff]
        %v2293 = vld [vmem:[%s3 + $0x450] sm:$0xff]
        %v2294 = vld [vmem:[%s3 + $0x458] sm:$0xff]
        %v2295 = vld [vmem:[%s3 + $0x460] sm:$0xff]
        %v2296 = vld [vmem:[%s3 + $0x468] sm:$0xff]
        %v2297 = vld [vmem:[%s3 + $0x470] sm:$0xff]
        %v2298 = vld [vmem:[%s3 + $0x478] sm:$0xff]
        %v2299 = vld [vmem:[%s3 + $0x480] sm:$0xff]
        %v2300 = vld [vmem:[%s3 + $0x488] sm:$0xff]
        %v2301 = vld [vmem:[%s3 + $0x490] sm:$0xff]
        %v2302 = vld [vmem:[%s3 + $0x498] sm:$0xff]
        %v2303 = vld [vmem:[%s3 + $0x4a0] sm:$0xff]
        %v2304 = vld [vmem:[%s3 + $0x4a8] sm:$0xff]
        %v2305 = vrot.slane %v1112, 2
        %v2306 = vsel %vm1914, %v2305, 0
        %2308 = vmatprep.subr.mxu0 0.0
        %2309 = vmatpush1.msra.mxu0 0.0
        %2310 = vmatprep.subr.mxu0 %v2304
        %2311 = vmatpush1.msra.mxu0 %v2303
        %2312 = vmatprep.subr.mxu0 %v2302
        %2313 = vmatpush1.msra.mxu0 %v2301
        %2314 = vmatprep.subr.mxu0 %v2300
        %2315 = vmatpush1.msra.mxu0 %v2299
        %2316 = vmatprep.subr.mxu0 %v2298
        %2317 = vmatpush1.msra.mxu0 %v2297
        %2318 = vmatprep.subr.mxu0 %v2296
        %2319 = vmatpush1.msra.mxu0 %v2295
        %2320 = vmatprep.subr.mxu0 %v2294
        %2321 = vmatpush1.msra.mxu0 %v2293
        %2322 = vmatprep.subr.mxu0 %v2292
        %2323 = vmatpush1.msra.mxu0 %v2291
        %2324 = vmatprep.subr.mxu0 %v2290
        %2325 = vmatpush1.msra.mxu0 %v2289
        %2326 = vmatprep.subr.mxu0 %v2288
        %2327 = vmatpush1.msra.mxu0 %v2287
        %2328 = vmatprep.subr.mxu0 %v2286
        %2329 = vmatpush1.msra.mxu0 %v2285
        %2330 = vmatprep.subr.mxu0 %v2284
        %2331 = vmatpush1.msra.mxu0 %v2283
        %2332 = vmatprep.subr.mxu0 %v2282
        %2333 = vmatpush1.msra.mxu0 %v2281
        %2334 = vmatprep.subr.mxu0 %v2280
        %2335 = vmatpush1.msra.mxu0 %v2279
        %2336 = vmatprep.subr.mxu0 %v2278
        %2337 = vmatpush1.msra.mxu0 %v2277
        %2338 = vmatprep.subr.mxu0 %v2276
        %2339 = vmatpush1.msra.mxu0 %v2275
        %2340 = vmatprep.subr.mxu0 0.0
        %2341 = vmatpush2.msra.mxu0 0.0
        %2342 = vmatprep.subr.mxu0 0.0
        %2343 = vmatpush2.msra.mxu0 0.0
        %2344 = vmatprep.subr.mxu0 0.0
        %2345 = vmatpush2.msra.mxu0 0.0
        %2346 = vmatprep.subr.mxu0 0.0
        %2347 = vmatpush2.msra.mxu0 0.0
        %2348 = vmatprep.subr.mxu0 0.0
        %2349 = vmatpush2.msra.mxu0 0.0
        %2350 = vmatprep.subr.mxu0 0.0
        %2351 = vmatpush2.msra.mxu0 0.0
        %2352 = vmatprep.subr.mxu0 0.0
        %2353 = vmatpush2.msra.mxu0 0.0
        %2354 = vmatprep.subr.mxu0 0.0
        %2355 = vmatpush2.msra.mxu0 0.0
        %2356 = vmatprep.subr.mxu0 0.0
        %2357 = vmatpush2.msra.mxu0 0.0
        %2358 = vmatprep.subr.mxu0 0.0
        %2359 = vmatpush2.msra.mxu0 0.0
        %2360 = vmatprep.subr.mxu0 0.0
        %2361 = vmatpush2.msra.mxu0 0.0
        %2362 = vmatprep.subr.mxu0 0.0
        %2363 = vmatpush2.msra.mxu0 0.0
        %2364 = vmatprep.subr.mxu0 0.0
        %2365 = vmatpush2.msra.mxu0 0.0
        %2366 = vmatprep.subr.mxu0 0.0
        %2367 = vmatpush2.msra.mxu0 0.0
        %2368 = vmatprep.subr.mxu0 0.0
        %2369 = vmatpush2.msra.mxu0 0.0
        %2370 = vmatprep.subr.mxu0 0.0
        %2371 = vmatpush2.msra.mxu0 0.0
        %2372 = vmatprep.mubr.f32.mxu0 0.0
        %2373 = vmatmul.mubr.f32.gmra.mxu0 %v2306
        %v2374 = vpop.f32.mrf.mxu0
        %v2375 = vadd.f32 0.0, %v2374
        %v2376 = vpop.f32.mrf.mxu0
        %v2377 = vadd.f32 0.0, %v2376
        %2378 = vdwg.mxu0
        %v2379 = vadd.f32 %v2273, %v2375
        %v2380 = vadd.f32 %v2274, %v2377
        %2381 = vmatprep.subr.mxu0 0.0
        %2382 = vmatpush1.msra.mxu0 0.0
        %2383 = vmatprep.subr.mxu0 %v1913
        %2384 = vmatpush1.msra.mxu0 %v1912
        %2385 = vmatprep.subr.mxu0 %v1911
        %2386 = vmatpush1.msra.mxu0 %v1910
        %2387 = vmatprep.subr.mxu0 %v1909
        %2388 = vmatpush1.msra.mxu0 %v1908
        %2389 = vmatprep.subr.mxu0 %v1907
        %2390 = vmatpush1.msra.mxu0 %v1906
        %2391 = vmatprep.subr.mxu0 %v1905
        %2392 = vmatpush1.msra.mxu0 %v1904
        %2393 = vmatprep.subr.mxu0 %v1903
        %2394 = vmatpush1.msra.mxu0 %v1902
        %2395 = vmatprep.subr.mxu0 %v1901
        %2396 = vmatpush1.msra.mxu0 %v1900
        %2397 = vmatprep.subr.mxu0 %v1899
        %2398 = vmatpush1.msra.mxu0 %v1898
        %2399 = vmatprep.subr.mxu0 %v1897
        %2400 = vmatpush1.msra.mxu0 %v1896
        %2401 = vmatprep.subr.mxu0 %v1895
        %2402 = vmatpush1.msra.mxu0 %v1894
        %2403 = vmatprep.subr.mxu0 %v1893
        %2404 = vmatpush1.msra.mxu0 %v1892
        %2405 = vmatprep.subr.mxu0 %v1891
        %2406 = vmatpush1.msra.mxu0 %v1890
        %2407 = vmatprep.subr.mxu0 %v1889
        %2408 = vmatpush1.msra.mxu0 %v1888
        %2409 = vmatprep.subr.mxu0 %v1887
        %2410 = vmatpush1.msra.mxu0 %v1886
        %2411 = vmatprep.subr.mxu0 %v1885
        %2412 = vmatpush1.msra.mxu0 %v1884
        %2413 = vmatprep.subr.mxu0 0.0
        %2414 = vmatpush2.msra.mxu0 0.0
        %2415 = vmatprep.subr.mxu0 0.0
        %2416 = vmatpush2.msra.mxu0 0.0
        %2417 = vmatprep.subr.mxu0 0.0
        %2418 = vmatpush2.msra.mxu0 0.0
        %2419 = vmatprep.subr.mxu0 0.0
        %2420 = vmatpush2.msra.mxu0 0.0
        %2421 = vmatprep.subr.mxu0 0.0
        %2422 = vmatpush2.msra.mxu0 0.0
        %2423 = vmatprep.subr.mxu0 0.0
        %2424 = vmatpush2.msra.mxu0 0.0
        %2425 = vmatprep.subr.mxu0 0.0
        %2426 = vmatpush2.msra.mxu0 0.0
        %2427 = vmatprep.subr.mxu0 0.0
        %2428 = vmatpush2.msra.mxu0 0.0
        %2429 = vmatprep.subr.mxu0 0.0
        %2430 = vmatpush2.msra.mxu0 0.0
        %2431 = vmatprep.subr.mxu0 0.0
        %2432 = vmatpush2.msra.mxu0 0.0
        %2433 = vmatprep.subr.mxu0 0.0
        %2434 = vmatpush2.msra.mxu0 0.0
        %2435 = vmatprep.subr.mxu0 0.0
        %2436 = vmatpush2.msra.mxu0 0.0
        %2437 = vmatprep.subr.mxu0 0.0
        %2438 = vmatpush2.msra.mxu0 0.0
        %2439 = vmatprep.subr.mxu0 0.0
        %2440 = vmatpush2.msra.mxu0 0.0
        %2441 = vmatprep.subr.mxu0 0.0
        %2442 = vmatpush2.msra.mxu0 0.0
        %2443 = vmatprep.subr.mxu0 0.0
        %2444 = vmatpush2.msra.mxu0 0.0
        %2445 = vmatprep.mubr.f32.mxu0 0.0
        %2446 = vmatmul.mubr.f32.gmra.mxu0 %v2094
        %v2447 = vpop.f32.mrf.mxu0
        %v2448 = vadd.f32 0.0, %v2447
        %v2449 = vpop.f32.mrf.mxu0
        %v2450 = vadd.f32 0.0, %v2449
        %2451 = vdwg.mxu0
        %2452 = vmatprep.subr.mxu0 0.0
        %2453 = vmatpush1.msra.mxu0 0.0
        %2454 = vmatprep.subr.mxu0 %v1883
        %2455 = vmatpush1.msra.mxu0 %v1882
        %2456 = vmatprep.subr.mxu0 %v1881
        %2457 = vmatpush1.msra.mxu0 %v1880
        %2458 = vmatprep.subr.mxu0 %v1879
        %2459 = vmatpush1.msra.mxu0 %v1878
        %2460 = vmatprep.subr.mxu0 %v1877
        %2461 = vmatpush1.msra.mxu0 %v1876
        %2462 = vmatprep.subr.mxu0 %v1875
        %2463 = vmatpush1.msra.mxu0 %v1874
        %2464 = vmatprep.subr.mxu0 %v1873
        %2465 = vmatpush1.msra.mxu0 %v1872
        %2466 = vmatprep.subr.mxu0 %v1871
        %2467 = vmatpush1.msra.mxu0 %v1870
        %2468 = vmatprep.subr.mxu0 %v1869
        %2469 = vmatpush1.msra.mxu0 %v1868
        %2470 = vmatprep.subr.mxu0 %v1867
        %2471 = vmatpush1.msra.mxu0 %v1866
        %2472 = vmatprep.subr.mxu0 %v1865
        %2473 = vmatpush1.msra.mxu0 %v1864
        %2474 = vmatprep.subr.mxu0 %v1863
        %2475 = vmatpush1.msra.mxu0 %v1862
        %2476 = vmatprep.subr.mxu0 %v1861
        %2477 = vmatpush1.msra.mxu0 %v1860
        %2478 = vmatprep.subr.mxu0 %v1859
        %2479 = vmatpush1.msra.mxu0 %v1858
        %2480 = vmatprep.subr.mxu0 %v1857
        %2481 = vmatpush1.msra.mxu0 %v1856
        %2482 = vmatprep.subr.mxu0 %v1855
        %2483 = vmatpush1.msra.mxu0 %v1854
        %2484 = vmatprep.subr.mxu0 0.0
        %2485 = vmatpush2.msra.mxu0 0.0
        %2486 = vmatprep.subr.mxu0 0.0
        %2487 = vmatpush2.msra.mxu0 0.0
        %2488 = vmatprep.subr.mxu0 0.0
        %2489 = vmatpush2.msra.mxu0 0.0
        %2490 = vmatprep.subr.mxu0 0.0
        %2491 = vmatpush2.msra.mxu0 0.0
        %2492 = vmatprep.subr.mxu0 0.0
        %2493 = vmatpush2.msra.mxu0 0.0
        %2494 = vmatprep.subr.mxu0 0.0
        %2495 = vmatpush2.msra.mxu0 0.0
        %2496 = vmatprep.subr.mxu0 0.0
        %2497 = vmatpush2.msra.mxu0 0.0
        %2498 = vmatprep.subr.mxu0 0.0
        %2499 = vmatpush2.msra.mxu0 0.0
        %2500 = vmatprep.subr.mxu0 0.0
        %2501 = vmatpush2.msra.mxu0 0.0
        %2502 = vmatprep.subr.mxu0 0.0
        %2503 = vmatpush2.msra.mxu0 0.0
        %2504 = vmatprep.subr.mxu0 0.0
        %2505 = vmatpush2.msra.mxu0 0.0
        %2506 = vmatprep.subr.mxu0 0.0
        %2507 = vmatpush2.msra.mxu0 0.0
        %2508 = vmatprep.subr.mxu0 0.0
        %2509 = vmatpush2.msra.mxu0 0.0
        %2510 = vmatprep.subr.mxu0 0.0
        %2511 = vmatpush2.msra.mxu0 0.0
        %2512 = vmatprep.subr.mxu0 0.0
        %2513 = vmatpush2.msra.mxu0 0.0
        %2514 = vmatprep.subr.mxu0 0.0
        %2515 = vmatpush2.msra.mxu0 0.0
        %2516 = vmatprep.mubr.f32.mxu0 0.0
        %2517 = vmatmul.mubr.f32.gmra.mxu0 %v1916
        %v2518 = vpop.f32.mrf.mxu0
        %v2519 = vadd.f32 %v2448, %v2518
        %v2520 = vpop.f32.mrf.mxu0
        %v2521 = vadd.f32 %v2450, %v2520
        %2522 = vdwg.mxu0
        %2523 = vmatprep.subr.mxu0 0.0
        %2524 = vmatpush1.msra.mxu0 0.0
        %2525 = vmatprep.subr.mxu0 %v2092
        %2526 = vmatpush1.msra.mxu0 %v2091
        %2527 = vmatprep.subr.mxu0 %v2090
        %2528 = vmatpush1.msra.mxu0 %v2089
        %2529 = vmatprep.subr.mxu0 %v2088
        %2530 = vmatpush1.msra.mxu0 %v2087
        %2531 = vmatprep.subr.mxu0 %v2086
        %2532 = vmatpush1.msra.mxu0 %v2085
        %2533 = vmatprep.subr.mxu0 %v2084
        %2534 = vmatpush1.msra.mxu0 %v2083
        %2535 = vmatprep.subr.mxu0 %v2082
        %2536 = vmatpush1.msra.mxu0 %v2081
        %2537 = vmatprep.subr.mxu0 %v2080
        %2538 = vmatpush1.msra.mxu0 %v2079
        %2539 = vmatprep.subr.mxu0 %v2078
        %2540 = vmatpush1.msra.mxu0 %v2077
        %2541 = vmatprep.subr.mxu0 %v2076
        %2542 = vmatpush1.msra.mxu0 %v2075
        %2543 = vmatprep.subr.mxu0 %v2074
        %2544 = vmatpush1.msra.mxu0 %v2073
        %2545 = vmatprep.subr.mxu0 %v2072
        %2546 = vmatpush1.msra.mxu0 %v2071
        %2547 = vmatprep.subr.mxu0 %v2070
        %2548 = vmatpush1.msra.mxu0 %v2069
        %2549 = vmatprep.subr.mxu0 %v2068
        %2550 = vmatpush1.msra.mxu0 %v2067
        %2551 = vmatprep.subr.mxu0 %v2066
        %2552 = vmatpush1.msra.mxu0 %v2065
        %2553 = vmatprep.subr.mxu0 %v2064
        %2554 = vmatpush1.msra.mxu0 %v2063
        %2555 = vmatprep.subr.mxu0 0.0
        %2556 = vmatpush2.msra.mxu0 0.0
        %2557 = vmatprep.subr.mxu0 0.0
        %2558 = vmatpush2.msra.mxu0 0.0
        %2559 = vmatprep.subr.mxu0 0.0
        %2560 = vmatpush2.msra.mxu0 0.0
        %2561 = vmatprep.subr.mxu0 0.0
        %2562 = vmatpush2.msra.mxu0 0.0
        %2563 = vmatprep.subr.mxu0 0.0
        %2564 = vmatpush2.msra.mxu0 0.0
        %2565 = vmatprep.subr.mxu0 0.0
        %2566 = vmatpush2.msra.mxu0 0.0
        %2567 = vmatprep.subr.mxu0 0.0
        %2568 = vmatpush2.msra.mxu0 0.0
        %2569 = vmatprep.subr.mxu0 0.0
        %2570 = vmatpush2.msra.mxu0 0.0
        %2571 = vmatprep.subr.mxu0 0.0
        %2572 = vmatpush2.msra.mxu0 0.0
        %2573 = vmatprep.subr.mxu0 0.0
        %2574 = vmatpush2.msra.mxu0 0.0
        %2575 = vmatprep.subr.mxu0 0.0
        %2576 = vmatpush2.msra.mxu0 0.0
        %2577 = vmatprep.subr.mxu0 0.0
        %2578 = vmatpush2.msra.mxu0 0.0
        %2579 = vmatprep.subr.mxu0 0.0
        %2580 = vmatpush2.msra.mxu0 0.0
        %2581 = vmatprep.subr.mxu0 0.0
        %2582 = vmatpush2.msra.mxu0 0.0
        %2583 = vmatprep.subr.mxu0 0.0
        %2584 = vmatpush2.msra.mxu0 0.0
        %2585 = vmatprep.subr.mxu0 0.0
        %2586 = vmatpush2.msra.mxu0 0.0
        %2587 = vmatprep.mubr.f32.mxu0 0.0
        %2588 = vmatmul.mubr.f32.gmra.mxu0 %v2200
        %v2589 = vpop.f32.mrf.mxu0
        %v2590 = vadd.f32 0.0, %v2589
        %v2591 = vpop.f32.mrf.mxu0
        %v2592 = vadd.f32 0.0, %v2591
        %2593 = vdwg.mxu0
        %v2594 = vadd.f32 %v2519, %v2590
        %v2595 = vadd.f32 %v2521, %v2592
        %2596 = vmatprep.subr.mxu0 0.0
        %2597 = vmatpush1.msra.mxu0 0.0
        %2598 = vmatprep.subr.mxu0 %v2198
        %2599 = vmatpush1.msra.mxu0 %v2197
        %2600 = vmatprep.subr.mxu0 %v2196
        %2601 = vmatpush1.msra.mxu0 %v2195
        %2602 = vmatprep.subr.mxu0 %v2194
        %2603 = vmatpush1.msra.mxu0 %v2193
        %2604 = vmatprep.subr.mxu0 %v2192
        %2605 = vmatpush1.msra.mxu0 %v2191
        %2606 = vmatprep.subr.mxu0 %v2190
        %2607 = vmatpush1.msra.mxu0 %v2189
        %2608 = vmatprep.subr.mxu0 %v2188
        %2609 = vmatpush1.msra.mxu0 %v2187
        %2610 = vmatprep.subr.mxu0 %v2186
        %2611 = vmatpush1.msra.mxu0 %v2185
        %2612 = vmatprep.subr.mxu0 %v2184
        %2613 = vmatpush1.msra.mxu0 %v2183
        %2614 = vmatprep.subr.mxu0 %v2182
        %2615 = vmatpush1.msra.mxu0 %v2181
        %2616 = vmatprep.subr.mxu0 %v2180
        %2617 = vmatpush1.msra.mxu0 %v2179
        %2618 = vmatprep.subr.mxu0 %v2178
        %2619 = vmatpush1.msra.mxu0 %v2177
        %2620 = vmatprep.subr.mxu0 %v2176
        %2621 = vmatpush1.msra.mxu0 %v2175
        %2622 = vmatprep.subr.mxu0 %v2174
        %2623 = vmatpush1.msra.mxu0 %v2173
        %2624 = vmatprep.subr.mxu0 %v2172
        %2625 = vmatpush1.msra.mxu0 %v2171
        %2626 = vmatprep.subr.mxu0 %v2170
        %2627 = vmatpush1.msra.mxu0 %v2169
        %2628 = vmatprep.subr.mxu0 0.0
        %2629 = vmatpush2.msra.mxu0 0.0
        %2630 = vmatprep.subr.mxu0 0.0
        %2631 = vmatpush2.msra.mxu0 0.0
        %2632 = vmatprep.subr.mxu0 0.0
        %2633 = vmatpush2.msra.mxu0 0.0
        %2634 = vmatprep.subr.mxu0 0.0
        %2635 = vmatpush2.msra.mxu0 0.0
        %2636 = vmatprep.subr.mxu0 0.0
        %2637 = vmatpush2.msra.mxu0 0.0
        %2638 = vmatprep.subr.mxu0 0.0
        %2639 = vmatpush2.msra.mxu0 0.0
        %2640 = vmatprep.subr.mxu0 0.0
        %2641 = vmatpush2.msra.mxu0 0.0
        %2642 = vmatprep.subr.mxu0 0.0
        %2643 = vmatpush2.msra.mxu0 0.0
        %2644 = vmatprep.subr.mxu0 0.0
        %2645 = vmatpush2.msra.mxu0 0.0
        %2646 = vmatprep.subr.mxu0 0.0
        %2647 = vmatpush2.msra.mxu0 0.0
        %2648 = vmatprep.subr.mxu0 0.0
        %2649 = vmatpush2.msra.mxu0 0.0
        %2650 = vmatprep.subr.mxu0 0.0
        %2651 = vmatpush2.msra.mxu0 0.0
        %2652 = vmatprep.subr.mxu0 0.0
        %2653 = vmatpush2.msra.mxu0 0.0
        %2654 = vmatprep.subr.mxu0 0.0
        %2655 = vmatpush2.msra.mxu0 0.0
        %2656 = vmatprep.subr.mxu0 0.0
        %2657 = vmatpush2.msra.mxu0 0.0
        %2658 = vmatprep.subr.mxu0 0.0
        %2659 = vmatpush2.msra.mxu0 0.0
        %2660 = vmatprep.mubr.f32.mxu0 0.0
        %2661 = vmatmul.mubr.f32.gmra.mxu0 %v2306
        %v2662 = vpop.f32.mrf.mxu0
        %v2663 = vadd.f32 0.0, %v2662
        %v2664 = vpop.f32.mrf.mxu0
        %v2665 = vadd.f32 0.0, %v2664
        %2666 = vdwg.mxu0
        %v2667 = vadd.f32 %v2594, %v2663
        %v2668 = vadd.f32 %v2595, %v2665
        %v2669 = vrot.slane %v1853, 2
        %v2670 = vsel %vm1914, %v2669, 0
        %2672 = vmatprep.subr.mxu0 0.0
        %2673 = vmatpush1.msra.mxu0 0.0
        %2674 = vmatprep.subr.mxu0 %v2304
        %2675 = vmatpush1.msra.mxu0 %v2303
        %2676 = vmatprep.subr.mxu0 %v2302
        %2677 = vmatpush1.msra.mxu0 %v2301
        %2678 = vmatprep.subr.mxu0 %v2300
        %2679 = vmatpush1.msra.mxu0 %v2299
        %2680 = vmatprep.subr.mxu0 %v2298
        %2681 = vmatpush1.msra.mxu0 %v2297
        %2682 = vmatprep.subr.mxu0 %v2296
        %2683 = vmatpush1.msra.mxu0 %v2295
        %2684 = vmatprep.subr.mxu0 %v2294
        %2685 = vmatpush1.msra.mxu0 %v2293
        %2686 = vmatprep.subr.mxu0 %v2292
        %2687 = vmatpush1.msra.mxu0 %v2291
        %2688 = vmatprep.subr.mxu0 %v2290
        %2689 = vmatpush1.msra.mxu0 %v2289
        %2690 = vmatprep.subr.mxu0 %v2288
        %2691 = vmatpush1.msra.mxu0 %v2287
        %2692 = vmatprep.subr.mxu0 %v2286
        %2693 = vmatpush1.msra.mxu0 %v2285
        %2694 = vmatprep.subr.mxu0 %v2284
        %2695 = vmatpush1.msra.mxu0 %v2283
        %2696 = vmatprep.subr.mxu0 %v2282
        %2697 = vmatpush1.msra.mxu0 %v2281
        %2698 = vmatprep.subr.mxu0 %v2280
        %2699 = vmatpush1.msra.mxu0 %v2279
        %2700 = vmatprep.subr.mxu0 %v2278
        %2701 = vmatpush1.msra.mxu0 %v2277
        %2702 = vmatprep.subr.mxu0 %v2276
        %2703 = vmatpush1.msra.mxu0 %v2275
        %2704 = vmatprep.subr.mxu0 0.0
        %2705 = vmatpush2.msra.mxu0 0.0
        %2706 = vmatprep.subr.mxu0 0.0
        %2707 = vmatpush2.msra.mxu0 0.0
        %2708 = vmatprep.subr.mxu0 0.0
        %2709 = vmatpush2.msra.mxu0 0.0
        %2710 = vmatprep.subr.mxu0 0.0
        %2711 = vmatpush2.msra.mxu0 0.0
        %2712 = vmatprep.subr.mxu0 0.0
        %2713 = vmatpush2.msra.mxu0 0.0
        %2714 = vmatprep.subr.mxu0 0.0
        %2715 = vmatpush2.msra.mxu0 0.0
        %2716 = vmatprep.subr.mxu0 0.0
        %2717 = vmatpush2.msra.mxu0 0.0
        %2718 = vmatprep.subr.mxu0 0.0
        %2719 = vmatpush2.msra.mxu0 0.0
        %2720 = vmatprep.subr.mxu0 0.0
        %2721 = vmatpush2.msra.mxu0 0.0
        %2722 = vmatprep.subr.mxu0 0.0
        %2723 = vmatpush2.msra.mxu0 0.0
        %2724 = vmatprep.subr.mxu0 0.0
        %2725 = vmatpush2.msra.mxu0 0.0
        %2726 = vmatprep.subr.mxu0 0.0
        %2727 = vmatpush2.msra.mxu0 0.0
        %2728 = vmatprep.subr.mxu0 0.0
        %2729 = vmatpush2.msra.mxu0 0.0
        %2730 = vmatprep.subr.mxu0 0.0
        %2731 = vmatpush2.msra.mxu0 0.0
        %2732 = vmatprep.subr.mxu0 0.0
        %2733 = vmatpush2.msra.mxu0 0.0
        %2734 = vmatprep.subr.mxu0 0.0
        %2735 = vmatpush2.msra.mxu0 0.0
        %2736 = vmatprep.mubr.f32.mxu0 0.0
        %2737 = vmatmul.mubr.f32.gmra.mxu0 %v2670
        %v2738 = vpop.f32.mrf.mxu0
        %v2739 = vadd.f32 0.0, %v2738
        %v2740 = vpop.f32.mrf.mxu0
        %v2741 = vadd.f32 0.0, %v2740
        %2742 = vdwg.mxu0
        %v2743 = vadd.f32 %v2667, %v2739
        %v2744 = vadd.f32 %v2668, %v2741
        %v2745 = vmax.f32 %v2379, %v2743
        %v2746 = vmax.f32 %v2380, %v2744
        %2749 = vrot.lane.b32.xlu0 %v2745, 48
        %v2750 = vpop.permute.xlu0 %2749
        %2751 = vrot.lane.b32.xlu0 %v2746, 48
        %v2752 = vpop.permute.xlu0 %2751
        %vm2753 = vcmask 392192
        %v2754 = vsel %vm2753, %v2750, %v2752
        %v2756 = vmax.f32 %v2745, %v2754
        %v2757 = vld [vmem:[%s4] sm:$0x1]
        %v2759 = vlaneseq
        %v2760 = vshrl.u32 %v2759, 7
        %v2761 = vsub.s32 0, %v2760
        %v2762 = vrot.slane %v2757, %v2761
        %v2764 = vadd.f32 %v2756, %v2762
        %v2765 = vmax.f32 %v2764, 0.0
        %v2766 = vld [vmem:[%s6] sm:$0x1]
        %v2767 = vld [vmem:[%s5] sm:$0xff]
        %v2768 = vld [vmem:[%s5 + $0x8] sm:$0xff]
        %v2769 = vld [vmem:[%s5 + $0x10] sm:$0xff]
        %v2770 = vld [vmem:[%s5 + $0x18] sm:$0xff]
        %v2771 = vld [vmem:[%s5 + $0x20] sm:$0xff]
        %v2772 = vld [vmem:[%s5 + $0x28] sm:$0xff]
        %v2773 = vld [vmem:[%s5 + $0x30] sm:$0xff]
        %v2774 = vld [vmem:[%s5 + $0x38] sm:$0xff]
        %v2775 = vld [vmem:[%s5 + $0x40] sm:$0xff]
        %v2776 = vld [vmem:[%s5 + $0x48] sm:$0xff]
        %vm2777 = vcmask 654336
        %v2779 = vsel %vm2777, %v2765, 0
        %2781 = vmatprep.subr.mxu0 0.0
        %2782 = vmatpush1.msra.mxu0 0.0
        %2783 = vmatprep.subr.mxu0 0.0
        %2784 = vmatpush1.msra.mxu0 0.0
        %2785 = vmatprep.subr.mxu0 0.0
        %2786 = vmatpush1.msra.mxu0 0.0
        %2787 = vmatprep.subr.mxu0 0.0
        %2788 = vmatpush1.msra.mxu0 0.0
        %2789 = vmatprep.subr.mxu0 0.0
        %2790 = vmatpush1.msra.mxu0 0.0
        %2791 = vmatprep.subr.mxu0 0.0
        %2792 = vmatpush1.msra.mxu0 0.0
        %2793 = vmatprep.subr.mxu0 0.0
        %2794 = vmatpush1.msra.mxu0 %v2776
        %2795 = vmatprep.subr.mxu0 0.0
        %2796 = vmatpush1.msra.mxu0 %v2775
        %2797 = vmatprep.subr.mxu0 0.0
        %2798 = vmatpush1.msra.mxu0 %v2774
        %2799 = vmatprep.subr.mxu0 0.0
        %2800 = vmatpush1.msra.mxu0 %v2773
        %2801 = vmatprep.subr.mxu0 0.0
        %2802 = vmatpush1.msra.mxu0 %v2772
        %2803 = vmatprep.subr.mxu0 0.0
        %2804 = vmatpush1.msra.mxu0 %v2771
        %2805 = vmatprep.subr.mxu0 0.0
        %2806 = vmatpush1.msra.mxu0 %v2770
        %2807 = vmatprep.subr.mxu0 0.0
        %2808 = vmatpush1.msra.mxu0 %v2769
        %2809 = vmatprep.subr.mxu0 0.0
        %2810 = vmatpush1.msra.mxu0 %v2768
        %2811 = vmatprep.subr.mxu0 0.0
        %2812 = vmatpush1.msra.mxu0 %v2767
        %2813 = vmatprep.subr.mxu0 0.0
        %2814 = vmatpush2.msra.mxu0 0.0
        %2815 = vmatprep.subr.mxu0 0.0
        %2816 = vmatpush2.msra.mxu0 0.0
        %2817 = vmatprep.subr.mxu0 0.0
        %2818 = vmatpush2.msra.mxu0 0.0
        %2819 = vmatprep.subr.mxu0 0.0
        %2820 = vmatpush2.msra.mxu0 0.0
        %2821 = vmatprep.subr.mxu0 0.0
        %2822 = vmatpush2.msra.mxu0 0.0
        %2823 = vmatprep.subr.mxu0 0.0
        %2824 = vmatpush2.msra.mxu0 0.0
        %2825 = vmatprep.subr.mxu0 0.0
        %2826 = vmatpush2.msra.mxu0 0.0
        %2827 = vmatprep.subr.mxu0 0.0
        %2828 = vmatpush2.msra.mxu0 0.0
        %2829 = vmatprep.subr.mxu0 0.0
        %2830 = vmatpush2.msra.mxu0 0.0
        %2831 = vmatprep.subr.mxu0 0.0
        %2832 = vmatpush2.msra.mxu0 0.0
        %2833 = vmatprep.subr.mxu0 0.0
        %2834 = vmatpush2.msra.mxu0 0.0
        %2835 = vmatprep.subr.mxu0 0.0
        %2836 = vmatpush2.msra.mxu0 0.0
        %2837 = vmatprep.subr.mxu0 0.0
        %2838 = vmatpush2.msra.mxu0 0.0
        %2839 = vmatprep.subr.mxu0 0.0
        %2840 = vmatpush2.msra.mxu0 0.0
        %2841 = vmatprep.subr.mxu0 0.0
        %2842 = vmatpush2.msra.mxu0 0.0
        %2843 = vmatprep.subr.mxu0 0.0
        %2844 = vmatpush2.msra.mxu0 0.0
        %2845 = vmatprep.mubr.f32.mxu0 0.0
        %2846 = vmatmul.mubr.f32.gmra.mxu0 %v2779
        %v2847 = vpop.f32.mrf.mxu0
        %v2848 = vadd.f32 0.0, %v2847
        %v2849 = vpop.f32.mrf.mxu0
        %2850 = vdwg.mxu0
        %v2851 = vadd.f32 %v2766, %v2848
        %v2852 = vld [vmem:[%s5 + $0x50] sm:$0xff]
        %v2853 = vld [vmem:[%s5 + $0x58] sm:$0xff]
        %v2854 = vld [vmem:[%s5 + $0x60] sm:$0xff]
        %v2855 = vld [vmem:[%s5 + $0x68] sm:$0xff]
        %v2856 = vld [vmem:[%s5 + $0x70] sm:$0xff]
        %v2857 = vld [vmem:[%s5 + $0x78] sm:$0xff]
        %v2858 = vld [vmem:[%s5 + $0x80] sm:$0xff]
        %v2859 = vld [vmem:[%s5 + $0x88] sm:$0xff]
        %v2860 = vld [vmem:[%s5 + $0x90] sm:$0xff]
        %v2861 = vld [vmem:[%s5 + $0x98] sm:$0xff]
        %2862 = vmatprep.subr.mxu0 0.0
        %2863 = vmatpush1.msra.mxu0 0.0
        %2864 = vmatprep.subr.mxu0 0.0
        %2865 = vmatpush1.msra.mxu0 0.0
        %2866 = vmatprep.subr.mxu0 0.0
        %2867 = vmatpush1.msra.mxu0 0.0
        %2868 = vmatprep.subr.mxu0 0.0
        %2869 = vmatpush1.msra.mxu0 0.0
        %2870 = vmatprep.subr.mxu0 0.0
        %2871 = vmatpush1.msra.mxu0 0.0
        %2872 = vmatprep.subr.mxu0 0.0
        %2873 = vmatpush1.msra.mxu0 0.0
        %2874 = vmatprep.subr.mxu0 0.0
        %2875 = vmatpush1.msra.mxu0 %v2861
        %2876 = vmatprep.subr.mxu0 0.0
        %2877 = vmatpush1.msra.mxu0 %v2860
        %2878 = vmatprep.subr.mxu0 0.0
        %2879 = vmatpush1.msra.mxu0 %v2859
        %2880 = vmatprep.subr.mxu0 0.0
        %2881 = vmatpush1.msra.mxu0 %v2858
        %2882 = vmatprep.subr.mxu0 0.0
        %2883 = vmatpush1.msra.mxu0 %v2857
        %2884 = vmatprep.subr.mxu0 0.0
        %2885 = vmatpush1.msra.mxu0 %v2856
        %2886 = vmatprep.subr.mxu0 0.0
        %2887 = vmatpush1.msra.mxu0 %v2855
        %2888 = vmatprep.subr.mxu0 0.0
        %2889 = vmatpush1.msra.mxu0 %v2854
        %2890 = vmatprep.subr.mxu0 0.0
        %2891 = vmatpush1.msra.mxu0 %v2853
        %2892 = vmatprep.subr.mxu0 0.0
        %2893 = vmatpush1.msra.mxu0 %v2852
        %2894 = vmatprep.subr.mxu0 0.0
        %2895 = vmatpush2.msra.mxu0 0.0
        %2896 = vmatprep.subr.mxu0 0.0
        %2897 = vmatpush2.msra.mxu0 0.0
        %2898 = vmatprep.subr.mxu0 0.0
        %2899 = vmatpush2.msra.mxu0 0.0
        %2900 = vmatprep.subr.mxu0 0.0
        %2901 = vmatpush2.msra.mxu0 0.0
        %2902 = vmatprep.subr.mxu0 0.0
        %2903 = vmatpush2.msra.mxu0 0.0
        %2904 = vmatprep.subr.mxu0 0.0
        %2905 = vmatpush2.msra.mxu0 0.0
        %2906 = vmatprep.subr.mxu0 0.0
        %2907 = vmatpush2.msra.mxu0 0.0
        %2908 = vmatprep.subr.mxu0 0.0
        %2909 = vmatpush2.msra.mxu0 0.0
        %2910 = vmatprep.subr.mxu0 0.0
        %2911 = vmatpush2.msra.mxu0 0.0
        %2912 = vmatprep.subr.mxu0 0.0
        %2913 = vmatpush2.msra.mxu0 0.0
        %2914 = vmatprep.subr.mxu0 0.0
        %2915 = vmatpush2.msra.mxu0 0.0
        %2916 = vmatprep.subr.mxu0 0.0
        %2917 = vmatpush2.msra.mxu0 0.0
        %2918 = vmatprep.subr.mxu0 0.0
        %2919 = vmatpush2.msra.mxu0 0.0
        %2920 = vmatprep.subr.mxu0 0.0
        %2921 = vmatpush2.msra.mxu0 0.0
        %2922 = vmatprep.subr.mxu0 0.0
        %2923 = vmatpush2.msra.mxu0 0.0
        %2924 = vmatprep.subr.mxu0 0.0
        %2925 = vmatpush2.msra.mxu0 0.0
        %2926 = vmatprep.mubr.f32.mxu0 0.0
        %2927 = vmatmul.mubr.f32.gmra.mxu0 %v2779
        %v2928 = vpop.f32.mrf.mxu0
        %v2929 = vadd.f32 0.0, %v2928
        %v2930 = vpop.f32.mrf.mxu0
        %2931 = vdwg.mxu0
        %v2934 = vunpack.c.l.s4 1966171168
        %v2935 = vunpack.c.0.s8 %v2934
        %v2936 = vlaneseq
        %v2937 = vshrl.u32 %v2936, 7
        %v2938 = vsub.s32 %v2935, %v2937
        %v2939 = vrot.slane %v2929, %v2938
        %v2940 = vcombine.high %v2939, %v2939
        %v2942 = vunpack.c.l.s4 1966171168
        %v2943 = vunpack.c.0.s8 %v2942
        %v2944 = vlaneseq
        %v2945 = vshrl.u32 %v2944, 7
        %v2946 = vsub.s32 %v2943, %v2945
        %v2947 = vrot.slane %v2940, %v2946
        %v2949 = vadd.f32 %v2851, %v2947
        %v2950 = vld [vmem:[%s5 + $0xa0] sm:$0xff]
        %v2951 = vld [vmem:[%s5 + $0xa8] sm:$0xff]
        %v2952 = vld [vmem:[%s5 + $0xb0] sm:$0xff]
        %v2953 = vld [vmem:[%s5 + $0xb8] sm:$0xff]
        %v2954 = vld [vmem:[%s5 + $0xc0] sm:$0xff]
        %v2955 = vld [vmem:[%s5 + $0xc8] sm:$0xff]
        %v2956 = vld [vmem:[%s5 + $0xd0] sm:$0xff]
        %v2957 = vld [vmem:[%s5 + $0xd8] sm:$0xff]
        %v2958 = vld [vmem:[%s5 + $0xe0] sm:$0xff]
        %v2959 = vld [vmem:[%s5 + $0xe8] sm:$0xff]
        %2960 = vmatprep.subr.mxu0 0.0
        %2961 = vmatpush1.msra.mxu0 0.0
        %2962 = vmatprep.subr.mxu0 0.0
        %2963 = vmatpush1.msra.mxu0 0.0
        %2964 = vmatprep.subr.mxu0 0.0
        %2965 = vmatpush1.msra.mxu0 0.0
        %2966 = vmatprep.subr.mxu0 0.0
        %2967 = vmatpush1.msra.mxu0 0.0
        %2968 = vmatprep.subr.mxu0 0.0
        %2969 = vmatpush1.msra.mxu0 0.0
        %2970 = vmatprep.subr.mxu0 0.0
        %2971 = vmatpush1.msra.mxu0 0.0
        %2972 = vmatprep.subr.mxu0 0.0
        %2973 = vmatpush1.msra.mxu0 %v2959
        %2974 = vmatprep.subr.mxu0 0.0
        %2975 = vmatpush1.msra.mxu0 %v2958
        %2976 = vmatprep.subr.mxu0 0.0
        %2977 = vmatpush1.msra.mxu0 %v2957
        %2978 = vmatprep.subr.mxu0 0.0
        %2979 = vmatpush1.msra.mxu0 %v2956
        %2980 = vmatprep.subr.mxu0 0.0
        %2981 = vmatpush1.msra.mxu0 %v2955
        %2982 = vmatprep.subr.mxu0 0.0
        %2983 = vmatpush1.msra.mxu0 %v2954
        %2984 = vmatprep.subr.mxu0 0.0
        %2985 = vmatpush1.msra.mxu0 %v2953
        %2986 = vmatprep.subr.mxu0 0.0
        %2987 = vmatpush1.msra.mxu0 %v2952
        %2988 = vmatprep.subr.mxu0 0.0
        %2989 = vmatpush1.msra.mxu0 %v2951
        %2990 = vmatprep.subr.mxu0 0.0
        %2991 = vmatpush1.msra.mxu0 %v2950
        %2992 = vmatprep.subr.mxu0 0.0
        %2993 = vmatpush2.msra.mxu0 0.0
        %2994 = vmatprep.subr.mxu0 0.0
        %2995 = vmatpush2.msra.mxu0 0.0
        %2996 = vmatprep.subr.mxu0 0.0
        %2997 = vmatpush2.msra.mxu0 0.0
        %2998 = vmatprep.subr.mxu0 0.0
        %2999 = vmatpush2.msra.mxu0 0.0
        %3000 = vmatprep.subr.mxu0 0.0
        %3001 = vmatpush2.msra.mxu0 0.0
        %3002 = vmatprep.subr.mxu0 0.0
        %3003 = vmatpush2.msra.mxu0 0.0
        %3004 = vmatprep.subr.mxu0 0.0
        %3005 = vmatpush2.msra.mxu0 0.0
        %3006 = vmatprep.subr.mxu0 0.0
        %3007 = vmatpush2.msra.mxu0 0.0
        %3008 = vmatprep.subr.mxu0 0.0
        %3009 = vmatpush2.msra.mxu0 0.0
        %3010 = vmatprep.subr.mxu0 0.0
        %3011 = vmatpush2.msra.mxu0 0.0
        %3012 = vmatprep.subr.mxu0 0.0
        %3013 = vmatpush2.msra.mxu0 0.0
        %3014 = vmatprep.subr.mxu0 0.0
        %3015 = vmatpush2.msra.mxu0 0.0
        %3016 = vmatprep.subr.mxu0 0.0
        %3017 = vmatpush2.msra.mxu0 0.0
        %3018 = vmatprep.subr.mxu0 0.0
        %3019 = vmatpush2.msra.mxu0 0.0
        %3020 = vmatprep.subr.mxu0 0.0
        %3021 = vmatpush2.msra.mxu0 0.0
        %3022 = vmatprep.subr.mxu0 0.0
        %3023 = vmatpush2.msra.mxu0 0.0
        %3024 = vmatprep.mubr.f32.mxu0 0.0
        %3025 = vmatmul.mubr.f32.gmra.mxu0 %v2779
        %v3026 = vpop.f32.mrf.mxu0
        %v3027 = vadd.f32 0.0, %v3026
        %v3028 = vpop.f32.mrf.mxu0
        %3029 = vdwg.mxu0
        %v3032 = vunpack.c.l.s4 1966171168
        %v3033 = vunpack.c.0.s8 %v3032
        %v3034 = vlaneseq
        %v3035 = vshrl.u32 %v3034, 7
        %v3036 = vsub.s32 %v3033, %v3035
        %v3037 = vrot.slane %v3027, %v3036
        %v3039 = vunpack.c.l.s4 1966171168
        %v3040 = vunpack.c.0.s8 %v3039
        %v3041 = vlaneseq
        %v3042 = vshrl.u32 %v3041, 7
        %v3043 = vsub.s32 %v3040, %v3042
        %v3044 = vrot.slane %v3037, %v3043
        %v3045 = vcombine.high %v3044, %v3044
        %v3047 = vadd.f32 %v2949, %v3045
        %v3048 = vld [vmem:[%s5 + $0xf0] sm:$0xff]
        %v3049 = vld [vmem:[%s5 + $0xf8] sm:$0xff]
        %v3050 = vld [vmem:[%s5 + $0x100] sm:$0xff]
        %v3051 = vld [vmem:[%s5 + $0x108] sm:$0xff]
        %v3052 = vld [vmem:[%s5 + $0x110] sm:$0xff]
        %v3053 = vld [vmem:[%s5 + $0x118] sm:$0xff]
        %v3054 = vld [vmem:[%s5 + $0x120] sm:$0xff]
        %v3055 = vld [vmem:[%s5 + $0x128] sm:$0xff]
        %v3056 = vld [vmem:[%s5 + $0x130] sm:$0xff]
        %v3057 = vld [vmem:[%s5 + $0x138] sm:$0xff]
        %3058 = vmatprep.subr.mxu0 0.0
        %3059 = vmatpush1.msra.mxu0 0.0
        %3060 = vmatprep.subr.mxu0 0.0
        %3061 = vmatpush1.msra.mxu0 0.0
        %3062 = vmatprep.subr.mxu0 0.0
        %3063 = vmatpush1.msra.mxu0 0.0
        %3064 = vmatprep.subr.mxu0 0.0
        %3065 = vmatpush1.msra.mxu0 0.0
        %3066 = vmatprep.subr.mxu0 0.0
        %3067 = vmatpush1.msra.mxu0 0.0
        %3068 = vmatprep.subr.mxu0 0.0
        %3069 = vmatpush1.msra.mxu0 0.0
        %3070 = vmatprep.subr.mxu0 0.0
        %3071 = vmatpush1.msra.mxu0 %v3057
        %3072 = vmatprep.subr.mxu0 0.0
        %3073 = vmatpush1.msra.mxu0 %v3056
        %3074 = vmatprep.subr.mxu0 0.0
        %3075 = vmatpush1.msra.mxu0 %v3055
        %3076 = vmatprep.subr.mxu0 0.0
        %3077 = vmatpush1.msra.mxu0 %v3054
        %3078 = vmatprep.subr.mxu0 0.0
        %3079 = vmatpush1.msra.mxu0 %v3053
        %3080 = vmatprep.subr.mxu0 0.0
        %3081 = vmatpush1.msra.mxu0 %v3052
        %3082 = vmatprep.subr.mxu0 0.0
        %3083 = vmatpush1.msra.mxu0 %v3051
        %3084 = vmatprep.subr.mxu0 0.0
        %3085 = vmatpush1.msra.mxu0 %v3050
        %3086 = vmatprep.subr.mxu0 0.0
        %3087 = vmatpush1.msra.mxu0 %v3049
        %3088 = vmatprep.subr.mxu0 0.0
        %3089 = vmatpush1.msra.mxu0 %v3048
        %3090 = vmatprep.subr.mxu0 0.0
        %3091 = vmatpush2.msra.mxu0 0.0
        %3092 = vmatprep.subr.mxu0 0.0
        %3093 = vmatpush2.msra.mxu0 0.0
        %3094 = vmatprep.subr.mxu0 0.0
        %3095 = vmatpush2.msra.mxu0 0.0
        %3096 = vmatprep.subr.mxu0 0.0
        %3097 = vmatpush2.msra.mxu0 0.0
        %3098 = vmatprep.subr.mxu0 0.0
        %3099 = vmatpush2.msra.mxu0 0.0
        %3100 = vmatprep.subr.mxu0 0.0
        %3101 = vmatpush2.msra.mxu0 0.0
        %3102 = vmatprep.subr.mxu0 0.0
        %3103 = vmatpush2.msra.mxu0 0.0
        %3104 = vmatprep.subr.mxu0 0.0
        %3105 = vmatpush2.msra.mxu0 0.0
        %3106 = vmatprep.subr.mxu0 0.0
        %3107 = vmatpush2.msra.mxu0 0.0
        %3108 = vmatprep.subr.mxu0 0.0
        %3109 = vmatpush2.msra.mxu0 0.0
        %3110 = vmatprep.subr.mxu0 0.0
        %3111 = vmatpush2.msra.mxu0 0.0
        %3112 = vmatprep.subr.mxu0 0.0
        %3113 = vmatpush2.msra.mxu0 0.0
        %3114 = vmatprep.subr.mxu0 0.0
        %3115 = vmatpush2.msra.mxu0 0.0
        %3116 = vmatprep.subr.mxu0 0.0
        %3117 = vmatpush2.msra.mxu0 0.0
        %3118 = vmatprep.subr.mxu0 0.0
        %3119 = vmatpush2.msra.mxu0 0.0
        %3120 = vmatprep.subr.mxu0 0.0
        %3121 = vmatpush2.msra.mxu0 0.0
        %3122 = vmatprep.mubr.f32.mxu0 0.0
        %3123 = vmatmul.mubr.f32.gmra.mxu0 %v2779
        %v3124 = vpop.f32.mrf.mxu0
        %v3125 = vadd.f32 0.0, %v3124
        %v3126 = vpop.f32.mrf.mxu0
        %3127 = vdwg.mxu0
        %v3130 = vunpack.c.l.s4 1966171168
        %v3131 = vunpack.c.0.s8 %v3130
        %v3132 = vlaneseq
        %v3133 = vshrl.u32 %v3132, 7
        %v3134 = vsub.s32 %v3131, %v3133
        %v3135 = vrot.slane %v3125, %v3134
        %v3136 = vcombine.high %v3135, %v3135
        %v3138 = vunpack.c.l.s4 1966171168
        %v3139 = vunpack.c.0.s8 %v3138
        %v3140 = vlaneseq
        %v3141 = vshrl.u32 %v3140, 7
        %v3142 = vsub.s32 %v3139, %v3141
        %v3143 = vrot.slane %v3136, %v3142
        %v3144 = vcombine.high %v3143, %v3143
        %v3146 = vadd.f32 %v3047, %v3144
        %3147 = vst [vmem:[%s270] sm:$0x1] %v3146
        %s3148 = sand.u32 %s181, 1
        %s3149 = scalar_lea.sflag [#allocation3], %s3148
        %s3150 = sand.u32 %s181, 1
        %s3151 = scalar_lea.vmem [#allocation2], %s3150
        // Predicated region
        $region49: #{network_mnist_1.1} parent=47 // pred_check
          %p3152 = pneg %p191
        $region50: #{network_mnist_1.1} parent=47 // pred_check_branch
          %3154 = sbr.rel (%p3152) target = $region52
        $region51: #{network_mnist_1.1} parent=47 // pred_region
          %s3156 = ssub.s32 16, 16
          %3157 = vsyncadd %s3149, %s3156
          %s3158 = smul.addr %s21, 16
          %s3159 = scalar_lea.hbm %s7, %s3158
          %s3161 = sshll.u32 %s3151, 4
          %s3162 = int_to_ptr.vmem [resolvable:$true] %s3161
          %3164 = dma.vmem_to_hbm [thread:$0]  %s3162, 16, %s3159, %s3149
        $region52: #{network_mnist_1.1} parent=47 // pred_fallthru
          _
      $region48: #{network_mnist_1.1} parent=5 // pred_fallthru
        _
      %p3165 = scmp.le.s32.totalorder 2, %s16
      // Predicated region
      $region53: #{network_mnist_1.1} parent=5 // pred_check
        %p3166 = pneg %p3165
      $region54: #{network_mnist_1.1} parent=5 // pred_check_branch
        %3168 = sbr.rel (%p3166) target = $region56
      $region55: #{network_mnist_1.1} parent=5 // pred_region
        %s3169 = ssub.s32 %s16, 2
        // Predicated region
        $region57: #{network_mnist_1.1} parent=55 // pred_check
          %p3170 = pneg %p197
        $region58: #{network_mnist_1.1} parent=55 // pred_check_branch
          %3172 = sbr.rel (%p3170) target = $region60
        $region59: #{network_mnist_1.1} parent=55 // pred_region
          %s3173 = sand.u32 %s182, 1
          %s3174 = scalar_lea.sflag [#allocation3], %s3173
          %s3175 = sand.u32 %s182, 1
          %s3176 = scalar_lea.vmem [#allocation2], %s3175
          %3177 = dma.done %s3174, 16
        $region60: #{network_mnist_1.1} parent=55 // pred_fallthru
          _
      $region56: #{network_mnist_1.1} parent=5 // pred_fallthru
        _
    $region6: #{network_mnist_1.1} parent=1 // loop_footer
      %s20 = sadd.s32 1, %s16
    $region7: #{network_mnist_1.1} parent=1 // loop_footer_branch
      %15 = sbr.rel target = $region3
    $region8: #{network_mnist_1.1} parent=1 // loop_exit
      _
    %3178 = vsyncpa [#allocation3], 1
    %s3179 = scalar_lea.sflag [#allocation3], 1
    %3180 = vsyncpa %s3179, 1

</llo_original>
